<compile_context>
chip_gen: v6e
topology: v6e:2x2x1
jax: 0.10.0
libtpu: 0.0.40
codegen_flags: <defaults>
</compile_context>

<pallas_src>
import jax
import jax.numpy as jnp
from jax.experimental import pallas as pl
from jax.experimental.pallas import tpu as pltpu

# ---- model sizes (size_dict['big']) ----
L_IN = 1024   # size[0]
L_H = 512     # size[1]
D_AT = 384    # size[2]
N_CLASSES = 1

NEG_INF = -1e30


def _mil_kernel(h_ref,
                w1_ref, b1_ref, w2_ref, b2_ref,
                wab_ref, bab_ref,
                wc_ref, wcls_m_ref,
                nvalid_ref, scal_ref,
                logits_ref, araw_ref, m_out_ref,
                m_sc, l_sc, acc_sc):
    i = pl.program_id(0)
    tn = araw_ref.shape[-1]

    @pl.when(i == 0)
    def _init():
        m_sc[...] = jnp.full_like(m_sc, NEG_INF)
        l_sc[...] = jnp.zeros_like(l_sc)
        acc_sc[...] = jnp.zeros_like(acc_sc)

    # ---- fc trunk: Linear(1024,512)+ReLU, Linear(512,512)+ReLU (bf16 matmul, f32 acc)
    h = h_ref[...]                                                   # (TN, 1024) bf16
    h1 = jnp.dot(h, w1_ref[...], preferred_element_type=jnp.float32) + b1_ref[...]
    h1 = jnp.maximum(h1, 0.0)                                        # (TN, 512) f32
    h2 = jnp.dot(h1.astype(jnp.bfloat16), w2_ref[...],
                 preferred_element_type=jnp.float32) + b2_ref[...]
    h2 = jnp.maximum(h2, 0.0)                                        # (TN, 512) f32
    h2b = h2.astype(jnp.bfloat16)

    # ---- Attn_Net_Gated(L=512, D=384): single fused (512,768) matmul, lane-aligned split
    ab_pre = jnp.dot(h2b, wab_ref[...],
                     preferred_element_type=jnp.float32) + bab_ref[...]   # (TN, 768) f32
    a = jnp.tanh(ab_pre[:, :D_AT])                                   # (TN, 384)
    b = jax.nn.sigmoid(ab_pre[:, D_AT:])                             # (TN, 384)
    ab = a * b                                                       # (TN, 384)

    # attention_c (Linear(384,1)) computed lane-dense: [1,384] . [TN,384]^T -> [1,TN]
    s_row = jax.lax.dot_general(
        wc_ref[...], ab, (((1,), (1,)), ((), ())),
        preferred_element_type=jnp.float32) + scal_ref[0]            # (1, TN)
    araw_ref[...] = s_row                                            # raw scores (pre-softmax)

    # ---- mask padded instances of the (possibly ragged) last tile
    col = jax.lax.broadcasted_iota(jnp.int32, (1, tn), 1) + i * tn
    valid = col < nvalid_ref[0]
    s_m = jnp.where(valid, s_row, NEG_INF)

    # ---- online softmax + MXU attention pooling
    m_prev = m_sc[...]                                               # (1, 1)
    m_new = jnp.maximum(m_prev, jnp.max(s_m, axis=-1, keepdims=True))
    alpha = jnp.exp(m_prev - m_new)                                  # (1, 1)
    p = jnp.where(valid, jnp.exp(s_m - m_new), 0.0)                  # (1, TN)
    l_sc[...] = alpha * l_sc[...] + jnp.sum(p, axis=-1, keepdims=True)
    acc_sc[...] = alpha * acc_sc[...] + jnp.dot(
        p, h2, preferred_element_type=jnp.float32)                   # (1, 512)
    m_sc[...] = m_new

    # ---- finalize: M = softmax(A) @ h2, classifier on concat([M, sex])
    @pl.when(i == pl.num_programs(0) - 1)
    def _fin():
        M = acc_sc[...] / l_sc[...]                                  # (1, 512)
        m_out_ref[...] = M
        # classifier Linear(513,1): wcls_m dot M + wcls_s*sex + bcls
        logits_ref[...] = (jnp.sum(M * wcls_m_ref[...], axis=-1, keepdims=True)
                           + scal_ref[3] * scal_ref[1] + scal_ref[2])


def init_params(key):
    """Deterministic synthetic parameters (Linear weights stored as [in, out])."""
    ks = jax.random.split(key, 7)
    scale = 0.02
    return {
        "w1": jax.random.normal(ks[0], (L_IN, L_H), jnp.float32) * scale,
        "b1": jnp.zeros((1, L_H), jnp.float32),
        "w2": jax.random.normal(ks[1], (L_H, L_H), jnp.float32) * scale,
        "b2": jnp.zeros((1, L_H), jnp.float32),
        "wa": jax.random.normal(ks[2], (L_H, D_AT), jnp.float32) * scale,
        "ba": jnp.zeros((1, D_AT), jnp.float32),
        "wb": jax.random.normal(ks[3], (L_H, D_AT), jnp.float32) * scale,
        "bb": jnp.zeros((1, D_AT), jnp.float32),
        "wc": jax.random.normal(ks[4], (1, D_AT), jnp.float32) * scale,   # Linear(384,1) weight
        "bc": jnp.zeros((1, 1), jnp.float32),
        # classifier Linear(513,1): M-part [1,512] and sex-part [1,1]
        "wcls_m": jax.random.normal(ks[5], (1, L_H), jnp.float32) * scale,
        "wcls_s": jax.random.normal(ks[6], (1, 1), jnp.float32) * scale,
        "bcls": jnp.zeros((1, 1), jnp.float32),
    }


def mil_attention_fc_concat_forward(h, sex, params, *, tile_n=512):
    """Returns (logits, Y_prob, Y_hat, A_raw, results_dict)."""
    N = h.shape[0]
    if N <= tile_n:
        tn = max(8, ((N + 7) // 8) * 8)          # single tile; sublane-aligned
    else:
        assert tile_n % 128 == 0
        tn = tile_n                              # lane-dense A blocks need %128
    num_tiles = (N + tn - 1) // tn
    n_pad = num_tiles * tn

    # pad bag to a tile multiple; padded rows are masked inside the kernel
    h_p = jnp.pad(h.astype(jnp.float32), ((0, n_pad - N), (0, 0))).astype(jnp.bfloat16)

    # bf16 matmul operands (f32 accumulation inside the kernel)
    w1 = params["w1"].astype(jnp.bfloat16)
    w2 = params["w2"].astype(jnp.bfloat16)
    # fused gated-attention projection: [wa | wb] -> (512, 768), bias -> (1, 768)
    wab = jnp.concatenate([params["wa"], params["wb"]], axis=1).astype(jnp.bfloat16)
    bab = jnp.concatenate([params["ba"], params["bb"]], axis=1).astype(jnp.float32)

    # scalar pack for SMEM: [bc, wcls_s, bcls, sex]
    scal = jnp.stack([params["bc"][0, 0], params["wcls_s"][0, 0],
                      params["bcls"][0, 0], sex[0, 0]]).astype(jnp.float32)
    nvalid = jnp.full((1,), N, jnp.int32)

    const = lambda i: (0, 0)
    resident = lambda shape: pl.BlockSpec(shape, const)     # weights stay in VMEM
    smem = pl.BlockSpec(memory_space=pltpu.MemorySpace.SMEM)

    grid_spec = pltpu.PrefetchScalarGridSpec(
        num_scalar_prefetch=0,
        grid=(num_tiles,),
        in_specs=[
            pl.BlockSpec((tn, L_IN), lambda i: (i, 0)),     # h tile (streamed)
            resident((L_IN, L_H)), resident((1, L_H)),      # w1, b1
            resident((L_H, L_H)), resident((1, L_H)),       # w2, b2
            resident((L_H, 2 * D_AT)), resident((1, 2 * D_AT)),  # wab, bab (fused a|b)
            resident((1, D_AT)),                            # wc
            resident((1, L_H)),                             # wcls_m
            smem,                                           # nvalid (int32[1])
            smem,                                           # scalars (f32[4])
        ],
        out_specs=[
            pl.BlockSpec((1, 1), const),                    # logits
            pl.BlockSpec((1, tn), lambda i: (0, i)),        # A raw, lane-dense [1, N_pad]
            pl.BlockSpec((1, L_H), const),                  # pooled features M
        ],
        scratch_shapes=[
            pltpu.VMEM((1, 1), jnp.float32),                # running max
            pltpu.VMEM((1, 1), jnp.float32),                # running softmax denom
            pltpu.VMEM((1, L_H), jnp.float32),              # running pooled numerator
        ],
    )

    flops = 2 * n_pad * (L_IN * L_H + L_H * L_H + L_H * 2 * D_AT + D_AT + L_H)
    bytes_accessed = (n_pad * L_IN * 2
                      + 2 * (L_IN * L_H + L_H * L_H + L_H * 2 * D_AT)
                      + 4 * (4 * L_H + 3 * D_AT + n_pad + L_H + 16))
    cost = pl.CostEstimate(flops=flops,
                           transcendentals=n_pad * (2 * D_AT + 2),
                           bytes_accessed=bytes_accessed)

    logits, a_row, M = pl.pallas_call(
        _mil_kernel,
        out_shape=(
            jax.ShapeDtypeStruct((1, 1), jnp.float32),
            jax.ShapeDtypeStruct((1, n_pad), jnp.float32),
            jax.ShapeDtypeStruct((1, L_H), jnp.float32),
        ),
        grid_spec=grid_spec,
        compiler_params=pltpu.CompilerParams(
            dimension_semantics=("arbitrary",),   # N carries softmax/pool reduction state
            vmem_limit_bytes=48 * 1024 * 1024,
        ),
        cost_estimate=cost,
    )(h_p, w1, params["b1"], w2, params["b2"],
      wab, bab,
      params["wc"], params["wcls_m"],
      nvalid, scal)

    A_raw = a_row[:, :N]                                    # [1, N] == torch.transpose(A, 1, 0)
    Y_prob = jax.nn.softmax(logits, axis=1)                 # n_classes=1 -> all ones
    Y_hat = jnp.argmax(logits, axis=1, keepdims=True)       # topk(k=1) index
    M_cat = jnp.concatenate([M, jnp.broadcast_to(sex, (M.shape[0], 1))], axis=1)  # [1, 513]
    results_dict = {"features": M_cat}                      # return_features=True, return_topk<=0
    return logits, Y_prob, Y_hat, A_raw, results_dict


def _reference_forward(h, sex, params):
    """Pure-JAX f32 reference mirroring the PyTorch forward."""
    h1 = jnp.maximum(h @ params["w1"] + params["b1"], 0.0)
    h2 = jnp.maximum(h1 @ params["w2"] + params["b2"], 0.0)
    a = jnp.tanh(h2 @ params["wa"] + params["ba"])
    b = jax.nn.sigmoid(h2 @ params["wb"] + params["bb"])
    A = (a * b) @ params["wc"].T + params["bc"]             # [N, 1]
    A_raw = A.T                                             # [1, N]
    Asm = jax.nn.softmax(A_raw, axis=1)
    M = Asm @ h2                                            # [1, 512]
    logits = M @ params["wcls_m"].T + sex @ params["wcls_s"].T + params["bcls"]
    return logits, A_raw, M


if __name__ == "__main__":
    key = jax.random.PRNGKey(0)
    k_param, k_h1, k_h2 = jax.random.split(key, 3)
    params = init_params(k_param)
    sex = jnp.array([[1.0]], jnp.float32)

    # ---- case 1: small bag, single tile
    N1 = 64
    h1 = jax.random.normal(k_h1, (N1, L_IN), jnp.float32)
    logits, Y_prob, Y_hat, A_raw, results = mil_attention_fc_concat_forward(h1, sex, params)
    jax.block_until_ready((logits, Y_prob, Y_hat, A_raw, results["features"]))

    assert logits.shape == (1, 1)
    assert Y_prob.shape == (1, 1)
    assert Y_hat.shape == (1, 1)
    assert A_raw.shape == (1, N1)
    assert results["features"].shape == (1, L_H + 1)

    ref_logits, ref_A, ref_M = _reference_forward(h1, sex, params)
    assert jnp.allclose(A_raw, ref_A, atol=5e-2, rtol=5e-2)
    assert jnp.allclose(results["features"][:, :L_H], ref_M, atol=5e-2, rtol=5e-2)
    assert jnp.allclose(logits, ref_logits, atol=5e-2, rtol=5e-2)

    # ---- case 2: ragged multi-tile path (streams h, masks padded tail rows)
    N2 = 300
    h2 = jax.random.normal(k_h2, (N2, L_IN), jnp.float32)
    logits2, _, _, A_raw2, results2 = mil_attention_fc_concat_forward(
        h2, sex, params, tile_n=128)
    jax.block_until_ready((logits2, A_raw2, results2["features"]))

    ref_logits2, ref_A2, ref_M2 = _reference_forward(h2, sex, params)
    assert A_raw2.shape == (1, N2)
    assert jnp.allclose(A_raw2, ref_A2, atol=5e-2, rtol=5e-2)
    assert jnp.allclose(results2["features"][:, :L_H], ref_M2, atol=5e-2, rtol=5e-2)
    assert jnp.allclose(logits2, ref_logits2, atol=5e-2, rtol=5e-2)

    print("KERNEL_OK")
</pallas_src>

<mosaic_0001>
module attributes {stable_mosaic.version = 11 : i64} {
  func.func @_mil_kernel(%arg0: i32, %arg1: memref<64x1024xbf16, #tpu.memory_space<vmem>>, %arg2: memref<1024x512xbf16, #tpu.memory_space<vmem>>, %arg3: memref<1x512xf32, #tpu.memory_space<vmem>>, %arg4: memref<512x512xbf16, #tpu.memory_space<vmem>>, %arg5: memref<1x512xf32, #tpu.memory_space<vmem>>, %arg6: memref<512x768xbf16, #tpu.memory_space<vmem>>, %arg7: memref<1x768xf32, #tpu.memory_space<vmem>>, %arg8: memref<1x384xf32, #tpu.memory_space<vmem>>, %arg9: memref<1x512xf32, #tpu.memory_space<vmem>>, %arg10: memref<1xi32, #tpu.memory_space<smem>>, %arg11: memref<4xf32, #tpu.memory_space<smem>>, %arg12: memref<1x1xf32, #tpu.memory_space<vmem>>, %arg13: memref<1x64xf32, #tpu.memory_space<vmem>>, %arg14: memref<1x512xf32, #tpu.memory_space<vmem>>, %arg15: memref<1x1xf32, #tpu.memory_space<vmem>>, %arg16: memref<1x1xf32, #tpu.memory_space<vmem>>, %arg17: memref<1x512xf32, #tpu.memory_space<vmem>>) attributes {dimension_semantics = [#tpu.dimension_semantics<arbitrary>], iteration_bounds = array<i64: 1>, scalar_prefetch = 0 : i64, scratch_operands = 3 : i64, tpu.core_type = #tpu.core_type<tc>, window_params = [{transform_indices = @transform_0, window_bounds = array<i64: 64, 1024>}, {pipeline_mode = #tpu.pipeline_mode<synchronous>, transform_indices = @transform_1, window_bounds = array<i64: 1024, 512>}, {pipeline_mode = #tpu.pipeline_mode<synchronous>, transform_indices = @transform_2, window_bounds = array<i64: 1, 512>}, {pipeline_mode = #tpu.pipeline_mode<synchronous>, transform_indices = @transform_3, window_bounds = array<i64: 512, 512>}, {pipeline_mode = #tpu.pipeline_mode<synchronous>, transform_indices = @transform_4, window_bounds = array<i64: 1, 512>}, {pipeline_mode = #tpu.pipeline_mode<synchronous>, transform_indices = @transform_5, window_bounds = array<i64: 512, 768>}, {pipeline_mode = #tpu.pipeline_mode<synchronous>, transform_indices = @transform_6, window_bounds = array<i64: 1, 768>}, {pipeline_mode = #tpu.pipeline_mode<synchronous>, transform_indices = @transform_7, window_bounds = array<i64: 1, 384>}, {pipeline_mode = #tpu.pipeline_mode<synchronous>, transform_indices = @transform_8, window_bounds = array<i64: 1, 512>}, {transform_indices = @transform_9, window_bounds = array<i64: 1>}, {transform_indices = @transform_10, window_bounds = array<i64: 4>}, {pipeline_mode = #tpu.pipeline_mode<synchronous>, transform_indices = @transform_11, window_bounds = array<i64: 1, 1>}, {transform_indices = @transform_12, window_bounds = array<i64: 1, 64>}, {pipeline_mode = #tpu.pipeline_mode<synchronous>, transform_indices = @transform_13, window_bounds = array<i64: 1, 512>}]} {
    %c0_i32 = arith.constant 0 : i32
    %0 = arith.cmpi eq, %arg0, %c0_i32 : i32
    %1 = arith.extui %0 : i1 to i32
    %c0_i32_0 = arith.constant 0 : i32
    %2 = arith.cmpi ne, %1, %c0_i32_0 : i32
    scf.if %2 {
      %cst_45 = arith.constant -1.000000e+30 : f32
      %76 = vector.broadcast %cst_45 : f32 to vector<1x1xf32>
      %c0_46 = arith.constant 0 : index
      %c0_47 = arith.constant 0 : index
      %77 = vector.load %arg15[%c0_46, %c0_47] : memref<1x1xf32, #tpu.memory_space<vmem>>, vector<1x1xf32>
      tpu.vector_store %arg15[%c0_46, %c0_47], %76 {strides = array<i32>} : memref<1x1xf32, #tpu.memory_space<vmem>>, vector<1x1xf32>,
      %cst_48 = arith.constant 0.000000e+00 : f32
      %78 = vector.broadcast %cst_48 : f32 to vector<1x1xf32>
      %c0_49 = arith.constant 0 : index
      %c0_50 = arith.constant 0 : index
      %79 = vector.load %arg16[%c0_49, %c0_50] : memref<1x1xf32, #tpu.memory_space<vmem>>, vector<1x1xf32>
      tpu.vector_store %arg16[%c0_49, %c0_50], %78 {strides = array<i32>} : memref<1x1xf32, #tpu.memory_space<vmem>>, vector<1x1xf32>,
      %cst_51 = arith.constant 0.000000e+00 : f32
      %80 = vector.broadcast %cst_51 : f32 to vector<1x512xf32>
      %c0_52 = arith.constant 0 : index
      %c0_53 = arith.constant 0 : index
      %81 = vector.load %arg17[%c0_52, %c0_53] : memref<1x512xf32, #tpu.memory_space<vmem>>, vector<1x512xf32>
      tpu.vector_store %arg17[%c0_52, %c0_53], %80 {strides = array<i32>} : memref<1x512xf32, #tpu.memory_space<vmem>>, vector<1x512xf32>,
    } else {
    }
    %c0 = arith.constant 0 : index
    %c0_1 = arith.constant 0 : index
    %3 = vector.load %arg1[%c0, %c0_1] : memref<64x1024xbf16, #tpu.memory_space<vmem>>, vector<64x1024xbf16>
    %c0_2 = arith.constant 0 : index
    %c0_3 = arith.constant 0 : index
    %4 = vector.load %arg2[%c0_2, %c0_3] : memref<1024x512xbf16, #tpu.memory_space<vmem>>, vector<1024x512xbf16>
    %cst = arith.constant dense<0.000000e+00> : vector<64x512xf32>
    %5 = tpu.matmul %3, %4, %cst {dimension_numbers = #tpu.dot_dimension_numbers<[1], [0], [0], [1], [0, 0, 1, 1], [], []>} : vector<64x1024xbf16>, vector<1024x512xbf16>, vector<64x512xf32> -> vector<64x512xf32>
    %c0_4 = arith.constant 0 : index
    %c0_5 = arith.constant 0 : index
    %6 = vector.load %arg3[%c0_4, %c0_5] : memref<1x512xf32, #tpu.memory_space<vmem>>, vector<1x512xf32>
    %7 = vector.broadcast %6 : vector<1x512xf32> to vector<64x512xf32>
    %8 = arith.addf %5, %7 : vector<64x512xf32>
    %cst_6 = arith.constant 0.000000e+00 : f32
    %9 = vector.broadcast %cst_6 : f32 to vector<64x512xf32>
    %10 = arith.maximumf %8, %9 : vector<64x512xf32>
    %11 = arith.truncf %10 : vector<64x512xf32> to vector<64x512xbf16>
    %c0_7 = arith.constant 0 : index
    %c0_8 = arith.constant 0 : index
    %12 = vector.load %arg4[%c0_7, %c0_8] : memref<512x512xbf16, #tpu.memory_space<vmem>>, vector<512x512xbf16>
    %cst_9 = arith.constant dense<0.000000e+00> : vector<64x512xf32>
    %13 = tpu.matmul %11, %12, %cst_9 {dimension_numbers = #tpu.dot_dimension_numbers<[1], [0], [0], [1], [0, 0, 1, 1], [], []>} : vector<64x512xbf16>, vector<512x512xbf16>, vector<64x512xf32> -> vector<64x512xf32>
    %c0_10 = arith.constant 0 : index
    %c0_11 = arith.constant 0 : index
    %14 = vector.load %arg5[%c0_10, %c0_11] : memref<1x512xf32, #tpu.memory_space<vmem>>, vector<1x512xf32>
    %15 = vector.broadcast %14 : vector<1x512xf32> to vector<64x512xf32>
    %16 = arith.addf %13, %15 : vector<64x512xf32>
    %cst_12 = arith.constant 0.000000e+00 : f32
    %17 = vector.broadcast %cst_12 : f32 to vector<64x512xf32>
    %18 = arith.maximumf %16, %17 : vector<64x512xf32>
    %19 = arith.truncf %18 : vector<64x512xf32> to vector<64x512xbf16>
    %c0_13 = arith.constant 0 : index
    %c0_14 = arith.constant 0 : index
    %20 = vector.load %arg6[%c0_13, %c0_14] : memref<512x768xbf16, #tpu.memory_space<vmem>>, vector<512x768xbf16>
    %cst_15 = arith.constant dense<0.000000e+00> : vector<64x768xf32>
    %21 = tpu.matmul %19, %20, %cst_15 {dimension_numbers = #tpu.dot_dimension_numbers<[1], [0], [0], [1], [0, 0, 1, 1], [], []>} : vector<64x512xbf16>, vector<512x768xbf16>, vector<64x768xf32> -> vector<64x768xf32>
    %c0_16 = arith.constant 0 : index
    %c0_17 = arith.constant 0 : index
    %22 = vector.load %arg7[%c0_16, %c0_17] : memref<1x768xf32, #tpu.memory_space<vmem>>, vector<1x768xf32>
    %23 = vector.broadcast %22 : vector<1x768xf32> to vector<64x768xf32>
    %24 = arith.addf %21, %23 : vector<64x768xf32>
    %25 = vector.extract_strided_slice %24 {offsets = [0, 0], sizes = [64, 384], strides = [1, 1]} : vector<64x768xf32> to vector<64x384xf32>
    %26 = math.tanh %25 : vector<64x384xf32>
    %27 = vector.extract_strided_slice %24 {offsets = [0, 384], sizes = [64, 384], strides = [1, 1]} : vector<64x768xf32> to vector<64x384xf32>
    %28 = arith.negf %27 : vector<64x384xf32>
    %29 = math.exp %28 : vector<64x384xf32>
    %cst_18 = arith.constant 1.000000e+00 : f32
    %30 = vector.broadcast %cst_18 : f32 to vector<64x384xf32>
    %31 = arith.addf %30, %29 : vector<64x384xf32>
    %32 = arith.divf %30, %31 : vector<64x384xf32>
    %33 = arith.mulf %26, %32 : vector<64x384xf32>
    %c0_19 = arith.constant 0 : index
    %c0_20 = arith.constant 0 : index
    %34 = vector.load %arg8[%c0_19, %c0_20] : memref<1x384xf32, #tpu.memory_space<vmem>>, vector<1x384xf32>
    %cst_21 = arith.constant dense<0.000000e+00> : vector<1x64xf32>
    %35 = tpu.matmul %34, %33, %cst_21 {dimension_numbers = #tpu.dot_dimension_numbers<[1], [1], [0], [0], [0, 0, 1, 0], [], []>} : vector<1x384xf32>, vector<64x384xf32>, vector<1x64xf32> -> vector<1x64xf32>
    %c0_22 = arith.constant 0 : index
    %36 = memref.load %arg11[%c0_22] : memref<4xf32, #tpu.memory_space<smem>>
    %37 = vector.broadcast %36 : f32 to vector<1x64xf32>
    %38 = arith.addf %35, %37 : vector<1x64xf32>
    %c0_23 = arith.constant 0 : index
    %c0_24 = arith.constant 0 : index
    %39 = vector.load %arg13[%c0_23, %c0_24] : memref<1x64xf32, #tpu.memory_space<vmem>>, vector<1x64xf32>
    tpu.vector_store %arg13[%c0_23, %c0_24], %38 {strides = array<i32>} : memref<1x64xf32, #tpu.memory_space<vmem>>, vector<1x64xf32>,
    %40 = tpu.iota {dimensions = array<i32: 1>} : vector<1x64xi32>
    %c64_i32 = arith.constant 64 : i32
    %41 = arith.muli %arg0, %c64_i32 : i32
    %42 = vector.broadcast %41 : i32 to vector<1x64xi32>
    %43 = arith.addi %40, %42 : vector<1x64xi32>
    %c0_25 = arith.constant 0 : index
    %44 = memref.load %arg10[%c0_25] : memref<1xi32, #tpu.memory_space<smem>>
    %45 = vector.broadcast %44 : i32 to vector<1x64xi32>
    %46 = arith.cmpi slt, %43, %45 : vector<1x64xi32>
    %cst_26 = arith.constant -1.000000e+30 : f32
    %47 = vector.broadcast %cst_26 : f32 to vector<1x64xf32>
    %48 = arith.select %46, %38, %47 : vector<1x64xi1>, vector<1x64xf32>
    %c0_27 = arith.constant 0 : index
    %c0_28 = arith.constant 0 : index
    %49 = vector.load %arg15[%c0_27, %c0_28] : memref<1x1xf32, #tpu.memory_space<vmem>>, vector<1x1xf32>
    %cst_29 = arith.constant dense<0xFF800000> : vector<1xf32>
    %50 = vector.multi_reduction <maximumf>, %48, %cst_29 [1] : vector<1x64xf32> to vector<1xf32>
    %51 = vector.shape_cast %50 : vector<1xf32> to vector<1x1xf32>
    %52 = arith.maximumf %49, %51 : vector<1x1xf32>
    %53 = arith.subf %49, %52 : vector<1x1xf32>
    %54 = math.exp %53 : vector<1x1xf32>
    %55 = vector.broadcast %52 : vector<1x1xf32> to vector<1x64xf32>
    %56 = arith.subf %48, %55 : vector<1x64xf32>
    %57 = math.exp %56 : vector<1x64xf32>
    %cst_30 = arith.constant 0.000000e+00 : f32
    %58 = vector.broadcast %cst_30 : f32 to vector<1x64xf32>
    %59 = arith.select %46, %57, %58 : vector<1x64xi1>, vector<1x64xf32>
    %c0_31 = arith.constant 0 : index
    %c0_32 = arith.constant 0 : index
    %60 = vector.load %arg16[%c0_31, %c0_32] : memref<1x1xf32, #tpu.memory_space<vmem>>, vector<1x1xf32>
    %61 = arith.mulf %54, %60 : vector<1x1xf32>
    %cst_33 = arith.constant dense<0.000000e+00> : vector<1xf32>
    %62 = vector.multi_reduction <add>, %59, %cst_33 [1] : vector<1x64xf32> to vector<1xf32>
    %63 = vector.shape_cast %62 : vector<1xf32> to vector<1x1xf32>
    %64 = arith.addf %61, %63 : vector<1x1xf32>
    %c0_34 = arith.constant 0 : index
    %c0_35 = arith.constant 0 : index
    %65 = vector.load %arg16[%c0_34, %c0_35] : memref<1x1xf32, #tpu.memory_space<vmem>>, vector<1x1xf32>
    tpu.vector_store %arg16[%c0_34, %c0_35], %64 {strides = array<i32>} : memref<1x1xf32, #tpu.memory_space<vmem>>, vector<1x1xf32>,
    %c0_36 = arith.constant 0 : index
    %c0_37 = arith.constant 0 : index
    %66 = vector.load %arg17[%c0_36, %c0_37] : memref<1x512xf32, #tpu.memory_space<vmem>>, vector<1x512xf32>
    %67 = vector.broadcast %54 : vector<1x1xf32> to vector<1x512xf32>
    %68 = arith.mulf %67, %66 : vector<1x512xf32>
    %cst_38 = arith.constant dense<0.000000e+00> : vector<1x512xf32>
    %69 = tpu.matmul %59, %18, %cst_38 {dimension_numbers = #tpu.dot_dimension_numbers<[1], [0], [0], [1], [0, 0, 1, 1], [], []>} : vector<1x64xf32>, vector<64x512xf32>, vector<1x512xf32> -> vector<1x512xf32>
    %70 = arith.addf %68, %69 : vector<1x512xf32>
    %c0_39 = arith.constant 0 : index
    %c0_40 = arith.constant 0 : index
    %71 = vector.load %arg17[%c0_39, %c0_40] : memref<1x512xf32, #tpu.memory_space<vmem>>, vector<1x512xf32>
    tpu.vector_store %arg17[%c0_39, %c0_40], %70 {strides = array<i32>} : memref<1x512xf32, #tpu.memory_space<vmem>>, vector<1x512xf32>,
    %c0_41 = arith.constant 0 : index
    %c0_42 = arith.constant 0 : index
    %72 = vector.load %arg15[%c0_41, %c0_42] : memref<1x1xf32, #tpu.memory_space<vmem>>, vector<1x1xf32>
    tpu.vector_store %arg15[%c0_41, %c0_42], %52 {strides = array<i32>} : memref<1x1xf32, #tpu.memory_space<vmem>>, vector<1x1xf32>,
    %c0_i32_43 = arith.constant 0 : i32
    %73 = arith.cmpi eq, %arg0, %c0_i32_43 : i32
    %74 = arith.extui %73 : i1 to i32
    %c0_i32_44 = arith.constant 0 : i32
    %75 = arith.cmpi ne, %74, %c0_i32_44 : i32
    scf.if %75 {
      %c0_45 = arith.constant 0 : index
      %c0_46 = arith.constant 0 : index
      %76 = vector.load %arg17[%c0_45, %c0_46] : memref<1x512xf32, #tpu.memory_space<vmem>>, vector<1x512xf32>
      %c0_47 = arith.constant 0 : index
      %c0_48 = arith.constant 0 : index
      %77 = vector.load %arg16[%c0_47, %c0_48] : memref<1x1xf32, #tpu.memory_space<vmem>>, vector<1x1xf32>
      %78 = vector.broadcast %77 : vector<1x1xf32> to vector<1x512xf32>
      %79 = arith.divf %76, %78 : vector<1x512xf32>
      %c0_49 = arith.constant 0 : index
      %c0_50 = arith.constant 0 : index
      %80 = vector.load %arg14[%c0_49, %c0_50] : memref<1x512xf32, #tpu.memory_space<vmem>>, vector<1x512xf32>
      tpu.vector_store %arg14[%c0_49, %c0_50], %79 {strides = array<i32>} : memref<1x512xf32, #tpu.memory_space<vmem>>, vector<1x512xf32>,
      %c0_51 = arith.constant 0 : index
      %c0_52 = arith.constant 0 : index
      %81 = vector.load %arg9[%c0_51, %c0_52] : memref<1x512xf32, #tpu.memory_space<vmem>>, vector<1x512xf32>
      %82 = arith.mulf %79, %81 : vector<1x512xf32>
      %cst_53 = arith.constant dense<0.000000e+00> : vector<1xf32>
      %83 = vector.multi_reduction <add>, %82, %cst_53 [1] : vector<1x512xf32> to vector<1xf32>
      %84 = vector.shape_cast %83 : vector<1xf32> to vector<1x1xf32>
      %c3 = arith.constant 3 : index
      %85 = memref.load %arg11[%c3] : memref<4xf32, #tpu.memory_space<smem>>
      %c1 = arith.constant 1 : index
      %86 = memref.load %arg11[%c1] : memref<4xf32, #tpu.memory_space<smem>>
      %87 = arith.mulf %85, %86 : f32
      %88 = vector.broadcast %87 : f32 to vector<1x1xf32>
      %89 = arith.addf %84, %88 : vector<1x1xf32>
      %c2 = arith.constant 2 : index
      %90 = memref.load %arg11[%c2] : memref<4xf32, #tpu.memory_space<smem>>
      %91 = vector.broadcast %90 : f32 to vector<1x1xf32>
      %92 = arith.addf %89, %91 : vector<1x1xf32>
      %c0_54 = arith.constant 0 : index
      %c0_55 = arith.constant 0 : index
      %93 = vector.load %arg12[%c0_54, %c0_55] : memref<1x1xf32, #tpu.memory_space<vmem>>, vector<1x1xf32>
      tpu.vector_store %arg12[%c0_54, %c0_55], %92 {strides = array<i32>} : memref<1x1xf32, #tpu.memory_space<vmem>>, vector<1x1xf32>,
    } else {
    }
    return
  }
  func.func @transform_0(%arg0: i32) -> (i32, i32) {
    %c0_i32 = arith.constant 0 : i32
    %c0_i32_0 = arith.constant 0 : i32
    return %arg0, %c0_i32 : i32, i32
  }
  func.func @transform_1(%arg0: i32) -> (i32, i32) {
    %c0_i32 = arith.constant 0 : i32
    %c0_i32_0 = arith.constant 0 : i32
    %c0_i32_1 = arith.constant 0 : i32
    return %c0_i32, %c0_i32_0 : i32, i32
  }
  func.func @transform_2(%arg0: i32) -> (i32, i32) {
    %c0_i32 = arith.constant 0 : i32
    %c0_i32_0 = arith.constant 0 : i32
    %c0_i32_1 = arith.constant 0 : i32
    return %c0_i32, %c0_i32_0 : i32, i32
  }
  func.func @transform_3(%arg0: i32) -> (i32, i32) {
    %c0_i32 = arith.constant 0 : i32
    %c0_i32_0 = arith.constant 0 : i32
    %c0_i32_1 = arith.constant 0 : i32
    return %c0_i32, %c0_i32_0 : i32, i32
  }
  func.func @transform_4(%arg0: i32) -> (i32, i32) {
    %c0_i32 = arith.constant 0 : i32
    %c0_i32_0 = arith.constant 0 : i32
    %c0_i32_1 = arith.constant 0 : i32
    return %c0_i32, %c0_i32_0 : i32, i32
  }
  func.func @transform_5(%arg0: i32) -> (i32, i32) {
    %c0_i32 = arith.constant 0 : i32
    %c0_i32_0 = arith.constant 0 : i32
    %c0_i32_1 = arith.constant 0 : i32
    return %c0_i32, %c0_i32_0 : i32, i32
  }
  func.func @transform_6(%arg0: i32) -> (i32, i32) {
    %c0_i32 = arith.constant 0 : i32
    %c0_i32_0 = arith.constant 0 : i32
    %c0_i32_1 = arith.constant 0 : i32
    return %c0_i32, %c0_i32_0 : i32, i32
  }
  func.func @transform_7(%arg0: i32) -> (i32, i32) {
    %c0_i32 = arith.constant 0 : i32
    %c0_i32_0 = arith.constant 0 : i32
    %c0_i32_1 = arith.constant 0 : i32
    return %c0_i32, %c0_i32_0 : i32, i32
  }
  func.func @transform_8(%arg0: i32) -> (i32, i32) {
    %c0_i32 = arith.constant 0 : i32
    %c0_i32_0 = arith.constant 0 : i32
    %c0_i32_1 = arith.constant 0 : i32
    return %c0_i32, %c0_i32_0 : i32, i32
  }
  func.func @transform_9(%arg0: i32) -> i32 {
    %c0_i32 = arith.constant 0 : i32
    %c0_i32_0 = arith.constant 0 : i32
    return %c0_i32 : i32
  }
  func.func @transform_10(%arg0: i32) -> i32 {
    %c0_i32 = arith.constant 0 : i32
    %c0_i32_0 = arith.constant 0 : i32
    return %c0_i32 : i32
  }
  func.func @transform_11(%arg0: i32) -> (i32, i32) {
    %c0_i32 = arith.constant 0 : i32
    %c0_i32_0 = arith.constant 0 : i32
    %c0_i32_1 = arith.constant 0 : i32
    return %c0_i32, %c0_i32_0 : i32, i32
  }
  func.func @transform_12(%arg0: i32) -> (i32, i32) {
    %c0_i32 = arith.constant 0 : i32
    %c0_i32_0 = arith.constant 0 : i32
    return %c0_i32, %arg0 : i32, i32
  }
  func.func @transform_13(%arg0: i32) -> (i32, i32) {
    %c0_i32 = arith.constant 0 : i32
    %c0_i32_0 = arith.constant 0 : i32
    %c0_i32_1 = arith.constant 0 : i32
    return %c0_i32, %c0_i32_0 : i32, i32
  }
}

</mosaic_0001>

<llo_original>
// kernel: tpu_custom_call.1
$region0: #{tpu_custom_call.1}
  #allocation0 [shape = 'u32[]', space=smem, size = 0x4, offset = 0x4, fixed_abs, tag = 'smem constant byte address 0x4 - core index']
  #allocation1 [shape = 'u32[144,128]{1,0:T(1,128)}', space=vmem, size = 0x12000, scoped, tag = 'internal scratch']
  #allocation2 [shape = 'f32[1,1]{1,0:T(1,128)}', space=vmem, size = 0x200, scoped, tag = 'scratch operand']
  #allocation3 [shape = 'f32[1,1]{1,0:T(1,128)}', space=vmem, size = 0x200, scoped, tag = 'scratch operand']
  #allocation4 [shape = 'f32[1,512]{1,0:T(1,128)}', space=vmem, size = 0x800, scoped, tag = 'scratch operand']
  #allocation5 [shape = 's32[1]{0:T(128)S(6)}', space=smem, size = 0x200, scoped, tag = 'scoped memory for tpu_custom_call.1']
  %s0 = inlined_call_operand.hbm [shape: bf16[64,1024], index: 0, kind: input, shape index: {}]
  %s1 = inlined_call_operand.hbm [shape: bf16[1024,512], index: 1, kind: input, shape index: {}]
  %s2 = inlined_call_operand.vmem [shape: f32[1,512], index: 2, kind: input, shape index: {}]
  %s3 = inlined_call_operand.hbm [shape: bf16[512,512], index: 3, kind: input, shape index: {}]
  %s4 = inlined_call_operand.hbm [shape: f32[1,512], index: 4, kind: input, shape index: {}]
  %s5 = inlined_call_operand.hbm [shape: bf16[512,768], index: 5, kind: input, shape index: {}]
  %s6 = inlined_call_operand.vmem [shape: f32[1,768], index: 6, kind: input, shape index: {}]
  %s7 = inlined_call_operand.hbm [shape: f32[1,384], index: 7, kind: input, shape index: {}]
  %s8 = inlined_call_operand.vmem [shape: f32[1,512], index: 8, kind: input, shape index: {}]
  %s9 = inlined_call_operand.<no memory space> [shape: s32[1], index: 9, kind: input, shape index: {}]
  %s10 = inlined_call_operand.vmem [shape: f32[4], index: 10, kind: input, shape index: {}]
  %s11 = inlined_call_operand.hbm [shape: f32[1,1], index: 11, kind: output, shape index: {0}]
  %s12 = inlined_call_operand.hbm [shape: f32[1,64], index: 12, kind: output, shape index: {1}]
  %s13 = inlined_call_operand.hbm [shape: f32[1,512], index: 13, kind: output, shape index: {2}]
  %14 = xla_tuple %s11, %s12, %s13
  %s15 = sld [smem:[#allocation0]]
  $region106: #{tpu_custom_call.1} parent=0
    _
  %s17 = ssub.s32 1, %s15
  %s18 = scalar_select 0, %s17, %s15
  %19 = sst [smem:[#allocation5]] %s9
  $region1: #{tpu_custom_call.1} parent=0
    #allocation6 [shape = 'u8[131072]{0}', space=vmem, size = 0x20000, scoped, tag = 'input window, operand 0, single buffered']
    #allocation7 [shape = 's32[1]{0}', space=sflag, size = 0x4, scoped, tag = 'scoped memory for tpu_custom_call.1']
    #allocation8 [shape = 's32[1]{0}', space=sflag, size = 0x4, scoped, tag = 'scoped memory for tpu_custom_call.1']
    #allocation9 [shape = 's32[1]{0}', space=sflag, size = 0x4, scoped, tag = 'scoped memory for tpu_custom_call.1']
    #allocation10 [shape = 'u8[1048576]{0}', space=vmem, size = 0x100000, scoped, tag = 'input window, operand 1, single buffered']
    #allocation11 [shape = 's32[1]{0}', space=sflag, size = 0x4, scoped, tag = 'scoped memory for tpu_custom_call.1']
    #allocation12 [shape = 'u8[524288]{0}', space=vmem, size = 0x80000, scoped, tag = 'input window, operand 3, single buffered']
    #allocation13 [shape = 'u8[2048]{0}', space=vmem, size = 0x800, scoped, tag = 'input window, operand 4, single buffered']
    #allocation14 [shape = 's32[1]{0}', space=sflag, size = 0x4, scoped, tag = 'scoped memory for tpu_custom_call.1']
    #allocation15 [shape = 'u8[786432]{0}', space=vmem, size = 0xc0000, scoped, tag = 'input window, operand 5, single buffered']
    #allocation16 [shape = 'u8[1536]{0}', space=vmem, size = 0x800, scoped, tag = 'input window, operand 7, single buffered']
    #allocation17 [shape = 's32[1]{0}', space=sflag, size = 0x4, scoped, tag = 'scoped memory for tpu_custom_call.1']
    #allocation18 [shape = 'u8[512]{0}', space=smem, size = 0x200, scoped, tag = 'input window, operand 10, single buffered']
    #allocation19 [shape = 'u8[512]{0}', space=vmem, size = 0x400, scoped, tag = 'output window, operand 0, single buffered']
    #allocation20 [shape = 'u8[512]{0}', space=vmem, size = 0x400, scoped, tag = 'output window, operand 1, single buffered']
    #allocation21 [shape = 's32[1]{0}', space=sflag, size = 0x4, scoped, tag = 'scoped memory for tpu_custom_call.1']
    #allocation22 [shape = 'u8[2048]{0}', space=vmem, size = 0x800, scoped, tag = 'output window, operand 2, single buffered']
    %20 = vsyncpa [#allocation7], 0
    %21 = vsyncpa [#allocation11], 0
    %22 = vsyncpa [#allocation14], 0
    %23 = vsyncpa [#allocation17], 0
    %24 = vsyncpa [#allocation9], 0
    %25 = vsyncpa [#allocation8], 0
    %26 = vsyncpa [#allocation21], 0
    // Predicated region
    $region2: #{tpu_custom_call.1} parent=1 // pred_check
      _
    $region3: #{tpu_custom_call.1} parent=1 // pred_check_branch
      %28 = sbr.rel (0) target = $region5
    $region4: #{tpu_custom_call.1} parent=1 // pred_region
      %s30 = ssub.s32 4096, 4096
      %31 = vsyncadd [#allocation7], %s30
      %s32 = sshll.u32 [#allocation6], 4
      %s33 = int_to_ptr.vmem [resolvable:$true] %s32
      %38 = dma.hbm_to_vmem [thread:$0]  %s0, 4096, %s33, [#allocation7], 512, 512, 32
    $region5: #{tpu_custom_call.1} parent=1 // pred_fallthru
      _
    // Predicated region
    $region6: #{tpu_custom_call.1} parent=1 // pred_check
      _
    $region7: #{tpu_custom_call.1} parent=1 // pred_check_branch
      %40 = sbr.rel (0) target = $region9
    $region8: #{tpu_custom_call.1} parent=1 // pred_region
      %s42 = ssub.s32 32768, 32768
      %43 = vsyncadd [#allocation11], %s42
      %s44 = sshll.u32 [#allocation10], 4
      %s45 = int_to_ptr.vmem [resolvable:$true] %s44
      %50 = dma.hbm_to_vmem [thread:$0]  %s1, 32768, %s45, [#allocation11], 256, 256, 16
    $region9: #{tpu_custom_call.1} parent=1 // pred_fallthru
      _
    // Predicated region
    $region10: #{tpu_custom_call.1} parent=1 // pred_check
      _
    $region11: #{tpu_custom_call.1} parent=1 // pred_check_branch
      %52 = sbr.rel (0) target = $region13
    $region12: #{tpu_custom_call.1} parent=1 // pred_region
      _
    $region13: #{tpu_custom_call.1} parent=1 // pred_fallthru
      _
    // Predicated region
    $region14: #{tpu_custom_call.1} parent=1 // pred_check
      _
    $region15: #{tpu_custom_call.1} parent=1 // pred_check_branch
      %54 = sbr.rel (0) target = $region17
    $region16: #{tpu_custom_call.1} parent=1 // pred_region
      %s56 = ssub.s32 16384, 16384
      %57 = vsyncadd [#allocation11], %s56
      %s58 = sshll.u32 [#allocation12], 4
      %s59 = int_to_ptr.vmem [resolvable:$true] %s58
      %64 = dma.hbm_to_vmem [thread:$0]  %s3, 16384, %s59, [#allocation11], 256, 256, 16
    $region17: #{tpu_custom_call.1} parent=1 // pred_fallthru
      _
    // Predicated region
    $region18: #{tpu_custom_call.1} parent=1 // pred_check
      _
    $region19: #{tpu_custom_call.1} parent=1 // pred_check_branch
      %66 = sbr.rel (0) target = $region21
    $region20: #{tpu_custom_call.1} parent=1 // pred_region
      %s68 = ssub.s32 64, 64
      %69 = vsyncadd [#allocation14], %s68
      %s71 = sshll.u32 [#allocation13], 4
      %s72 = int_to_ptr.vmem [resolvable:$true] %s71
      %74 = dma.hbm_to_vmem [thread:$0]  %s4, 64, %s72, [#allocation14]
    $region21: #{tpu_custom_call.1} parent=1 // pred_fallthru
      _
    // Predicated region
    $region22: #{tpu_custom_call.1} parent=1 // pred_check
      _
    $region23: #{tpu_custom_call.1} parent=1 // pred_check_branch
      %76 = sbr.rel (0) target = $region25
    $region24: #{tpu_custom_call.1} parent=1 // pred_region
      %s78 = ssub.s32 24576, 24576
      %79 = vsyncadd [#allocation14], %s78
      %s80 = sshll.u32 [#allocation15], 4
      %s81 = int_to_ptr.vmem [resolvable:$true] %s80
      %86 = dma.hbm_to_vmem [thread:$0]  %s5, 24576, %s81, [#allocation14], 384, 384, 24
    $region25: #{tpu_custom_call.1} parent=1 // pred_fallthru
      _
    // Predicated region
    $region26: #{tpu_custom_call.1} parent=1 // pred_check
      _
    $region27: #{tpu_custom_call.1} parent=1 // pred_check_branch
      %88 = sbr.rel (0) target = $region29
    $region28: #{tpu_custom_call.1} parent=1 // pred_region
      _
    $region29: #{tpu_custom_call.1} parent=1 // pred_fallthru
      _
    // Predicated region
    $region30: #{tpu_custom_call.1} parent=1 // pred_check
      _
    $region31: #{tpu_custom_call.1} parent=1 // pred_check_branch
      %90 = sbr.rel (0) target = $region33
    $region32: #{tpu_custom_call.1} parent=1 // pred_region
      %s92 = ssub.s32 48, 48
      %93 = vsyncadd [#allocation17], %s92
      %s95 = sshll.u32 [#allocation16], 4
      %s96 = int_to_ptr.vmem [resolvable:$true] %s95
      %98 = dma.hbm_to_vmem [thread:$0]  %s7, 48, %s96, [#allocation17]
    $region33: #{tpu_custom_call.1} parent=1 // pred_fallthru
      _
    // Predicated region
    $region34: #{tpu_custom_call.1} parent=1 // pred_check
      _
    $region35: #{tpu_custom_call.1} parent=1 // pred_check_branch
      %100 = sbr.rel (0) target = $region37
    $region36: #{tpu_custom_call.1} parent=1 // pred_region
      _
    $region37: #{tpu_custom_call.1} parent=1 // pred_fallthru
      _
    // Predicated region
    $region38: #{tpu_custom_call.1} parent=1 // pred_check
      _
    $region39: #{tpu_custom_call.1} parent=1 // pred_check_branch
      %102 = sbr.rel (0) target = $region41
    $region40: #{tpu_custom_call.1} parent=1 // pred_region
      _
    $region41: #{tpu_custom_call.1} parent=1 // pred_fallthru
      _
    // Predicated region
    $region42: #{tpu_custom_call.1} parent=1 // pred_check
      _
    $region43: #{tpu_custom_call.1} parent=1 // pred_check_branch
      %104 = sbr.rel (0) target = $region45
    $region44: #{tpu_custom_call.1} parent=1 // pred_region
      %s106 = ssub.s32 16, 16
      %107 = vsyncadd [#allocation9], %s106
      %s109 = sshll.u32 %s10, 4
      %s110 = int_to_ptr.vmem [resolvable:$true] %s109
      %112 = dma.vmem_to_smem %s110, 16, [#allocation18], [#allocation9]
    $region45: #{tpu_custom_call.1} parent=1 // pred_fallthru
      _
    // Predicated region
    $region46: #{tpu_custom_call.1} parent=1 // pred_check
      _
    $region47: #{tpu_custom_call.1} parent=1 // pred_check_branch
      %114 = sbr.rel (0) target = $region49
    $region48: #{tpu_custom_call.1} parent=1 // pred_region
      %115 = dma.done [#allocation7], 4096
    $region49: #{tpu_custom_call.1} parent=1 // pred_fallthru
      _
    // Predicated region
    $region50: #{tpu_custom_call.1} parent=1 // pred_check
      _
    $region51: #{tpu_custom_call.1} parent=1 // pred_check_branch
      %117 = sbr.rel (0) target = $region53
    $region52: #{tpu_custom_call.1} parent=1 // pred_region
      %118 = dma.done [#allocation11], 32768
    $region53: #{tpu_custom_call.1} parent=1 // pred_fallthru
      _
    // Predicated region
    $region54: #{tpu_custom_call.1} parent=1 // pred_check
      _
    $region55: #{tpu_custom_call.1} parent=1 // pred_check_branch
      %120 = sbr.rel (0) target = $region57
    $region56: #{tpu_custom_call.1} parent=1 // pred_region
      %121 = dma.done [#allocation11], 16384
    $region57: #{tpu_custom_call.1} parent=1 // pred_fallthru
      _
    // Predicated region
    $region58: #{tpu_custom_call.1} parent=1 // pred_check
      _
    $region59: #{tpu_custom_call.1} parent=1 // pred_check_branch
      %123 = sbr.rel (0) target = $region61
    $region60: #{tpu_custom_call.1} parent=1 // pred_region
      %124 = dma.done [#allocation14], 64
    $region61: #{tpu_custom_call.1} parent=1 // pred_fallthru
      _
    // Predicated region
    $region62: #{tpu_custom_call.1} parent=1 // pred_check
      _
    $region63: #{tpu_custom_call.1} parent=1 // pred_check_branch
      %126 = sbr.rel (0) target = $region65
    $region64: #{tpu_custom_call.1} parent=1 // pred_region
      %127 = dma.done [#allocation14], 24576
    $region65: #{tpu_custom_call.1} parent=1 // pred_fallthru
      _
    // Predicated region
    $region66: #{tpu_custom_call.1} parent=1 // pred_check
      _
    $region67: #{tpu_custom_call.1} parent=1 // pred_check_branch
      %129 = sbr.rel (0) target = $region69
    $region68: #{tpu_custom_call.1} parent=1 // pred_region
      %130 = dma.done [#allocation17], 48
    $region69: #{tpu_custom_call.1} parent=1 // pred_fallthru
      _
    // Predicated region
    $region70: #{tpu_custom_call.1} parent=1 // pred_check
      _
    $region71: #{tpu_custom_call.1} parent=1 // pred_check_branch
      %132 = sbr.rel (0) target = $region73
    $region72: #{tpu_custom_call.1} parent=1 // pred_region
      %133 = dma.done [#allocation9], 16
    $region73: #{tpu_custom_call.1} parent=1 // pred_fallthru
      _
    %134 = sfence
    %p135 = scmp.eq.s32.totalorder 0, 0
    // Predicated region
    $region74: #{tpu_custom_call.1} parent=1 // pred_check
      %p136 = pneg %p135
    $region75: #{tpu_custom_call.1} parent=1 // pred_check_branch
      %138 = sbr.rel (%p136) target = $region77
    $region76: #{tpu_custom_call.1} parent=1 // pred_region
      %vm139 = vcmask 0
      %140 = vst.msk [vmem:[#allocation2] sm:$0x1] %vm139, -1e+30
      %141 = vst.msk [vmem:[#allocation3] sm:$0x1] %vm139, 0.0
      %v142 = vlaneseq
      %vm143 = vcmp.ge.s32.totalorder %v142, 0
      %vm144 = vcmp.lt.s32.totalorder %v142, 512
      %vm145 = vmand %vm143, %vm144
      %146 = vst.msk [vmem:[#allocation4] sm:$0xf] %vm145, 0.0
    $region77: #{tpu_custom_call.1} parent=1 // pred_fallthru
      _
    %v147 = vld [vmem:[#allocation6] sm:$0xff]
    %v148 = vld [vmem:[#allocation6 + $0x8] sm:$0xff]
    %v149 = vld [vmem:[#allocation6 + $0x10] sm:$0xff]
    %v150 = vld [vmem:[#allocation6 + $0x18] sm:$0xff]
    %v151 = vld [vmem:[#allocation6 + $0x20] sm:$0xff]
    %v152 = vld [vmem:[#allocation6 + $0x28] sm:$0xff]
    %v153 = vld [vmem:[#allocation6 + $0x30] sm:$0xff]
    %v154 = vld [vmem:[#allocation6 + $0x38] sm:$0xff]
    %v155 = vld [vmem:[#allocation6 + $0x40] sm:$0xff]
    %v156 = vld [vmem:[#allocation6 + $0x48] sm:$0xff]
    %v157 = vld [vmem:[#allocation6 + $0x50] sm:$0xff]
    %v158 = vld [vmem:[#allocation6 + $0x58] sm:$0xff]
    %v159 = vld [vmem:[#allocation6 + $0x60] sm:$0xff]
    %v160 = vld [vmem:[#allocation6 + $0x68] sm:$0xff]
    %v161 = vld [vmem:[#allocation6 + $0x70] sm:$0xff]
    %v162 = vld [vmem:[#allocation6 + $0x78] sm:$0xff]
    %v163 = vld [vmem:[#allocation6 + $0x80] sm:$0xff]
    %v164 = vld [vmem:[#allocation6 + $0x88] sm:$0xff]
    %v165 = vld [vmem:[#allocation6 + $0x90] sm:$0xff]
    %v166 = vld [vmem:[#allocation6 + $0x98] sm:$0xff]
    %v167 = vld [vmem:[#allocation6 + $0xa0] sm:$0xff]
    %v168 = vld [vmem:[#allocation6 + $0xa8] sm:$0xff]
    %v169 = vld [vmem:[#allocation6 + $0xb0] sm:$0xff]
    %v170 = vld [vmem:[#allocation6 + $0xb8] sm:$0xff]
    %v171 = vld [vmem:[#allocation6 + $0xc0] sm:$0xff]
    %v172 = vld [vmem:[#allocation6 + $0xc8] sm:$0xff]
    %v173 = vld [vmem:[#allocation6 + $0xd0] sm:$0xff]
    %v174 = vld [vmem:[#allocation6 + $0xd8] sm:$0xff]
    %v175 = vld [vmem:[#allocation6 + $0xe0] sm:$0xff]
    %v176 = vld [vmem:[#allocation6 + $0xe8] sm:$0xff]
    %v177 = vld [vmem:[#allocation6 + $0xf0] sm:$0xff]
    %v178 = vld [vmem:[#allocation6 + $0xf8] sm:$0xff]
    %v179 = vld [vmem:[#allocation10] sm:$0xff]
    %v180 = vld [vmem:[#allocation10 + $0x8] sm:$0xff]
    %v181 = vld [vmem:[#allocation10 + $0x10] sm:$0xff]
    %v182 = vld [vmem:[#allocation10 + $0x18] sm:$0xff]
    %v183 = vld [vmem:[#allocation10 + $0x20] sm:$0xff]
    %v184 = vld [vmem:[#allocation10 + $0x28] sm:$0xff]
    %v185 = vld [vmem:[#allocation10 + $0x30] sm:$0xff]
    %v186 = vld [vmem:[#allocation10 + $0x38] sm:$0xff]
    %v187 = vld [vmem:[#allocation10 + $0x40] sm:$0xff]
    %v188 = vld [vmem:[#allocation10 + $0x48] sm:$0xff]
    %v189 = vld [vmem:[#allocation10 + $0x50] sm:$0xff]
    %v190 = vld [vmem:[#allocation10 + $0x58] sm:$0xff]
    %v191 = vld [vmem:[#allocation10 + $0x60] sm:$0xff]
    %v192 = vld [vmem:[#allocation10 + $0x68] sm:$0xff]
    %v193 = vld [vmem:[#allocation10 + $0x70] sm:$0xff]
    %v194 = vld [vmem:[#allocation10 + $0x78] sm:$0xff]
    %v195 = vld [vmem:[#allocation10 + $0x80] sm:$0xff]
    %v196 = vld [vmem:[#allocation10 + $0x88] sm:$0xff]
    %v197 = vld [vmem:[#allocation10 + $0x90] sm:$0xff]
    %v198 = vld [vmem:[#allocation10 + $0x98] sm:$0xff]
    %v199 = vld [vmem:[#allocation10 + $0xa0] sm:$0xff]
    %v200 = vld [vmem:[#allocation10 + $0xa8] sm:$0xff]
    %v201 = vld [vmem:[#allocation10 + $0xb0] sm:$0xff]
    %v202 = vld [vmem:[#allocation10 + $0xb8] sm:$0xff]
    %v203 = vld [vmem:[#allocation10 + $0xc0] sm:$0xff]
    %v204 = vld [vmem:[#allocation10 + $0xc8] sm:$0xff]
    %v205 = vld [vmem:[#allocation10 + $0xd0] sm:$0xff]
    %v206 = vld [vmem:[#allocation10 + $0xd8] sm:$0xff]
    %v207 = vld [vmem:[#allocation10 + $0xe0] sm:$0xff]
    %v208 = vld [vmem:[#allocation10 + $0xe8] sm:$0xff]
    %v209 = vld [vmem:[#allocation10 + $0xf0] sm:$0xff]
    %v210 = vld [vmem:[#allocation10 + $0xf8] sm:$0xff]
    %v211 = vld [vmem:[#allocation10 + $0x100] sm:$0xff]
    %v212 = vld [vmem:[#allocation10 + $0x108] sm:$0xff]
    %v213 = vld [vmem:[#allocation10 + $0x110] sm:$0xff]
    %v214 = vld [vmem:[#allocation10 + $0x118] sm:$0xff]
    %v215 = vld [vmem:[#allocation10 + $0x120] sm:$0xff]
    %v216 = vld [vmem:[#allocation10 + $0x128] sm:$0xff]
    %v217 = vld [vmem:[#allocation10 + $0x130] sm:$0xff]
    %v218 = vld [vmem:[#allocation10 + $0x138] sm:$0xff]
    %v219 = vld [vmem:[#allocation10 + $0x140] sm:$0xff]
    %v220 = vld [vmem:[#allocation10 + $0x148] sm:$0xff]
    %v221 = vld [vmem:[#allocation10 + $0x150] sm:$0xff]
    %v222 = vld [vmem:[#allocation10 + $0x158] sm:$0xff]
    %v223 = vld [vmem:[#allocation10 + $0x160] sm:$0xff]
    %v224 = vld [vmem:[#allocation10 + $0x168] sm:$0xff]
    %v225 = vld [vmem:[#allocation10 + $0x170] sm:$0xff]
    %v226 = vld [vmem:[#allocation10 + $0x178] sm:$0xff]
    %v227 = vld [vmem:[#allocation10 + $0x180] sm:$0xff]
    %v228 = vld [vmem:[#allocation10 + $0x188] sm:$0xff]
    %v229 = vld [vmem:[#allocation10 + $0x190] sm:$0xff]
    %v230 = vld [vmem:[#allocation10 + $0x198] sm:$0xff]
    %v231 = vld [vmem:[#allocation10 + $0x1a0] sm:$0xff]
    %v232 = vld [vmem:[#allocation10 + $0x1a8] sm:$0xff]
    %v233 = vld [vmem:[#allocation10 + $0x1b0] sm:$0xff]
    %v234 = vld [vmem:[#allocation10 + $0x1b8] sm:$0xff]
    %v235 = vld [vmem:[#allocation10 + $0x1c0] sm:$0xff]
    %v236 = vld [vmem:[#allocation10 + $0x1c8] sm:$0xff]
    %v237 = vld [vmem:[#allocation10 + $0x1d0] sm:$0xff]
    %v238 = vld [vmem:[#allocation10 + $0x1d8] sm:$0xff]
    %v239 = vld [vmem:[#allocation10 + $0x1e0] sm:$0xff]
    %v240 = vld [vmem:[#allocation10 + $0x1e8] sm:$0xff]
    %v241 = vld [vmem:[#allocation10 + $0x1f0] sm:$0xff]
    %v242 = vld [vmem:[#allocation10 + $0x1f8] sm:$0xff]
    %v243 = vld [vmem:[#allocation10 + $0x200] sm:$0xff]
    %v244 = vld [vmem:[#allocation10 + $0x208] sm:$0xff]
    %v245 = vld [vmem:[#allocation10 + $0x210] sm:$0xff]
    %v246 = vld [vmem:[#allocation10 + $0x218] sm:$0xff]
    %v247 = vld [vmem:[#allocation10 + $0x220] sm:$0xff]
    %v248 = vld [vmem:[#allocation10 + $0x228] sm:$0xff]
    %v249 = vld [vmem:[#allocation10 + $0x230] sm:$0xff]
    %v250 = vld [vmem:[#allocation10 + $0x238] sm:$0xff]
    %v251 = vld [vmem:[#allocation10 + $0x240] sm:$0xff]
    %v252 = vld [vmem:[#allocation10 + $0x248] sm:$0xff]
    %v253 = vld [vmem:[#allocation10 + $0x250] sm:$0xff]
    %v254 = vld [vmem:[#allocation10 + $0x258] sm:$0xff]
    %v255 = vld [vmem:[#allocation10 + $0x260] sm:$0xff]
    %v256 = vld [vmem:[#allocation10 + $0x268] sm:$0xff]
    %v257 = vld [vmem:[#allocation10 + $0x270] sm:$0xff]
    %v258 = vld [vmem:[#allocation10 + $0x278] sm:$0xff]
    %v259 = vld [vmem:[#allocation10 + $0x280] sm:$0xff]
    %v260 = vld [vmem:[#allocation10 + $0x288] sm:$0xff]
    %v261 = vld [vmem:[#allocation10 + $0x290] sm:$0xff]
    %v262 = vld [vmem:[#allocation10 + $0x298] sm:$0xff]
    %v263 = vld [vmem:[#allocation10 + $0x2a0] sm:$0xff]
    %v264 = vld [vmem:[#allocation10 + $0x2a8] sm:$0xff]
    %v265 = vld [vmem:[#allocation10 + $0x2b0] sm:$0xff]
    %v266 = vld [vmem:[#allocation10 + $0x2b8] sm:$0xff]
    %v267 = vld [vmem:[#allocation10 + $0x2c0] sm:$0xff]
    %v268 = vld [vmem:[#allocation10 + $0x2c8] sm:$0xff]
    %v269 = vld [vmem:[#allocation10 + $0x2d0] sm:$0xff]
    %v270 = vld [vmem:[#allocation10 + $0x2d8] sm:$0xff]
    %v271 = vld [vmem:[#allocation10 + $0x2e0] sm:$0xff]
    %v272 = vld [vmem:[#allocation10 + $0x2e8] sm:$0xff]
    %v273 = vld [vmem:[#allocation10 + $0x2f0] sm:$0xff]
    %v274 = vld [vmem:[#allocation10 + $0x2f8] sm:$0xff]
    %v275 = vld [vmem:[#allocation10 + $0x300] sm:$0xff]
    %v276 = vld [vmem:[#allocation10 + $0x308] sm:$0xff]
    %v277 = vld [vmem:[#allocation10 + $0x310] sm:$0xff]
    %v278 = vld [vmem:[#allocation10 + $0x318] sm:$0xff]
    %v279 = vld [vmem:[#allocation10 + $0x320] sm:$0xff]
    %v280 = vld [vmem:[#allocation10 + $0x328] sm:$0xff]
    %v281 = vld [vmem:[#allocation10 + $0x330] sm:$0xff]
    %v282 = vld [vmem:[#allocation10 + $0x338] sm:$0xff]
    %v283 = vld [vmem:[#allocation10 + $0x340] sm:$0xff]
    %v284 = vld [vmem:[#allocation10 + $0x348] sm:$0xff]
    %v285 = vld [vmem:[#allocation10 + $0x350] sm:$0xff]
    %v286 = vld [vmem:[#allocation10 + $0x358] sm:$0xff]
    %v287 = vld [vmem:[#allocation10 + $0x360] sm:$0xff]
    %v288 = vld [vmem:[#allocation10 + $0x368] sm:$0xff]
    %v289 = vld [vmem:[#allocation10 + $0x370] sm:$0xff]
    %v290 = vld [vmem:[#allocation10 + $0x378] sm:$0xff]
    %v291 = vld [vmem:[#allocation10 + $0x380] sm:$0xff]
    %v292 = vld [vmem:[#allocation10 + $0x388] sm:$0xff]
    %v293 = vld [vmem:[#allocation10 + $0x390] sm:$0xff]
    %v294 = vld [vmem:[#allocation10 + $0x398] sm:$0xff]
    %v295 = vld [vmem:[#allocation10 + $0x3a0] sm:$0xff]
    %v296 = vld [vmem:[#allocation10 + $0x3a8] sm:$0xff]
    %v297 = vld [vmem:[#allocation10 + $0x3b0] sm:$0xff]
    %v298 = vld [vmem:[#allocation10 + $0x3b8] sm:$0xff]
    %v299 = vld [vmem:[#allocation10 + $0x3c0] sm:$0xff]
    %v300 = vld [vmem:[#allocation10 + $0x3c8] sm:$0xff]
    %v301 = vld [vmem:[#allocation10 + $0x3d0] sm:$0xff]
    %v302 = vld [vmem:[#allocation10 + $0x3d8] sm:$0xff]
    %v303 = vld [vmem:[#allocation10 + $0x3e0] sm:$0xff]
    %v304 = vld [vmem:[#allocation10 + $0x3e8] sm:$0xff]
    %v305 = vld [vmem:[#allocation10 + $0x3f0] sm:$0xff]
    %v306 = vld [vmem:[#allocation10 + $0x3f8] sm:$0xff]
    %v307 = vld [vmem:[#allocation10 + $0x400] sm:$0xff]
    %v308 = vld [vmem:[#allocation10 + $0x408] sm:$0xff]
    %v309 = vld [vmem:[#allocation10 + $0x410] sm:$0xff]
    %v310 = vld [vmem:[#allocation10 + $0x418] sm:$0xff]
    %v311 = vld [vmem:[#allocation10 + $0x420] sm:$0xff]
    %v312 = vld [vmem:[#allocation10 + $0x428] sm:$0xff]
    %v313 = vld [vmem:[#allocation10 + $0x430] sm:$0xff]
    %v314 = vld [vmem:[#allocation10 + $0x438] sm:$0xff]
    %v315 = vld [vmem:[#allocation10 + $0x440] sm:$0xff]
    %v316 = vld [vmem:[#allocation10 + $0x448] sm:$0xff]
    %v317 = vld [vmem:[#allocation10 + $0x450] sm:$0xff]
    %v318 = vld [vmem:[#allocation10 + $0x458] sm:$0xff]
    %v319 = vld [vmem:[#allocation10 + $0x460] sm:$0xff]
    %v320 = vld [vmem:[#allocation10 + $0x468] sm:$0xff]
    %v321 = vld [vmem:[#allocation10 + $0x470] sm:$0xff]
    %v322 = vld [vmem:[#allocation10 + $0x478] sm:$0xff]
    %v323 = vld [vmem:[#allocation10 + $0x480] sm:$0xff]
    %v324 = vld [vmem:[#allocation10 + $0x488] sm:$0xff]
    %v325 = vld [vmem:[#allocation10 + $0x490] sm:$0xff]
    %v326 = vld [vmem:[#allocation10 + $0x498] sm:$0xff]
    %v327 = vld [vmem:[#allocation10 + $0x4a0] sm:$0xff]
    %v328 = vld [vmem:[#allocation10 + $0x4a8] sm:$0xff]
    %v329 = vld [vmem:[#allocation10 + $0x4b0] sm:$0xff]
    %v330 = vld [vmem:[#allocation10 + $0x4b8] sm:$0xff]
    %v331 = vld [vmem:[#allocation10 + $0x4c0] sm:$0xff]
    %v332 = vld [vmem:[#allocation10 + $0x4c8] sm:$0xff]
    %v333 = vld [vmem:[#allocation10 + $0x4d0] sm:$0xff]
    %v334 = vld [vmem:[#allocation10 + $0x4d8] sm:$0xff]
    %v335 = vld [vmem:[#allocation10 + $0x4e0] sm:$0xff]
    %v336 = vld [vmem:[#allocation10 + $0x4e8] sm:$0xff]
    %v337 = vld [vmem:[#allocation10 + $0x4f0] sm:$0xff]
    %v338 = vld [vmem:[#allocation10 + $0x4f8] sm:$0xff]
    %v339 = vld [vmem:[#allocation10 + $0x500] sm:$0xff]
    %v340 = vld [vmem:[#allocation10 + $0x508] sm:$0xff]
    %v341 = vld [vmem:[#allocation10 + $0x510] sm:$0xff]
    %v342 = vld [vmem:[#allocation10 + $0x518] sm:$0xff]
    %v343 = vld [vmem:[#allocation10 + $0x520] sm:$0xff]
    %v344 = vld [vmem:[#allocation10 + $0x528] sm:$0xff]
    %v345 = vld [vmem:[#allocation10 + $0x530] sm:$0xff]
    %v346 = vld [vmem:[#allocation10 + $0x538] sm:$0xff]
    %v347 = vld [vmem:[#allocation10 + $0x540] sm:$0xff]
    %v348 = vld [vmem:[#allocation10 + $0x548] sm:$0xff]
    %v349 = vld [vmem:[#allocation10 + $0x550] sm:$0xff]
    %v350 = vld [vmem:[#allocation10 + $0x558] sm:$0xff]
    %v351 = vld [vmem:[#allocation10 + $0x560] sm:$0xff]
    %v352 = vld [vmem:[#allocation10 + $0x568] sm:$0xff]
    %v353 = vld [vmem:[#allocation10 + $0x570] sm:$0xff]
    %v354 = vld [vmem:[#allocation10 + $0x578] sm:$0xff]
    %v355 = vld [vmem:[#allocation10 + $0x580] sm:$0xff]
    %v356 = vld [vmem:[#allocation10 + $0x588] sm:$0xff]
    %v357 = vld [vmem:[#allocation10 + $0x590] sm:$0xff]
    %v358 = vld [vmem:[#allocation10 + $0x598] sm:$0xff]
    %v359 = vld [vmem:[#allocation10 + $0x5a0] sm:$0xff]
    %v360 = vld [vmem:[#allocation10 + $0x5a8] sm:$0xff]
    %v361 = vld [vmem:[#allocation10 + $0x5b0] sm:$0xff]
    %v362 = vld [vmem:[#allocation10 + $0x5b8] sm:$0xff]
    %v363 = vld [vmem:[#allocation10 + $0x5c0] sm:$0xff]
    %v364 = vld [vmem:[#allocation10 + $0x5c8] sm:$0xff]
    %v365 = vld [vmem:[#allocation10 + $0x5d0] sm:$0xff]
    %v366 = vld [vmem:[#allocation10 + $0x5d8] sm:$0xff]
    %v367 = vld [vmem:[#allocation10 + $0x5e0] sm:$0xff]
    %v368 = vld [vmem:[#allocation10 + $0x5e8] sm:$0xff]
    %v369 = vld [vmem:[#allocation10 + $0x5f0] sm:$0xff]
    %v370 = vld [vmem:[#allocation10 + $0x5f8] sm:$0xff]
    %v371 = vld [vmem:[#allocation10 + $0x600] sm:$0xff]
    %v372 = vld [vmem:[#allocation10 + $0x608] sm:$0xff]
    %v373 = vld [vmem:[#allocation10 + $0x610] sm:$0xff]
    %v374 = vld [vmem:[#allocation10 + $0x618] sm:$0xff]
    %v375 = vld [vmem:[#allocation10 + $0x620] sm:$0xff]
    %v376 = vld [vmem:[#allocation10 + $0x628] sm:$0xff]
    %v377 = vld [vmem:[#allocation10 + $0x630] sm:$0xff]
    %v378 = vld [vmem:[#allocation10 + $0x638] sm:$0xff]
    %v379 = vld [vmem:[#allocation10 + $0x640] sm:$0xff]
    %v380 = vld [vmem:[#allocation10 + $0x648] sm:$0xff]
    %v381 = vld [vmem:[#allocation10 + $0x650] sm:$0xff]
    %v382 = vld [vmem:[#allocation10 + $0x658] sm:$0xff]
    %v383 = vld [vmem:[#allocation10 + $0x660] sm:$0xff]
    %v384 = vld [vmem:[#allocation10 + $0x668] sm:$0xff]
    %v385 = vld [vmem:[#allocation10 + $0x670] sm:$0xff]
    %v386 = vld [vmem:[#allocation10 + $0x678] sm:$0xff]
    %v387 = vld [vmem:[#allocation10 + $0x680] sm:$0xff]
    %v388 = vld [vmem:[#allocation10 + $0x688] sm:$0xff]
    %v389 = vld [vmem:[#allocation10 + $0x690] sm:$0xff]
    %v390 = vld [vmem:[#allocation10 + $0x698] sm:$0xff]
    %v391 = vld [vmem:[#allocation10 + $0x6a0] sm:$0xff]
    %v392 = vld [vmem:[#allocation10 + $0x6a8] sm:$0xff]
    %v393 = vld [vmem:[#allocation10 + $0x6b0] sm:$0xff]
    %v394 = vld [vmem:[#allocation10 + $0x6b8] sm:$0xff]
    %v395 = vld [vmem:[#allocation10 + $0x6c0] sm:$0xff]
    %v396 = vld [vmem:[#allocation10 + $0x6c8] sm:$0xff]
    %v397 = vld [vmem:[#allocation10 + $0x6d0] sm:$0xff]
    %v398 = vld [vmem:[#allocation10 + $0x6d8] sm:$0xff]
    %v399 = vld [vmem:[#allocation10 + $0x6e0] sm:$0xff]
    %v400 = vld [vmem:[#allocation10 + $0x6e8] sm:$0xff]
    %v401 = vld [vmem:[#allocation10 + $0x6f0] sm:$0xff]
    %v402 = vld [vmem:[#allocation10 + $0x6f8] sm:$0xff]
    %v403 = vld [vmem:[#allocation10 + $0x700] sm:$0xff]
    %v404 = vld [vmem:[#allocation10 + $0x708] sm:$0xff]
    %v405 = vld [vmem:[#allocation10 + $0x710] sm:$0xff]
    %v406 = vld [vmem:[#allocation10 + $0x718] sm:$0xff]
    %v407 = vld [vmem:[#allocation10 + $0x720] sm:$0xff]
    %v408 = vld [vmem:[#allocation10 + $0x728] sm:$0xff]
    %v409 = vld [vmem:[#allocation10 + $0x730] sm:$0xff]
    %v410 = vld [vmem:[#allocation10 + $0x738] sm:$0xff]
    %v411 = vld [vmem:[#allocation10 + $0x740] sm:$0xff]
    %v412 = vld [vmem:[#allocation10 + $0x748] sm:$0xff]
    %v413 = vld [vmem:[#allocation10 + $0x750] sm:$0xff]
    %v414 = vld [vmem:[#allocation10 + $0x758] sm:$0xff]
    %v415 = vld [vmem:[#allocation10 + $0x760] sm:$0xff]
    %v416 = vld [vmem:[#allocation10 + $0x768] sm:$0xff]
    %v417 = vld [vmem:[#allocation10 + $0x770] sm:$0xff]
    %v418 = vld [vmem:[#allocation10 + $0x778] sm:$0xff]
    %v419 = vld [vmem:[#allocation10 + $0x780] sm:$0xff]
    %v420 = vld [vmem:[#allocation10 + $0x788] sm:$0xff]
    %v421 = vld [vmem:[#allocation10 + $0x790] sm:$0xff]
    %v422 = vld [vmem:[#allocation10 + $0x798] sm:$0xff]
    %v423 = vld [vmem:[#allocation10 + $0x7a0] sm:$0xff]
    %v424 = vld [vmem:[#allocation10 + $0x7a8] sm:$0xff]
    %v425 = vld [vmem:[#allocation10 + $0x7b0] sm:$0xff]
    %v426 = vld [vmem:[#allocation10 + $0x7b8] sm:$0xff]
    %v427 = vld [vmem:[#allocation10 + $0x7c0] sm:$0xff]
    %v428 = vld [vmem:[#allocation10 + $0x7c8] sm:$0xff]
    %v429 = vld [vmem:[#allocation10 + $0x7d0] sm:$0xff]
    %v430 = vld [vmem:[#allocation10 + $0x7d8] sm:$0xff]
    %v431 = vld [vmem:[#allocation10 + $0x7e0] sm:$0xff]
    %v432 = vld [vmem:[#allocation10 + $0x7e8] sm:$0xff]
    %v433 = vld [vmem:[#allocation10 + $0x7f0] sm:$0xff]
    %v434 = vld [vmem:[#allocation10 + $0x7f8] sm:$0xff]
    %v435 = vld [vmem:[%s2] sm:$0xf]
    %v437 = vlaneseq
    %v438 = vshrl.u32 %v437, 7
    %v439 = vsub.s32 0, %v438
    %v440 = vrot.slane %v435, %v439
    %v441 = vlaneseq
    %v442 = vshrl.u32 %v441, 7
    %v443 = vsub.s32 1, %v442
    %v444 = vrot.slane %v435, %v443
    %v445 = vlaneseq
    %v446 = vshrl.u32 %v445, 7
    %v447 = vsub.s32 2, %v446
    %v448 = vrot.slane %v435, %v447
    %v449 = vlaneseq
    %v450 = vshrl.u32 %v449, 7
    %v451 = vsub.s32 3, %v450
    %v452 = vrot.slane %v435, %v451
    %v489 = vunpack.c.l.b16 %v147
    %v490 = vunpack.c.h.b16 %v147
    %v491 = vunpack.c.l.b16 %v148
    %v492 = vunpack.c.h.b16 %v148
    %v493 = vunpack.c.l.b16 %v149
    %v494 = vunpack.c.h.b16 %v149
    %v495 = vunpack.c.l.b16 %v150
    %v496 = vunpack.c.h.b16 %v150
    %v497 = vunpack.c.l.b16 %v151
    %v498 = vunpack.c.h.b16 %v151
    %v499 = vunpack.c.l.b16 %v152
    %v500 = vunpack.c.h.b16 %v152
    %v501 = vunpack.c.l.b16 %v153
    %v502 = vunpack.c.h.b16 %v153
    %v503 = vunpack.c.l.b16 %v154
    %v504 = vunpack.c.h.b16 %v154
    %v505 = vunpack.c.l.b16 %v155
    %v506 = vunpack.c.h.b16 %v155
    %v507 = vunpack.c.l.b16 %v156
    %v508 = vunpack.c.h.b16 %v156
    %v509 = vunpack.c.l.b16 %v157
    %v510 = vunpack.c.h.b16 %v157
    %v511 = vunpack.c.l.b16 %v158
    %v512 = vunpack.c.h.b16 %v158
    %v513 = vunpack.c.l.b16 %v159
    %v514 = vunpack.c.h.b16 %v159
    %v515 = vunpack.c.l.b16 %v160
    %v516 = vunpack.c.h.b16 %v160
    %v517 = vunpack.c.l.b16 %v161
    %v518 = vunpack.c.h.b16 %v161
    %v519 = vunpack.c.l.b16 %v162
    %v520 = vunpack.c.h.b16 %v162
    %v521 = vunpack.c.l.b16 %v163
    %v522 = vunpack.c.h.b16 %v163
    %v523 = vunpack.c.l.b16 %v164
    %v524 = vunpack.c.h.b16 %v164
    %v525 = vunpack.c.l.b16 %v165
    %v526 = vunpack.c.h.b16 %v165
    %v527 = vunpack.c.l.b16 %v166
    %v528 = vunpack.c.h.b16 %v166
    %v529 = vunpack.c.l.b16 %v167
    %v530 = vunpack.c.h.b16 %v167
    %v531 = vunpack.c.l.b16 %v168
    %v532 = vunpack.c.h.b16 %v168
    %v533 = vunpack.c.l.b16 %v169
    %v534 = vunpack.c.h.b16 %v169
    %v535 = vunpack.c.l.b16 %v170
    %v536 = vunpack.c.h.b16 %v170
    %v537 = vunpack.c.l.b16 %v171
    %v538 = vunpack.c.h.b16 %v171
    %v539 = vunpack.c.l.b16 %v172
    %v540 = vunpack.c.h.b16 %v172
    %v541 = vunpack.c.l.b16 %v173
    %v542 = vunpack.c.h.b16 %v173
    %v543 = vunpack.c.l.b16 %v174
    %v544 = vunpack.c.h.b16 %v174
    %v545 = vunpack.c.l.b16 %v175
    %v546 = vunpack.c.h.b16 %v175
    %v547 = vunpack.c.l.b16 %v176
    %v548 = vunpack.c.h.b16 %v176
    %v549 = vunpack.c.l.b16 %v177
    %v550 = vunpack.c.h.b16 %v177
    %v551 = vunpack.c.l.b16 %v178
    %v552 = vunpack.c.h.b16 %v178
    %v553 = vpack.c.b16 %v497, %v489
    %v554 = vpack.c.b16 %v498, %v490
    %v555 = vpack.c.b16 %v499, %v491
    %v556 = vpack.c.b16 %v500, %v492
    %v557 = vpack.c.b16 %v501, %v493
    %v558 = vpack.c.b16 %v502, %v494
    %v559 = vpack.c.b16 %v503, %v495
    %v560 = vpack.c.b16 %v504, %v496
    %v561 = vpack.c.b16 %v513, %v505
    %v562 = vpack.c.b16 %v514, %v506
    %v563 = vpack.c.b16 %v515, %v507
    %v564 = vpack.c.b16 %v516, %v508
    %v565 = vpack.c.b16 %v517, %v509
    %v566 = vpack.c.b16 %v518, %v510
    %v567 = vpack.c.b16 %v519, %v511
    %v568 = vpack.c.b16 %v520, %v512
    %v569 = vpack.c.b16 %v529, %v521
    %v570 = vpack.c.b16 %v530, %v522
    %v571 = vpack.c.b16 %v531, %v523
    %v572 = vpack.c.b16 %v532, %v524
    %v573 = vpack.c.b16 %v533, %v525
    %v574 = vpack.c.b16 %v534, %v526
    %v575 = vpack.c.b16 %v535, %v527
    %v576 = vpack.c.b16 %v536, %v528
    %v577 = vpack.c.b16 %v545, %v537
    %v578 = vpack.c.b16 %v546, %v538
    %v579 = vpack.c.b16 %v547, %v539
    %v580 = vpack.c.b16 %v548, %v540
    %v581 = vpack.c.b16 %v549, %v541
    %v582 = vpack.c.b16 %v550, %v542
    %v583 = vpack.c.b16 %v551, %v543
    %v584 = vpack.c.b16 %v552, %v544
    %v873 = vunpack.c.l.b16 %v179
    %v874 = vunpack.c.h.b16 %v179
    %v875 = vunpack.c.l.b16 %v180
    %v876 = vunpack.c.h.b16 %v180
    %v877 = vunpack.c.l.b16 %v181
    %v878 = vunpack.c.h.b16 %v181
    %v879 = vunpack.c.l.b16 %v182
    %v880 = vunpack.c.h.b16 %v182
    %v881 = vunpack.c.l.b16 %v183
    %v882 = vunpack.c.h.b16 %v183
    %v883 = vunpack.c.l.b16 %v184
    %v884 = vunpack.c.h.b16 %v184
    %v885 = vunpack.c.l.b16 %v185
    %v886 = vunpack.c.h.b16 %v185
    %v887 = vunpack.c.l.b16 %v186
    %v888 = vunpack.c.h.b16 %v186
    %v889 = vunpack.c.l.b16 %v187
    %v890 = vunpack.c.h.b16 %v187
    %v891 = vunpack.c.l.b16 %v188
    %v892 = vunpack.c.h.b16 %v188
    %v893 = vunpack.c.l.b16 %v189
    %v894 = vunpack.c.h.b16 %v189
    %v895 = vunpack.c.l.b16 %v190
    %v896 = vunpack.c.h.b16 %v190
    %v897 = vunpack.c.l.b16 %v191
    %v898 = vunpack.c.h.b16 %v191
    %v899 = vunpack.c.l.b16 %v192
    %v900 = vunpack.c.h.b16 %v192
    %v901 = vunpack.c.l.b16 %v193
    %v902 = vunpack.c.h.b16 %v193
    %v903 = vunpack.c.l.b16 %v194
    %v904 = vunpack.c.h.b16 %v194
    %v905 = vunpack.c.l.b16 %v195
    %v906 = vunpack.c.h.b16 %v195
    %v907 = vunpack.c.l.b16 %v196
    %v908 = vunpack.c.h.b16 %v196
    %v909 = vunpack.c.l.b16 %v197
    %v910 = vunpack.c.h.b16 %v197
    %v911 = vunpack.c.l.b16 %v198
    %v912 = vunpack.c.h.b16 %v198
    %v913 = vunpack.c.l.b16 %v199
    %v914 = vunpack.c.h.b16 %v199
    %v915 = vunpack.c.l.b16 %v200
    %v916 = vunpack.c.h.b16 %v200
    %v917 = vunpack.c.l.b16 %v201
    %v918 = vunpack.c.h.b16 %v201
    %v919 = vunpack.c.l.b16 %v202
    %v920 = vunpack.c.h.b16 %v202
    %v921 = vunpack.c.l.b16 %v203
    %v922 = vunpack.c.h.b16 %v203
    %v923 = vunpack.c.l.b16 %v204
    %v924 = vunpack.c.h.b16 %v204
    %v925 = vunpack.c.l.b16 %v205
    %v926 = vunpack.c.h.b16 %v205
    %v927 = vunpack.c.l.b16 %v206
    %v928 = vunpack.c.h.b16 %v206
    %v929 = vunpack.c.l.b16 %v207
    %v930 = vunpack.c.h.b16 %v207
    %v931 = vunpack.c.l.b16 %v208
    %v932 = vunpack.c.h.b16 %v208
    %v933 = vunpack.c.l.b16 %v209
    %v934 = vunpack.c.h.b16 %v209
    %v935 = vunpack.c.l.b16 %v210
    %v936 = vunpack.c.h.b16 %v210
    %v937 = vunpack.c.l.b16 %v211
    %v938 = vunpack.c.h.b16 %v211
    %v939 = vunpack.c.l.b16 %v212
    %v940 = vunpack.c.h.b16 %v212
    %v941 = vunpack.c.l.b16 %v213
    %v942 = vunpack.c.h.b16 %v213
    %v943 = vunpack.c.l.b16 %v214
    %v944 = vunpack.c.h.b16 %v214
    %v945 = vunpack.c.l.b16 %v215
    %v946 = vunpack.c.h.b16 %v215
    %v947 = vunpack.c.l.b16 %v216
    %v948 = vunpack.c.h.b16 %v216
    %v949 = vunpack.c.l.b16 %v217
    %v950 = vunpack.c.h.b16 %v217
    %v951 = vunpack.c.l.b16 %v218
    %v952 = vunpack.c.h.b16 %v218
    %v953 = vunpack.c.l.b16 %v219
    %v954 = vunpack.c.h.b16 %v219
    %v955 = vunpack.c.l.b16 %v220
    %v956 = vunpack.c.h.b16 %v220
    %v957 = vunpack.c.l.b16 %v221
    %v958 = vunpack.c.h.b16 %v221
    %v959 = vunpack.c.l.b16 %v222
    %v960 = vunpack.c.h.b16 %v222
    %v961 = vunpack.c.l.b16 %v223
    %v962 = vunpack.c.h.b16 %v223
    %v963 = vunpack.c.l.b16 %v224
    %v964 = vunpack.c.h.b16 %v224
    %v965 = vunpack.c.l.b16 %v225
    %v966 = vunpack.c.h.b16 %v225
    %v967 = vunpack.c.l.b16 %v226
    %v968 = vunpack.c.h.b16 %v226
    %v969 = vunpack.c.l.b16 %v227
    %v970 = vunpack.c.h.b16 %v227
    %v971 = vunpack.c.l.b16 %v228
    %v972 = vunpack.c.h.b16 %v228
    %v973 = vunpack.c.l.b16 %v229
    %v974 = vunpack.c.h.b16 %v229
    %v975 = vunpack.c.l.b16 %v230
    %v976 = vunpack.c.h.b16 %v230
    %v977 = vunpack.c.l.b16 %v231
    %v978 = vunpack.c.h.b16 %v231
    %v979 = vunpack.c.l.b16 %v232
    %v980 = vunpack.c.h.b16 %v232
    %v981 = vunpack.c.l.b16 %v233
    %v982 = vunpack.c.h.b16 %v233
    %v983 = vunpack.c.l.b16 %v234
    %v984 = vunpack.c.h.b16 %v234
    %v985 = vunpack.c.l.b16 %v235
    %v986 = vunpack.c.h.b16 %v235
    %v987 = vunpack.c.l.b16 %v236
    %v988 = vunpack.c.h.b16 %v236
    %v989 = vunpack.c.l.b16 %v237
    %v990 = vunpack.c.h.b16 %v237
    %v991 = vunpack.c.l.b16 %v238
    %v992 = vunpack.c.h.b16 %v238
    %v993 = vunpack.c.l.b16 %v239
    %v994 = vunpack.c.h.b16 %v239
    %v995 = vunpack.c.l.b16 %v240
    %v996 = vunpack.c.h.b16 %v240
    %v997 = vunpack.c.l.b16 %v241
    %v998 = vunpack.c.h.b16 %v241
    %v999 = vunpack.c.l.b16 %v242
    %v1000 = vunpack.c.h.b16 %v242
    %v1001 = vunpack.c.l.b16 %v243
    %v1002 = vunpack.c.h.b16 %v243
    %v1003 = vunpack.c.l.b16 %v244
    %v1004 = vunpack.c.h.b16 %v244
    %v1005 = vunpack.c.l.b16 %v245
    %v1006 = vunpack.c.h.b16 %v245
    %v1007 = vunpack.c.l.b16 %v246
    %v1008 = vunpack.c.h.b16 %v246
    %v1009 = vunpack.c.l.b16 %v247
    %v1010 = vunpack.c.h.b16 %v247
    %v1011 = vunpack.c.l.b16 %v248
    %v1012 = vunpack.c.h.b16 %v248
    %v1013 = vunpack.c.l.b16 %v249
    %v1014 = vunpack.c.h.b16 %v249
    %v1015 = vunpack.c.l.b16 %v250
    %v1016 = vunpack.c.h.b16 %v250
    %v1017 = vunpack.c.l.b16 %v251
    %v1018 = vunpack.c.h.b16 %v251
    %v1019 = vunpack.c.l.b16 %v252
    %v1020 = vunpack.c.h.b16 %v252
    %v1021 = vunpack.c.l.b16 %v253
    %v1022 = vunpack.c.h.b16 %v253
    %v1023 = vunpack.c.l.b16 %v254
    %v1024 = vunpack.c.h.b16 %v254
    %v1025 = vunpack.c.l.b16 %v255
    %v1026 = vunpack.c.h.b16 %v255
    %v1027 = vunpack.c.l.b16 %v256
    %v1028 = vunpack.c.h.b16 %v256
    %v1029 = vunpack.c.l.b16 %v257
    %v1030 = vunpack.c.h.b16 %v257
    %v1031 = vunpack.c.l.b16 %v258
    %v1032 = vunpack.c.h.b16 %v258
    %v1033 = vunpack.c.l.b16 %v259
    %v1034 = vunpack.c.h.b16 %v259
    %v1035 = vunpack.c.l.b16 %v260
    %v1036 = vunpack.c.h.b16 %v260
    %v1037 = vunpack.c.l.b16 %v261
    %v1038 = vunpack.c.h.b16 %v261
    %v1039 = vunpack.c.l.b16 %v262
    %v1040 = vunpack.c.h.b16 %v262
    %v1041 = vunpack.c.l.b16 %v263
    %v1042 = vunpack.c.h.b16 %v263
    %v1043 = vunpack.c.l.b16 %v264
    %v1044 = vunpack.c.h.b16 %v264
    %v1045 = vunpack.c.l.b16 %v265
    %v1046 = vunpack.c.h.b16 %v265
    %v1047 = vunpack.c.l.b16 %v266
    %v1048 = vunpack.c.h.b16 %v266
    %v1049 = vunpack.c.l.b16 %v267
    %v1050 = vunpack.c.h.b16 %v267
    %v1051 = vunpack.c.l.b16 %v268
    %v1052 = vunpack.c.h.b16 %v268
    %v1053 = vunpack.c.l.b16 %v269
    %v1054 = vunpack.c.h.b16 %v269
    %v1055 = vunpack.c.l.b16 %v270
    %v1056 = vunpack.c.h.b16 %v270
    %v1057 = vunpack.c.l.b16 %v271
    %v1058 = vunpack.c.h.b16 %v271
    %v1059 = vunpack.c.l.b16 %v272
    %v1060 = vunpack.c.h.b16 %v272
    %v1061 = vunpack.c.l.b16 %v273
    %v1062 = vunpack.c.h.b16 %v273
    %v1063 = vunpack.c.l.b16 %v274
    %v1064 = vunpack.c.h.b16 %v274
    %v1065 = vunpack.c.l.b16 %v275
    %v1066 = vunpack.c.h.b16 %v275
    %v1067 = vunpack.c.l.b16 %v276
    %v1068 = vunpack.c.h.b16 %v276
    %v1069 = vunpack.c.l.b16 %v277
    %v1070 = vunpack.c.h.b16 %v277
    %v1071 = vunpack.c.l.b16 %v278
    %v1072 = vunpack.c.h.b16 %v278
    %v1073 = vunpack.c.l.b16 %v279
    %v1074 = vunpack.c.h.b16 %v279
    %v1075 = vunpack.c.l.b16 %v280
    %v1076 = vunpack.c.h.b16 %v280
    %v1077 = vunpack.c.l.b16 %v281
    %v1078 = vunpack.c.h.b16 %v281
    %v1079 = vunpack.c.l.b16 %v282
    %v1080 = vunpack.c.h.b16 %v282
    %v1081 = vunpack.c.l.b16 %v283
    %v1082 = vunpack.c.h.b16 %v283
    %v1083 = vunpack.c.l.b16 %v284
    %v1084 = vunpack.c.h.b16 %v284
    %v1085 = vunpack.c.l.b16 %v285
    %v1086 = vunpack.c.h.b16 %v285
    %v1087 = vunpack.c.l.b16 %v286
    %v1088 = vunpack.c.h.b16 %v286
    %v1089 = vunpack.c.l.b16 %v287
    %v1090 = vunpack.c.h.b16 %v287
    %v1091 = vunpack.c.l.b16 %v288
    %v1092 = vunpack.c.h.b16 %v288
    %v1093 = vunpack.c.l.b16 %v289
    %v1094 = vunpack.c.h.b16 %v289
    %v1095 = vunpack.c.l.b16 %v290
    %v1096 = vunpack.c.h.b16 %v290
    %v1097 = vunpack.c.l.b16 %v291
    %v1098 = vunpack.c.h.b16 %v291
    %v1099 = vunpack.c.l.b16 %v292
    %v1100 = vunpack.c.h.b16 %v292
    %v1101 = vunpack.c.l.b16 %v293
    %v1102 = vunpack.c.h.b16 %v293
    %v1103 = vunpack.c.l.b16 %v294
    %v1104 = vunpack.c.h.b16 %v294
    %v1105 = vunpack.c.l.b16 %v295
    %v1106 = vunpack.c.h.b16 %v295
    %v1107 = vunpack.c.l.b16 %v296
    %v1108 = vunpack.c.h.b16 %v296
    %v1109 = vunpack.c.l.b16 %v297
    %v1110 = vunpack.c.h.b16 %v297
    %v1111 = vunpack.c.l.b16 %v298
    %v1112 = vunpack.c.h.b16 %v298
    %v1113 = vunpack.c.l.b16 %v299
    %v1114 = vunpack.c.h.b16 %v299
    %v1115 = vunpack.c.l.b16 %v300
    %v1116 = vunpack.c.h.b16 %v300
    %v1117 = vunpack.c.l.b16 %v301
    %v1118 = vunpack.c.h.b16 %v301
    %v1119 = vunpack.c.l.b16 %v302
    %v1120 = vunpack.c.h.b16 %v302
    %v1121 = vunpack.c.l.b16 %v303
    %v1122 = vunpack.c.h.b16 %v303
    %v1123 = vunpack.c.l.b16 %v304
    %v1124 = vunpack.c.h.b16 %v304
    %v1125 = vunpack.c.l.b16 %v305
    %v1126 = vunpack.c.h.b16 %v305
    %v1127 = vunpack.c.l.b16 %v306
    %v1128 = vunpack.c.h.b16 %v306
    %v1129 = vunpack.c.l.b16 %v307
    %v1130 = vunpack.c.h.b16 %v307
    %v1131 = vunpack.c.l.b16 %v308
    %v1132 = vunpack.c.h.b16 %v308
    %v1133 = vunpack.c.l.b16 %v309
    %v1134 = vunpack.c.h.b16 %v309
    %v1135 = vunpack.c.l.b16 %v310
    %v1136 = vunpack.c.h.b16 %v310
    %v1137 = vunpack.c.l.b16 %v311
    %v1138 = vunpack.c.h.b16 %v311
    %v1139 = vunpack.c.l.b16 %v312
    %v1140 = vunpack.c.h.b16 %v312
    %v1141 = vunpack.c.l.b16 %v313
    %v1142 = vunpack.c.h.b16 %v313
    %v1143 = vunpack.c.l.b16 %v314
    %v1144 = vunpack.c.h.b16 %v314
    %v1145 = vunpack.c.l.b16 %v315
    %v1146 = vunpack.c.h.b16 %v315
    %v1147 = vunpack.c.l.b16 %v316
    %v1148 = vunpack.c.h.b16 %v316
    %v1149 = vunpack.c.l.b16 %v317
    %v1150 = vunpack.c.h.b16 %v317
    %v1151 = vunpack.c.l.b16 %v318
    %v1152 = vunpack.c.h.b16 %v318
    %v1153 = vunpack.c.l.b16 %v319
    %v1154 = vunpack.c.h.b16 %v319
    %v1155 = vunpack.c.l.b16 %v320
    %v1156 = vunpack.c.h.b16 %v320
    %v1157 = vunpack.c.l.b16 %v321
    %v1158 = vunpack.c.h.b16 %v321
    %v1159 = vunpack.c.l.b16 %v322
    %v1160 = vunpack.c.h.b16 %v322
    %v1161 = vunpack.c.l.b16 %v323
    %v1162 = vunpack.c.h.b16 %v323
    %v1163 = vunpack.c.l.b16 %v324
    %v1164 = vunpack.c.h.b16 %v324
    %v1165 = vunpack.c.l.b16 %v325
    %v1166 = vunpack.c.h.b16 %v325
    %v1167 = vunpack.c.l.b16 %v326
    %v1168 = vunpack.c.h.b16 %v326
    %v1169 = vunpack.c.l.b16 %v327
    %v1170 = vunpack.c.h.b16 %v327
    %v1171 = vunpack.c.l.b16 %v328
    %v1172 = vunpack.c.h.b16 %v328
    %v1173 = vunpack.c.l.b16 %v329
    %v1174 = vunpack.c.h.b16 %v329
    %v1175 = vunpack.c.l.b16 %v330
    %v1176 = vunpack.c.h.b16 %v330
    %v1177 = vunpack.c.l.b16 %v331
    %v1178 = vunpack.c.h.b16 %v331
    %v1179 = vunpack.c.l.b16 %v332
    %v1180 = vunpack.c.h.b16 %v332
    %v1181 = vunpack.c.l.b16 %v333
    %v1182 = vunpack.c.h.b16 %v333
    %v1183 = vunpack.c.l.b16 %v334
    %v1184 = vunpack.c.h.b16 %v334
    %v1185 = vunpack.c.l.b16 %v335
    %v1186 = vunpack.c.h.b16 %v335
    %v1187 = vunpack.c.l.b16 %v336
    %v1188 = vunpack.c.h.b16 %v336
    %v1189 = vunpack.c.l.b16 %v337
    %v1190 = vunpack.c.h.b16 %v337
    %v1191 = vunpack.c.l.b16 %v338
    %v1192 = vunpack.c.h.b16 %v338
    %v1193 = vunpack.c.l.b16 %v339
    %v1194 = vunpack.c.h.b16 %v339
    %v1195 = vunpack.c.l.b16 %v340
    %v1196 = vunpack.c.h.b16 %v340
    %v1197 = vunpack.c.l.b16 %v341
    %v1198 = vunpack.c.h.b16 %v341
    %v1199 = vunpack.c.l.b16 %v342
    %v1200 = vunpack.c.h.b16 %v342
    %v1201 = vunpack.c.l.b16 %v343
    %v1202 = vunpack.c.h.b16 %v343
    %v1203 = vunpack.c.l.b16 %v344
    %v1204 = vunpack.c.h.b16 %v344
    %v1205 = vunpack.c.l.b16 %v345
    %v1206 = vunpack.c.h.b16 %v345
    %v1207 = vunpack.c.l.b16 %v346
    %v1208 = vunpack.c.h.b16 %v346
    %v1209 = vunpack.c.l.b16 %v347
    %v1210 = vunpack.c.h.b16 %v347
    %v1211 = vunpack.c.l.b16 %v348
    %v1212 = vunpack.c.h.b16 %v348
    %v1213 = vunpack.c.l.b16 %v349
    %v1214 = vunpack.c.h.b16 %v349
    %v1215 = vunpack.c.l.b16 %v350
    %v1216 = vunpack.c.h.b16 %v350
    %v1217 = vunpack.c.l.b16 %v351
    %v1218 = vunpack.c.h.b16 %v351
    %v1219 = vunpack.c.l.b16 %v352
    %v1220 = vunpack.c.h.b16 %v352
    %v1221 = vunpack.c.l.b16 %v353
    %v1222 = vunpack.c.h.b16 %v353
    %v1223 = vunpack.c.l.b16 %v354
    %v1224 = vunpack.c.h.b16 %v354
    %v1225 = vunpack.c.l.b16 %v355
    %v1226 = vunpack.c.h.b16 %v355
    %v1227 = vunpack.c.l.b16 %v356
    %v1228 = vunpack.c.h.b16 %v356
    %v1229 = vunpack.c.l.b16 %v357
    %v1230 = vunpack.c.h.b16 %v357
    %v1231 = vunpack.c.l.b16 %v358
    %v1232 = vunpack.c.h.b16 %v358
    %v1233 = vunpack.c.l.b16 %v359
    %v1234 = vunpack.c.h.b16 %v359
    %v1235 = vunpack.c.l.b16 %v360
    %v1236 = vunpack.c.h.b16 %v360
    %v1237 = vunpack.c.l.b16 %v361
    %v1238 = vunpack.c.h.b16 %v361
    %v1239 = vunpack.c.l.b16 %v362
    %v1240 = vunpack.c.h.b16 %v362
    %v1241 = vunpack.c.l.b16 %v363
    %v1242 = vunpack.c.h.b16 %v363
    %v1243 = vunpack.c.l.b16 %v364
    %v1244 = vunpack.c.h.b16 %v364
    %v1245 = vunpack.c.l.b16 %v365
    %v1246 = vunpack.c.h.b16 %v365
    %v1247 = vunpack.c.l.b16 %v366
    %v1248 = vunpack.c.h.b16 %v366
    %v1249 = vunpack.c.l.b16 %v367
    %v1250 = vunpack.c.h.b16 %v367
    %v1251 = vunpack.c.l.b16 %v368
    %v1252 = vunpack.c.h.b16 %v368
    %v1253 = vunpack.c.l.b16 %v369
    %v1254 = vunpack.c.h.b16 %v369
    %v1255 = vunpack.c.l.b16 %v370
    %v1256 = vunpack.c.h.b16 %v370
    %v1257 = vunpack.c.l.b16 %v371
    %v1258 = vunpack.c.h.b16 %v371
    %v1259 = vunpack.c.l.b16 %v372
    %v1260 = vunpack.c.h.b16 %v372
    %v1261 = vunpack.c.l.b16 %v373
    %v1262 = vunpack.c.h.b16 %v373
    %v1263 = vunpack.c.l.b16 %v374
    %v1264 = vunpack.c.h.b16 %v374
    %v1265 = vunpack.c.l.b16 %v375
    %v1266 = vunpack.c.h.b16 %v375
    %v1267 = vunpack.c.l.b16 %v376
    %v1268 = vunpack.c.h.b16 %v376
    %v1269 = vunpack.c.l.b16 %v377
    %v1270 = vunpack.c.h.b16 %v377
    %v1271 = vunpack.c.l.b16 %v378
    %v1272 = vunpack.c.h.b16 %v378
    %v1273 = vunpack.c.l.b16 %v379
    %v1274 = vunpack.c.h.b16 %v379
    %v1275 = vunpack.c.l.b16 %v380
    %v1276 = vunpack.c.h.b16 %v380
    %v1277 = vunpack.c.l.b16 %v381
    %v1278 = vunpack.c.h.b16 %v381
    %v1279 = vunpack.c.l.b16 %v382
    %v1280 = vunpack.c.h.b16 %v382
    %v1281 = vunpack.c.l.b16 %v383
    %v1282 = vunpack.c.h.b16 %v383
    %v1283 = vunpack.c.l.b16 %v384
    %v1284 = vunpack.c.h.b16 %v384
    %v1285 = vunpack.c.l.b16 %v385
    %v1286 = vunpack.c.h.b16 %v385
    %v1287 = vunpack.c.l.b16 %v386
    %v1288 = vunpack.c.h.b16 %v386
    %v1289 = vunpack.c.l.b16 %v387
    %v1290 = vunpack.c.h.b16 %v387
    %v1291 = vunpack.c.l.b16 %v388
    %v1292 = vunpack.c.h.b16 %v388
    %v1293 = vunpack.c.l.b16 %v389
    %v1294 = vunpack.c.h.b16 %v389
    %v1295 = vunpack.c.l.b16 %v390
    %v1296 = vunpack.c.h.b16 %v390
    %v1297 = vunpack.c.l.b16 %v391
    %v1298 = vunpack.c.h.b16 %v391
    %v1299 = vunpack.c.l.b16 %v392
    %v1300 = vunpack.c.h.b16 %v392
    %v1301 = vunpack.c.l.b16 %v393
    %v1302 = vunpack.c.h.b16 %v393
    %v1303 = vunpack.c.l.b16 %v394
    %v1304 = vunpack.c.h.b16 %v394
    %v1305 = vunpack.c.l.b16 %v395
    %v1306 = vunpack.c.h.b16 %v395
    %v1307 = vunpack.c.l.b16 %v396
    %v1308 = vunpack.c.h.b16 %v396
    %v1309 = vunpack.c.l.b16 %v397
    %v1310 = vunpack.c.h.b16 %v397
    %v1311 = vunpack.c.l.b16 %v398
    %v1312 = vunpack.c.h.b16 %v398
    %v1313 = vunpack.c.l.b16 %v399
    %v1314 = vunpack.c.h.b16 %v399
    %v1315 = vunpack.c.l.b16 %v400
    %v1316 = vunpack.c.h.b16 %v400
    %v1317 = vunpack.c.l.b16 %v401
    %v1318 = vunpack.c.h.b16 %v401
    %v1319 = vunpack.c.l.b16 %v402
    %v1320 = vunpack.c.h.b16 %v402
    %v1321 = vunpack.c.l.b16 %v403
    %v1322 = vunpack.c.h.b16 %v403
    %v1323 = vunpack.c.l.b16 %v404
    %v1324 = vunpack.c.h.b16 %v404
    %v1325 = vunpack.c.l.b16 %v405
    %v1326 = vunpack.c.h.b16 %v405
    %v1327 = vunpack.c.l.b16 %v406
    %v1328 = vunpack.c.h.b16 %v406
    %v1329 = vunpack.c.l.b16 %v407
    %v1330 = vunpack.c.h.b16 %v407
    %v1331 = vunpack.c.l.b16 %v408
    %v1332 = vunpack.c.h.b16 %v408
    %v1333 = vunpack.c.l.b16 %v409
    %v1334 = vunpack.c.h.b16 %v409
    %v1335 = vunpack.c.l.b16 %v410
    %v1336 = vunpack.c.h.b16 %v410
    %v1337 = vunpack.c.l.b16 %v411
    %v1338 = vunpack.c.h.b16 %v411
    %v1339 = vunpack.c.l.b16 %v412
    %v1340 = vunpack.c.h.b16 %v412
    %v1341 = vunpack.c.l.b16 %v413
    %v1342 = vunpack.c.h.b16 %v413
    %v1343 = vunpack.c.l.b16 %v414
    %v1344 = vunpack.c.h.b16 %v414
    %v1345 = vunpack.c.l.b16 %v415
    %v1346 = vunpack.c.h.b16 %v415
    %v1347 = vunpack.c.l.b16 %v416
    %v1348 = vunpack.c.h.b16 %v416
    %v1349 = vunpack.c.l.b16 %v417
    %v1350 = vunpack.c.h.b16 %v417
    %v1351 = vunpack.c.l.b16 %v418
    %v1352 = vunpack.c.h.b16 %v418
    %v1353 = vunpack.c.l.b16 %v419
    %v1354 = vunpack.c.h.b16 %v419
    %v1355 = vunpack.c.l.b16 %v420
    %v1356 = vunpack.c.h.b16 %v420
    %v1357 = vunpack.c.l.b16 %v421
    %v1358 = vunpack.c.h.b16 %v421
    %v1359 = vunpack.c.l.b16 %v422
    %v1360 = vunpack.c.h.b16 %v422
    %v1361 = vunpack.c.l.b16 %v423
    %v1362 = vunpack.c.h.b16 %v423
    %v1363 = vunpack.c.l.b16 %v424
    %v1364 = vunpack.c.h.b16 %v424
    %v1365 = vunpack.c.l.b16 %v425
    %v1366 = vunpack.c.h.b16 %v425
    %v1367 = vunpack.c.l.b16 %v426
    %v1368 = vunpack.c.h.b16 %v426
    %v1369 = vunpack.c.l.b16 %v427
    %v1370 = vunpack.c.h.b16 %v427
    %v1371 = vunpack.c.l.b16 %v428
    %v1372 = vunpack.c.h.b16 %v428
    %v1373 = vunpack.c.l.b16 %v429
    %v1374 = vunpack.c.h.b16 %v429
    %v1375 = vunpack.c.l.b16 %v430
    %v1376 = vunpack.c.h.b16 %v430
    %v1377 = vunpack.c.l.b16 %v431
    %v1378 = vunpack.c.h.b16 %v431
    %v1379 = vunpack.c.l.b16 %v432
    %v1380 = vunpack.c.h.b16 %v432
    %v1381 = vunpack.c.l.b16 %v433
    %v1382 = vunpack.c.h.b16 %v433
    %v1383 = vunpack.c.l.b16 %v434
    %v1384 = vunpack.c.h.b16 %v434
    %v1385 = vpack.c.b16 %v877, %v873
    %v1386 = vpack.c.b16 %v878, %v874
    %v1387 = vpack.c.b16 %v879, %v875
    %v1388 = vpack.c.b16 %v880, %v876
    %v1389 = vpack.c.b16 %v885, %v881
    %v1390 = vpack.c.b16 %v886, %v882
    %v1391 = vpack.c.b16 %v887, %v883
    %v1392 = vpack.c.b16 %v888, %v884
    %v1393 = vpack.c.b16 %v893, %v889
    %v1394 = vpack.c.b16 %v894, %v890
    %v1395 = vpack.c.b16 %v895, %v891
    %v1396 = vpack.c.b16 %v896, %v892
    %v1397 = vpack.c.b16 %v901, %v897
    %v1398 = vpack.c.b16 %v902, %v898
    %v1399 = vpack.c.b16 %v903, %v899
    %v1400 = vpack.c.b16 %v904, %v900
    %v1401 = vpack.c.b16 %v909, %v905
    %v1402 = vpack.c.b16 %v910, %v906
    %v1403 = vpack.c.b16 %v911, %v907
    %v1404 = vpack.c.b16 %v912, %v908
    %v1405 = vpack.c.b16 %v917, %v913
    %v1406 = vpack.c.b16 %v918, %v914
    %v1407 = vpack.c.b16 %v919, %v915
    %v1408 = vpack.c.b16 %v920, %v916
    %v1409 = vpack.c.b16 %v925, %v921
    %v1410 = vpack.c.b16 %v926, %v922
    %v1411 = vpack.c.b16 %v927, %v923
    %v1412 = vpack.c.b16 %v928, %v924
    %v1413 = vpack.c.b16 %v933, %v929
    %v1414 = vpack.c.b16 %v934, %v930
    %v1415 = vpack.c.b16 %v935, %v931
    %v1416 = vpack.c.b16 %v936, %v932
    %v1417 = vpack.c.b16 %v941, %v937
    %v1418 = vpack.c.b16 %v942, %v938
    %v1419 = vpack.c.b16 %v943, %v939
    %v1420 = vpack.c.b16 %v944, %v940
    %v1421 = vpack.c.b16 %v949, %v945
    %v1422 = vpack.c.b16 %v950, %v946
    %v1423 = vpack.c.b16 %v951, %v947
    %v1424 = vpack.c.b16 %v952, %v948
    %v1425 = vpack.c.b16 %v957, %v953
    %v1426 = vpack.c.b16 %v958, %v954
    %v1427 = vpack.c.b16 %v959, %v955
    %v1428 = vpack.c.b16 %v960, %v956
    %v1429 = vpack.c.b16 %v965, %v961
    %v1430 = vpack.c.b16 %v966, %v962
    %v1431 = vpack.c.b16 %v967, %v963
    %v1432 = vpack.c.b16 %v968, %v964
    %v1433 = vpack.c.b16 %v973, %v969
    %v1434 = vpack.c.b16 %v974, %v970
    %v1435 = vpack.c.b16 %v975, %v971
    %v1436 = vpack.c.b16 %v976, %v972
    %v1437 = vpack.c.b16 %v981, %v977
    %v1438 = vpack.c.b16 %v982, %v978
    %v1439 = vpack.c.b16 %v983, %v979
    %v1440 = vpack.c.b16 %v984, %v980
    %v1441 = vpack.c.b16 %v989, %v985
    %v1442 = vpack.c.b16 %v990, %v986
    %v1443 = vpack.c.b16 %v991, %v987
    %v1444 = vpack.c.b16 %v992, %v988
    %v1445 = vpack.c.b16 %v997, %v993
    %v1446 = vpack.c.b16 %v998, %v994
    %v1447 = vpack.c.b16 %v999, %v995
    %v1448 = vpack.c.b16 %v1000, %v996
    %v1449 = vpack.c.b16 %v1005, %v1001
    %v1450 = vpack.c.b16 %v1006, %v1002
    %v1451 = vpack.c.b16 %v1007, %v1003
    %v1452 = vpack.c.b16 %v1008, %v1004
    %v1453 = vpack.c.b16 %v1013, %v1009
    %v1454 = vpack.c.b16 %v1014, %v1010
    %v1455 = vpack.c.b16 %v1015, %v1011
    %v1456 = vpack.c.b16 %v1016, %v1012
    %v1457 = vpack.c.b16 %v1021, %v1017
    %v1458 = vpack.c.b16 %v1022, %v1018
    %v1459 = vpack.c.b16 %v1023, %v1019
    %v1460 = vpack.c.b16 %v1024, %v1020
    %v1461 = vpack.c.b16 %v1029, %v1025
    %v1462 = vpack.c.b16 %v1030, %v1026
    %v1463 = vpack.c.b16 %v1031, %v1027
    %v1464 = vpack.c.b16 %v1032, %v1028
    %v1465 = vpack.c.b16 %v1037, %v1033
    %v1466 = vpack.c.b16 %v1038, %v1034
    %v1467 = vpack.c.b16 %v1039, %v1035
    %v1468 = vpack.c.b16 %v1040, %v1036
    %v1469 = vpack.c.b16 %v1045, %v1041
    %v1470 = vpack.c.b16 %v1046, %v1042
    %v1471 = vpack.c.b16 %v1047, %v1043
    %v1472 = vpack.c.b16 %v1048, %v1044
    %v1473 = vpack.c.b16 %v1053, %v1049
    %v1474 = vpack.c.b16 %v1054, %v1050
    %v1475 = vpack.c.b16 %v1055, %v1051
    %v1476 = vpack.c.b16 %v1056, %v1052
    %v1477 = vpack.c.b16 %v1061, %v1057
    %v1478 = vpack.c.b16 %v1062, %v1058
    %v1479 = vpack.c.b16 %v1063, %v1059
    %v1480 = vpack.c.b16 %v1064, %v1060
    %v1481 = vpack.c.b16 %v1069, %v1065
    %v1482 = vpack.c.b16 %v1070, %v1066
    %v1483 = vpack.c.b16 %v1071, %v1067
    %v1484 = vpack.c.b16 %v1072, %v1068
    %v1485 = vpack.c.b16 %v1077, %v1073
    %v1486 = vpack.c.b16 %v1078, %v1074
    %v1487 = vpack.c.b16 %v1079, %v1075
    %v1488 = vpack.c.b16 %v1080, %v1076
    %v1489 = vpack.c.b16 %v1085, %v1081
    %v1490 = vpack.c.b16 %v1086, %v1082
    %v1491 = vpack.c.b16 %v1087, %v1083
    %v1492 = vpack.c.b16 %v1088, %v1084
    %v1493 = vpack.c.b16 %v1093, %v1089
    %v1494 = vpack.c.b16 %v1094, %v1090
    %v1495 = vpack.c.b16 %v1095, %v1091
    %v1496 = vpack.c.b16 %v1096, %v1092
    %v1497 = vpack.c.b16 %v1101, %v1097
    %v1498 = vpack.c.b16 %v1102, %v1098
    %v1499 = vpack.c.b16 %v1103, %v1099
    %v1500 = vpack.c.b16 %v1104, %v1100
    %v1501 = vpack.c.b16 %v1109, %v1105
    %v1502 = vpack.c.b16 %v1110, %v1106
    %v1503 = vpack.c.b16 %v1111, %v1107
    %v1504 = vpack.c.b16 %v1112, %v1108
    %v1505 = vpack.c.b16 %v1117, %v1113
    %v1506 = vpack.c.b16 %v1118, %v1114
    %v1507 = vpack.c.b16 %v1119, %v1115
    %v1508 = vpack.c.b16 %v1120, %v1116
    %v1509 = vpack.c.b16 %v1125, %v1121
    %v1510 = vpack.c.b16 %v1126, %v1122
    %v1511 = vpack.c.b16 %v1127, %v1123
    %v1512 = vpack.c.b16 %v1128, %v1124
    %v1513 = vpack.c.b16 %v1133, %v1129
    %v1514 = vpack.c.b16 %v1134, %v1130
    %v1515 = vpack.c.b16 %v1135, %v1131
    %v1516 = vpack.c.b16 %v1136, %v1132
    %v1517 = vpack.c.b16 %v1141, %v1137
    %v1518 = vpack.c.b16 %v1142, %v1138
    %v1519 = vpack.c.b16 %v1143, %v1139
    %v1520 = vpack.c.b16 %v1144, %v1140
    %v1521 = vpack.c.b16 %v1149, %v1145
    %v1522 = vpack.c.b16 %v1150, %v1146
    %v1523 = vpack.c.b16 %v1151, %v1147
    %v1524 = vpack.c.b16 %v1152, %v1148
    %v1525 = vpack.c.b16 %v1157, %v1153
    %v1526 = vpack.c.b16 %v1158, %v1154
    %v1527 = vpack.c.b16 %v1159, %v1155
    %v1528 = vpack.c.b16 %v1160, %v1156
    %v1529 = vpack.c.b16 %v1165, %v1161
    %v1530 = vpack.c.b16 %v1166, %v1162
    %v1531 = vpack.c.b16 %v1167, %v1163
    %v1532 = vpack.c.b16 %v1168, %v1164
    %v1533 = vpack.c.b16 %v1173, %v1169
    %v1534 = vpack.c.b16 %v1174, %v1170
    %v1535 = vpack.c.b16 %v1175, %v1171
    %v1536 = vpack.c.b16 %v1176, %v1172
    %v1537 = vpack.c.b16 %v1181, %v1177
    %v1538 = vpack.c.b16 %v1182, %v1178
    %v1539 = vpack.c.b16 %v1183, %v1179
    %v1540 = vpack.c.b16 %v1184, %v1180
    %v1541 = vpack.c.b16 %v1189, %v1185
    %v1542 = vpack.c.b16 %v1190, %v1186
    %v1543 = vpack.c.b16 %v1191, %v1187
    %v1544 = vpack.c.b16 %v1192, %v1188
    %v1545 = vpack.c.b16 %v1197, %v1193
    %v1546 = vpack.c.b16 %v1198, %v1194
    %v1547 = vpack.c.b16 %v1199, %v1195
    %v1548 = vpack.c.b16 %v1200, %v1196
    %v1549 = vpack.c.b16 %v1205, %v1201
    %v1550 = vpack.c.b16 %v1206, %v1202
    %v1551 = vpack.c.b16 %v1207, %v1203
    %v1552 = vpack.c.b16 %v1208, %v1204
    %v1553 = vpack.c.b16 %v1213, %v1209
    %v1554 = vpack.c.b16 %v1214, %v1210
    %v1555 = vpack.c.b16 %v1215, %v1211
    %v1556 = vpack.c.b16 %v1216, %v1212
    %v1557 = vpack.c.b16 %v1221, %v1217
    %v1558 = vpack.c.b16 %v1222, %v1218
    %v1559 = vpack.c.b16 %v1223, %v1219
    %v1560 = vpack.c.b16 %v1224, %v1220
    %v1561 = vpack.c.b16 %v1229, %v1225
    %v1562 = vpack.c.b16 %v1230, %v1226
    %v1563 = vpack.c.b16 %v1231, %v1227
    %v1564 = vpack.c.b16 %v1232, %v1228
    %v1565 = vpack.c.b16 %v1237, %v1233
    %v1566 = vpack.c.b16 %v1238, %v1234
    %v1567 = vpack.c.b16 %v1239, %v1235
    %v1568 = vpack.c.b16 %v1240, %v1236
    %v1569 = vpack.c.b16 %v1245, %v1241
    %v1570 = vpack.c.b16 %v1246, %v1242
    %v1571 = vpack.c.b16 %v1247, %v1243
    %v1572 = vpack.c.b16 %v1248, %v1244
    %v1573 = vpack.c.b16 %v1253, %v1249
    %v1574 = vpack.c.b16 %v1254, %v1250
    %v1575 = vpack.c.b16 %v1255, %v1251
    %v1576 = vpack.c.b16 %v1256, %v1252
    %v1577 = vpack.c.b16 %v1261, %v1257
    %v1578 = vpack.c.b16 %v1262, %v1258
    %v1579 = vpack.c.b16 %v1263, %v1259
    %v1580 = vpack.c.b16 %v1264, %v1260
    %v1581 = vpack.c.b16 %v1269, %v1265
    %v1582 = vpack.c.b16 %v1270, %v1266
    %v1583 = vpack.c.b16 %v1271, %v1267
    %v1584 = vpack.c.b16 %v1272, %v1268
    %v1585 = vpack.c.b16 %v1277, %v1273
    %v1586 = vpack.c.b16 %v1278, %v1274
    %v1587 = vpack.c.b16 %v1279, %v1275
    %v1588 = vpack.c.b16 %v1280, %v1276
    %v1589 = vpack.c.b16 %v1285, %v1281
    %v1590 = vpack.c.b16 %v1286, %v1282
    %v1591 = vpack.c.b16 %v1287, %v1283
    %v1592 = vpack.c.b16 %v1288, %v1284
    %v1593 = vpack.c.b16 %v1293, %v1289
    %v1594 = vpack.c.b16 %v1294, %v1290
    %v1595 = vpack.c.b16 %v1295, %v1291
    %v1596 = vpack.c.b16 %v1296, %v1292
    %v1597 = vpack.c.b16 %v1301, %v1297
    %v1598 = vpack.c.b16 %v1302, %v1298
    %v1599 = vpack.c.b16 %v1303, %v1299
    %v1600 = vpack.c.b16 %v1304, %v1300
    %v1601 = vpack.c.b16 %v1309, %v1305
    %v1602 = vpack.c.b16 %v1310, %v1306
    %v1603 = vpack.c.b16 %v1311, %v1307
    %v1604 = vpack.c.b16 %v1312, %v1308
    %v1605 = vpack.c.b16 %v1317, %v1313
    %v1606 = vpack.c.b16 %v1318, %v1314
    %v1607 = vpack.c.b16 %v1319, %v1315
    %v1608 = vpack.c.b16 %v1320, %v1316
    %v1609 = vpack.c.b16 %v1325, %v1321
    %v1610 = vpack.c.b16 %v1326, %v1322
    %v1611 = vpack.c.b16 %v1327, %v1323
    %v1612 = vpack.c.b16 %v1328, %v1324
    %v1613 = vpack.c.b16 %v1333, %v1329
    %v1614 = vpack.c.b16 %v1334, %v1330
    %v1615 = vpack.c.b16 %v1335, %v1331
    %v1616 = vpack.c.b16 %v1336, %v1332
    %v1617 = vpack.c.b16 %v1341, %v1337
    %v1618 = vpack.c.b16 %v1342, %v1338
    %v1619 = vpack.c.b16 %v1343, %v1339
    %v1620 = vpack.c.b16 %v1344, %v1340
    %v1621 = vpack.c.b16 %v1349, %v1345
    %v1622 = vpack.c.b16 %v1350, %v1346
    %v1623 = vpack.c.b16 %v1351, %v1347
    %v1624 = vpack.c.b16 %v1352, %v1348
    %v1625 = vpack.c.b16 %v1357, %v1353
    %v1626 = vpack.c.b16 %v1358, %v1354
    %v1627 = vpack.c.b16 %v1359, %v1355
    %v1628 = vpack.c.b16 %v1360, %v1356
    %v1629 = vpack.c.b16 %v1365, %v1361
    %v1630 = vpack.c.b16 %v1366, %v1362
    %v1631 = vpack.c.b16 %v1367, %v1363
    %v1632 = vpack.c.b16 %v1368, %v1364
    %v1633 = vpack.c.b16 %v1373, %v1369
    %v1634 = vpack.c.b16 %v1374, %v1370
    %v1635 = vpack.c.b16 %v1375, %v1371
    %v1636 = vpack.c.b16 %v1376, %v1372
    %v1637 = vpack.c.b16 %v1381, %v1377
    %v1638 = vpack.c.b16 %v1382, %v1378
    %v1639 = vpack.c.b16 %v1383, %v1379
    %v1640 = vpack.c.b16 %v1384, %v1380
    %1897 = vmatprep.subr.bf16.mxu0 %v1414
    %1898 = vmatpush1.bf16.msra.mxu0 %v1413
    %1899 = vmatprep.subr.bf16.mxu0 %v1410
    %1900 = vmatpush1.bf16.msra.mxu0 %v1409
    %1901 = vmatprep.subr.bf16.mxu0 %v1406
    %1902 = vmatpush1.bf16.msra.mxu0 %v1405
    %1903 = vmatprep.subr.bf16.mxu0 %v1402
    %1904 = vmatpush1.bf16.msra.mxu0 %v1401
    %1905 = vmatprep.subr.bf16.mxu0 %v1398
    %1906 = vmatpush1.bf16.msra.mxu0 %v1397
    %1907 = vmatprep.subr.bf16.mxu0 %v1394
    %1908 = vmatpush1.bf16.msra.mxu0 %v1393
    %1909 = vmatprep.subr.bf16.mxu0 %v1390
    %1910 = vmatpush1.bf16.msra.mxu0 %v1389
    %1911 = vmatprep.subr.bf16.mxu0 %v1386
    %1912 = vmatpush1.bf16.msra.mxu0 %v1385
    %1913 = vmatprep.subr.bf16.mxu0 %v1446
    %1914 = vmatpush2.bf16.msra.mxu0 %v1445
    %1915 = vmatprep.subr.bf16.mxu0 %v1442
    %1916 = vmatpush2.bf16.msra.mxu0 %v1441
    %1917 = vmatprep.subr.bf16.mxu0 %v1438
    %1918 = vmatpush2.bf16.msra.mxu0 %v1437
    %1919 = vmatprep.subr.bf16.mxu0 %v1434
    %1920 = vmatpush2.bf16.msra.mxu0 %v1433
    %1921 = vmatprep.subr.bf16.mxu0 %v1430
    %1922 = vmatpush2.bf16.msra.mxu0 %v1429
    %1923 = vmatprep.subr.bf16.mxu0 %v1426
    %1924 = vmatpush2.bf16.msra.mxu0 %v1425
    %1925 = vmatprep.subr.bf16.mxu0 %v1422
    %1926 = vmatpush2.bf16.msra.mxu0 %v1421
    %1927 = vmatprep.subr.bf16.mxu0 %v1418
    %1928 = vmatpush2.bf16.msra.mxu0 %v1417
    %1929 = vmatprep.mubr.bf16.mxu0 %v554
    %1930 = vmatmul.mubr.bf16.gmra.mxu0 %v553
    %v1931 = vpop.f32.mrf.mxu0
    %v1932 = vadd.f32 %v440, %v1931
    %v1933 = vpop.f32.mrf.mxu0
    %v1934 = vadd.f32 %v444, %v1933
    %v1935 = vpop.f32.mrf.mxu0
    %v1936 = vadd.f32 %v440, %v1935
    %v1937 = vpop.f32.mrf.mxu0
    %v1938 = vadd.f32 %v444, %v1937
    %1939 = vmatprep.mubr.bf16.mxu0 %v562
    %1940 = vmatmul.mubr.bf16.gmra.mxu0 %v561
    %v1941 = vpop.f32.mrf.mxu0
    %v1942 = vadd.f32 %v440, %v1941
    %v1943 = vpop.f32.mrf.mxu0
    %v1944 = vadd.f32 %v444, %v1943
    %v1945 = vpop.f32.mrf.mxu0
    %v1946 = vadd.f32 %v440, %v1945
    %v1947 = vpop.f32.mrf.mxu0
    %v1948 = vadd.f32 %v444, %v1947
    %1949 = vmatprep.mubr.bf16.mxu0 %v570
    %1950 = vmatmul.mubr.bf16.gmra.mxu0 %v569
    %v1951 = vpop.f32.mrf.mxu0
    %v1952 = vadd.f32 %v440, %v1951
    %v1953 = vpop.f32.mrf.mxu0
    %v1954 = vadd.f32 %v444, %v1953
    %v1955 = vpop.f32.mrf.mxu0
    %v1956 = vadd.f32 %v440, %v1955
    %v1957 = vpop.f32.mrf.mxu0
    %v1958 = vadd.f32 %v444, %v1957
    %1959 = vmatprep.mubr.bf16.mxu0 %v578
    %1960 = vmatmul.mubr.bf16.gmra.mxu0 %v577
    %v1961 = vpop.f32.mrf.mxu0
    %v1962 = vadd.f32 %v440, %v1961
    %v1963 = vpop.f32.mrf.mxu0
    %v1964 = vadd.f32 %v444, %v1963
    %v1965 = vpop.f32.mrf.mxu0
    %v1966 = vadd.f32 %v440, %v1965
    %v1967 = vpop.f32.mrf.mxu0
    %v1968 = vadd.f32 %v444, %v1967
    %1969 = vdwg.mxu0
    %1970 = vmatprep.subr.bf16.mxu0 %v1478
    %1971 = vmatpush1.bf16.msra.mxu0 %v1477
    %1972 = vmatprep.subr.bf16.mxu0 %v1474
    %1973 = vmatpush1.bf16.msra.mxu0 %v1473
    %1974 = vmatprep.subr.bf16.mxu0 %v1470
    %1975 = vmatpush1.bf16.msra.mxu0 %v1469
    %1976 = vmatprep.subr.bf16.mxu0 %v1466
    %1977 = vmatpush1.bf16.msra.mxu0 %v1465
    %1978 = vmatprep.subr.bf16.mxu0 %v1462
    %1979 = vmatpush1.bf16.msra.mxu0 %v1461
    %1980 = vmatprep.subr.bf16.mxu0 %v1458
    %1981 = vmatpush1.bf16.msra.mxu0 %v1457
    %1982 = vmatprep.subr.bf16.mxu0 %v1454
    %1983 = vmatpush1.bf16.msra.mxu0 %v1453
    %1984 = vmatprep.subr.bf16.mxu0 %v1450
    %1985 = vmatpush1.bf16.msra.mxu0 %v1449
    %1986 = vmatprep.subr.bf16.mxu0 %v1510
    %1987 = vmatpush2.bf16.msra.mxu0 %v1509
    %1988 = vmatprep.subr.bf16.mxu0 %v1506
    %1989 = vmatpush2.bf16.msra.mxu0 %v1505
    %1990 = vmatprep.subr.bf16.mxu0 %v1502
    %1991 = vmatpush2.bf16.msra.mxu0 %v1501
    %1992 = vmatprep.subr.bf16.mxu0 %v1498
    %1993 = vmatpush2.bf16.msra.mxu0 %v1497
    %1994 = vmatprep.subr.bf16.mxu0 %v1494
    %1995 = vmatpush2.bf16.msra.mxu0 %v1493
    %1996 = vmatprep.subr.bf16.mxu0 %v1490
    %1997 = vmatpush2.bf16.msra.mxu0 %v1489
    %1998 = vmatprep.subr.bf16.mxu0 %v1486
    %1999 = vmatpush2.bf16.msra.mxu0 %v1485
    %2000 = vmatprep.subr.bf16.mxu0 %v1482
    %2001 = vmatpush2.bf16.msra.mxu0 %v1481
    %2002 = vmatprep.mubr.bf16.mxu0 %v556
    %2003 = vmatmul.mubr.bf16.gmra.mxu0 %v555
    %v2004 = vpop.f32.mrf.mxu0
    %v2005 = vadd.f32 %v1932, %v2004
    %v2006 = vpop.f32.mrf.mxu0
    %v2007 = vadd.f32 %v1934, %v2006
    %v2008 = vpop.f32.mrf.mxu0
    %v2009 = vadd.f32 %v1936, %v2008
    %v2010 = vpop.f32.mrf.mxu0
    %v2011 = vadd.f32 %v1938, %v2010
    %2012 = vmatprep.mubr.bf16.mxu0 %v564
    %2013 = vmatmul.mubr.bf16.gmra.mxu0 %v563
    %v2014 = vpop.f32.mrf.mxu0
    %v2015 = vadd.f32 %v1942, %v2014
    %v2016 = vpop.f32.mrf.mxu0
    %v2017 = vadd.f32 %v1944, %v2016
    %v2018 = vpop.f32.mrf.mxu0
    %v2019 = vadd.f32 %v1946, %v2018
    %v2020 = vpop.f32.mrf.mxu0
    %v2021 = vadd.f32 %v1948, %v2020
    %2022 = vmatprep.mubr.bf16.mxu0 %v572
    %2023 = vmatmul.mubr.bf16.gmra.mxu0 %v571
    %v2024 = vpop.f32.mrf.mxu0
    %v2025 = vadd.f32 %v1952, %v2024
    %v2026 = vpop.f32.mrf.mxu0
    %v2027 = vadd.f32 %v1954, %v2026
    %v2028 = vpop.f32.mrf.mxu0
    %v2029 = vadd.f32 %v1956, %v2028
    %v2030 = vpop.f32.mrf.mxu0
    %v2031 = vadd.f32 %v1958, %v2030
    %2032 = vmatprep.mubr.bf16.mxu0 %v580
    %2033 = vmatmul.mubr.bf16.gmra.mxu0 %v579
    %v2034 = vpop.f32.mrf.mxu0
    %v2035 = vadd.f32 %v1962, %v2034
    %v2036 = vpop.f32.mrf.mxu0
    %v2037 = vadd.f32 %v1964, %v2036
    %v2038 = vpop.f32.mrf.mxu0
    %v2039 = vadd.f32 %v1966, %v2038
    %v2040 = vpop.f32.mrf.mxu0
    %v2041 = vadd.f32 %v1968, %v2040
    %2042 = vdwg.mxu0
    %2043 = vmatprep.subr.bf16.mxu0 %v1542
    %2044 = vmatpush1.bf16.msra.mxu0 %v1541
    %2045 = vmatprep.subr.bf16.mxu0 %v1538
    %2046 = vmatpush1.bf16.msra.mxu0 %v1537
    %2047 = vmatprep.subr.bf16.mxu0 %v1534
    %2048 = vmatpush1.bf16.msra.mxu0 %v1533
    %2049 = vmatprep.subr.bf16.mxu0 %v1530
    %2050 = vmatpush1.bf16.msra.mxu0 %v1529
    %2051 = vmatprep.subr.bf16.mxu0 %v1526
    %2052 = vmatpush1.bf16.msra.mxu0 %v1525
    %2053 = vmatprep.subr.bf16.mxu0 %v1522
    %2054 = vmatpush1.bf16.msra.mxu0 %v1521
    %2055 = vmatprep.subr.bf16.mxu0 %v1518
    %2056 = vmatpush1.bf16.msra.mxu0 %v1517
    %2057 = vmatprep.subr.bf16.mxu0 %v1514
    %2058 = vmatpush1.bf16.msra.mxu0 %v1513
    %2059 = vmatprep.subr.bf16.mxu0 %v1574
    %2060 = vmatpush2.bf16.msra.mxu0 %v1573
    %2061 = vmatprep.subr.bf16.mxu0 %v1570
    %2062 = vmatpush2.bf16.msra.mxu0 %v1569
    %2063 = vmatprep.subr.bf16.mxu0 %v1566
    %2064 = vmatpush2.bf16.msra.mxu0 %v1565
    %2065 = vmatprep.subr.bf16.mxu0 %v1562
    %2066 = vmatpush2.bf16.msra.mxu0 %v1561
    %2067 = vmatprep.subr.bf16.mxu0 %v1558
    %2068 = vmatpush2.bf16.msra.mxu0 %v1557
    %2069 = vmatprep.subr.bf16.mxu0 %v1554
    %2070 = vmatpush2.bf16.msra.mxu0 %v1553
    %2071 = vmatprep.subr.bf16.mxu0 %v1550
    %2072 = vmatpush2.bf16.msra.mxu0 %v1549
    %2073 = vmatprep.subr.bf16.mxu0 %v1546
    %2074 = vmatpush2.bf16.msra.mxu0 %v1545
    %2075 = vmatprep.mubr.bf16.mxu0 %v558
    %2076 = vmatmul.mubr.bf16.gmra.mxu0 %v557
    %v2077 = vpop.f32.mrf.mxu0
    %v2078 = vadd.f32 %v2005, %v2077
    %v2079 = vpop.f32.mrf.mxu0
    %v2080 = vadd.f32 %v2007, %v2079
    %v2081 = vpop.f32.mrf.mxu0
    %v2082 = vadd.f32 %v2009, %v2081
    %v2083 = vpop.f32.mrf.mxu0
    %v2084 = vadd.f32 %v2011, %v2083
    %2085 = vmatprep.mubr.bf16.mxu0 %v566
    %2086 = vmatmul.mubr.bf16.gmra.mxu0 %v565
    %v2087 = vpop.f32.mrf.mxu0
    %v2088 = vadd.f32 %v2015, %v2087
    %v2089 = vpop.f32.mrf.mxu0
    %v2090 = vadd.f32 %v2017, %v2089
    %v2091 = vpop.f32.mrf.mxu0
    %v2092 = vadd.f32 %v2019, %v2091
    %v2093 = vpop.f32.mrf.mxu0
    %v2094 = vadd.f32 %v2021, %v2093
    %2095 = vmatprep.mubr.bf16.mxu0 %v574
    %2096 = vmatmul.mubr.bf16.gmra.mxu0 %v573
    %v2097 = vpop.f32.mrf.mxu0
    %v2098 = vadd.f32 %v2025, %v2097
    %v2099 = vpop.f32.mrf.mxu0
    %v2100 = vadd.f32 %v2027, %v2099
    %v2101 = vpop.f32.mrf.mxu0
    %v2102 = vadd.f32 %v2029, %v2101
    %v2103 = vpop.f32.mrf.mxu0
    %v2104 = vadd.f32 %v2031, %v2103
    %2105 = vmatprep.mubr.bf16.mxu0 %v582
    %2106 = vmatmul.mubr.bf16.gmra.mxu0 %v581
    %v2107 = vpop.f32.mrf.mxu0
    %v2108 = vadd.f32 %v2035, %v2107
    %v2109 = vpop.f32.mrf.mxu0
    %v2110 = vadd.f32 %v2037, %v2109
    %v2111 = vpop.f32.mrf.mxu0
    %v2112 = vadd.f32 %v2039, %v2111
    %v2113 = vpop.f32.mrf.mxu0
    %v2114 = vadd.f32 %v2041, %v2113
    %2115 = vdwg.mxu0
    %2116 = vmatprep.subr.bf16.mxu0 %v1606
    %2117 = vmatpush1.bf16.msra.mxu0 %v1605
    %2118 = vmatprep.subr.bf16.mxu0 %v1602
    %2119 = vmatpush1.bf16.msra.mxu0 %v1601
    %2120 = vmatprep.subr.bf16.mxu0 %v1598
    %2121 = vmatpush1.bf16.msra.mxu0 %v1597
    %2122 = vmatprep.subr.bf16.mxu0 %v1594
    %2123 = vmatpush1.bf16.msra.mxu0 %v1593
    %2124 = vmatprep.subr.bf16.mxu0 %v1590
    %2125 = vmatpush1.bf16.msra.mxu0 %v1589
    %2126 = vmatprep.subr.bf16.mxu0 %v1586
    %2127 = vmatpush1.bf16.msra.mxu0 %v1585
    %2128 = vmatprep.subr.bf16.mxu0 %v1582
    %2129 = vmatpush1.bf16.msra.mxu0 %v1581
    %2130 = vmatprep.subr.bf16.mxu0 %v1578
    %2131 = vmatpush1.bf16.msra.mxu0 %v1577
    %2132 = vmatprep.subr.bf16.mxu0 %v1638
    %2133 = vmatpush2.bf16.msra.mxu0 %v1637
    %2134 = vmatprep.subr.bf16.mxu0 %v1634
    %2135 = vmatpush2.bf16.msra.mxu0 %v1633
    %2136 = vmatprep.subr.bf16.mxu0 %v1630
    %2137 = vmatpush2.bf16.msra.mxu0 %v1629
    %2138 = vmatprep.subr.bf16.mxu0 %v1626
    %2139 = vmatpush2.bf16.msra.mxu0 %v1625
    %2140 = vmatprep.subr.bf16.mxu0 %v1622
    %2141 = vmatpush2.bf16.msra.mxu0 %v1621
    %2142 = vmatprep.subr.bf16.mxu0 %v1618
    %2143 = vmatpush2.bf16.msra.mxu0 %v1617
    %2144 = vmatprep.subr.bf16.mxu0 %v1614
    %2145 = vmatpush2.bf16.msra.mxu0 %v1613
    %2146 = vmatprep.subr.bf16.mxu0 %v1610
    %2147 = vmatpush2.bf16.msra.mxu0 %v1609
    %2148 = vmatprep.mubr.bf16.mxu0 %v560
    %2149 = vmatmul.mubr.bf16.gmra.mxu0 %v559
    %v2150 = vpop.f32.mrf.mxu0
    %v2151 = vadd.f32 %v2078, %v2150
    %v2152 = vpop.f32.mrf.mxu0
    %v2153 = vadd.f32 %v2080, %v2152
    %v2154 = vpop.f32.mrf.mxu0
    %v2155 = vadd.f32 %v2082, %v2154
    %v2156 = vpop.f32.mrf.mxu0
    %v2157 = vadd.f32 %v2084, %v2156
    %2158 = vmatprep.mubr.bf16.mxu0 %v568
    %2159 = vmatmul.mubr.bf16.gmra.mxu0 %v567
    %v2160 = vpop.f32.mrf.mxu0
    %v2161 = vadd.f32 %v2088, %v2160
    %v2162 = vpop.f32.mrf.mxu0
    %v2163 = vadd.f32 %v2090, %v2162
    %v2164 = vpop.f32.mrf.mxu0
    %v2165 = vadd.f32 %v2092, %v2164
    %v2166 = vpop.f32.mrf.mxu0
    %v2167 = vadd.f32 %v2094, %v2166
    %2168 = vmatprep.mubr.bf16.mxu0 %v576
    %2169 = vmatmul.mubr.bf16.gmra.mxu0 %v575
    %v2170 = vpop.f32.mrf.mxu0
    %v2171 = vadd.f32 %v2098, %v2170
    %v2172 = vpop.f32.mrf.mxu0
    %v2173 = vadd.f32 %v2100, %v2172
    %v2174 = vpop.f32.mrf.mxu0
    %v2175 = vadd.f32 %v2102, %v2174
    %v2176 = vpop.f32.mrf.mxu0
    %v2177 = vadd.f32 %v2104, %v2176
    %2178 = vmatprep.mubr.bf16.mxu0 %v584
    %2179 = vmatmul.mubr.bf16.gmra.mxu0 %v583
    %v2180 = vpop.f32.mrf.mxu0
    %v2181 = vadd.f32 %v2108, %v2180
    %v2182 = vpop.f32.mrf.mxu0
    %v2183 = vadd.f32 %v2110, %v2182
    %v2184 = vpop.f32.mrf.mxu0
    %v2185 = vadd.f32 %v2112, %v2184
    %v2186 = vpop.f32.mrf.mxu0
    %v2187 = vadd.f32 %v2114, %v2186
    %2188 = vdwg.mxu0
    %2189 = vmatprep.subr.bf16.mxu0 %v1416
    %2190 = vmatpush1.bf16.msra.mxu0 %v1415
    %2191 = vmatprep.subr.bf16.mxu0 %v1412
    %2192 = vmatpush1.bf16.msra.mxu0 %v1411
    %2193 = vmatprep.subr.bf16.mxu0 %v1408
    %2194 = vmatpush1.bf16.msra.mxu0 %v1407
    %2195 = vmatprep.subr.bf16.mxu0 %v1404
    %2196 = vmatpush1.bf16.msra.mxu0 %v1403
    %2197 = vmatprep.subr.bf16.mxu0 %v1400
    %2198 = vmatpush1.bf16.msra.mxu0 %v1399
    %2199 = vmatprep.subr.bf16.mxu0 %v1396
    %2200 = vmatpush1.bf16.msra.mxu0 %v1395
    %2201 = vmatprep.subr.bf16.mxu0 %v1392
    %2202 = vmatpush1.bf16.msra.mxu0 %v1391
    %2203 = vmatprep.subr.bf16.mxu0 %v1388
    %2204 = vmatpush1.bf16.msra.mxu0 %v1387
    %2205 = vmatprep.subr.bf16.mxu0 %v1448
    %2206 = vmatpush2.bf16.msra.mxu0 %v1447
    %2207 = vmatprep.subr.bf16.mxu0 %v1444
    %2208 = vmatpush2.bf16.msra.mxu0 %v1443
    %2209 = vmatprep.subr.bf16.mxu0 %v1440
    %2210 = vmatpush2.bf16.msra.mxu0 %v1439
    %2211 = vmatprep.subr.bf16.mxu0 %v1436
    %2212 = vmatpush2.bf16.msra.mxu0 %v1435
    %2213 = vmatprep.subr.bf16.mxu0 %v1432
    %2214 = vmatpush2.bf16.msra.mxu0 %v1431
    %2215 = vmatprep.subr.bf16.mxu0 %v1428
    %2216 = vmatpush2.bf16.msra.mxu0 %v1427
    %2217 = vmatprep.subr.bf16.mxu0 %v1424
    %2218 = vmatpush2.bf16.msra.mxu0 %v1423
    %2219 = vmatprep.subr.bf16.mxu0 %v1420
    %2220 = vmatpush2.bf16.msra.mxu0 %v1419
    %2221 = vmatprep.mubr.bf16.mxu0 %v554
    %2222 = vmatmul.mubr.bf16.gmra.mxu0 %v553
    %v2223 = vpop.f32.mrf.mxu0
    %v2224 = vadd.f32 %v448, %v2223
    %v2225 = vpop.f32.mrf.mxu0
    %v2226 = vadd.f32 %v452, %v2225
    %v2227 = vpop.f32.mrf.mxu0
    %v2228 = vadd.f32 %v448, %v2227
    %v2229 = vpop.f32.mrf.mxu0
    %v2230 = vadd.f32 %v452, %v2229
    %2231 = vmatprep.mubr.bf16.mxu0 %v562
    %2232 = vmatmul.mubr.bf16.gmra.mxu0 %v561
    %v2233 = vpop.f32.mrf.mxu0
    %v2234 = vadd.f32 %v448, %v2233
    %v2235 = vpop.f32.mrf.mxu0
    %v2236 = vadd.f32 %v452, %v2235
    %v2237 = vpop.f32.mrf.mxu0
    %v2238 = vadd.f32 %v448, %v2237
    %v2239 = vpop.f32.mrf.mxu0
    %v2240 = vadd.f32 %v452, %v2239
    %2241 = vmatprep.mubr.bf16.mxu0 %v570
    %2242 = vmatmul.mubr.bf16.gmra.mxu0 %v569
    %v2243 = vpop.f32.mrf.mxu0
    %v2244 = vadd.f32 %v448, %v2243
    %v2245 = vpop.f32.mrf.mxu0
    %v2246 = vadd.f32 %v452, %v2245
    %v2247 = vpop.f32.mrf.mxu0
    %v2248 = vadd.f32 %v448, %v2247
    %v2249 = vpop.f32.mrf.mxu0
    %v2250 = vadd.f32 %v452, %v2249
    %2251 = vmatprep.mubr.bf16.mxu0 %v578
    %2252 = vmatmul.mubr.bf16.gmra.mxu0 %v577
    %v2253 = vpop.f32.mrf.mxu0
    %v2254 = vadd.f32 %v448, %v2253
    %v2255 = vpop.f32.mrf.mxu0
    %v2256 = vadd.f32 %v452, %v2255
    %v2257 = vpop.f32.mrf.mxu0
    %v2258 = vadd.f32 %v448, %v2257
    %v2259 = vpop.f32.mrf.mxu0
    %v2260 = vadd.f32 %v452, %v2259
    %2261 = vdwg.mxu0
    %2262 = vmatprep.subr.bf16.mxu0 %v1480
    %2263 = vmatpush1.bf16.msra.mxu0 %v1479
    %2264 = vmatprep.subr.bf16.mxu0 %v1476
    %2265 = vmatpush1.bf16.msra.mxu0 %v1475
    %2266 = vmatprep.subr.bf16.mxu0 %v1472
    %2267 = vmatpush1.bf16.msra.mxu0 %v1471
    %2268 = vmatprep.subr.bf16.mxu0 %v1468
    %2269 = vmatpush1.bf16.msra.mxu0 %v1467
    %2270 = vmatprep.subr.bf16.mxu0 %v1464
    %2271 = vmatpush1.bf16.msra.mxu0 %v1463
    %2272 = vmatprep.subr.bf16.mxu0 %v1460
    %2273 = vmatpush1.bf16.msra.mxu0 %v1459
    %2274 = vmatprep.subr.bf16.mxu0 %v1456
    %2275 = vmatpush1.bf16.msra.mxu0 %v1455
    %2276 = vmatprep.subr.bf16.mxu0 %v1452
    %2277 = vmatpush1.bf16.msra.mxu0 %v1451
    %2278 = vmatprep.subr.bf16.mxu0 %v1512
    %2279 = vmatpush2.bf16.msra.mxu0 %v1511
    %2280 = vmatprep.subr.bf16.mxu0 %v1508
    %2281 = vmatpush2.bf16.msra.mxu0 %v1507
    %2282 = vmatprep.subr.bf16.mxu0 %v1504
    %2283 = vmatpush2.bf16.msra.mxu0 %v1503
    %2284 = vmatprep.subr.bf16.mxu0 %v1500
    %2285 = vmatpush2.bf16.msra.mxu0 %v1499
    %2286 = vmatprep.subr.bf16.mxu0 %v1496
    %2287 = vmatpush2.bf16.msra.mxu0 %v1495
    %2288 = vmatprep.subr.bf16.mxu0 %v1492
    %2289 = vmatpush2.bf16.msra.mxu0 %v1491
    %2290 = vmatprep.subr.bf16.mxu0 %v1488
    %2291 = vmatpush2.bf16.msra.mxu0 %v1487
    %2292 = vmatprep.subr.bf16.mxu0 %v1484
    %2293 = vmatpush2.bf16.msra.mxu0 %v1483
    %2294 = vmatprep.mubr.bf16.mxu0 %v556
    %2295 = vmatmul.mubr.bf16.gmra.mxu0 %v555
    %v2296 = vpop.f32.mrf.mxu0
    %v2297 = vadd.f32 %v2224, %v2296
    %v2298 = vpop.f32.mrf.mxu0
    %v2299 = vadd.f32 %v2226, %v2298
    %v2300 = vpop.f32.mrf.mxu0
    %v2301 = vadd.f32 %v2228, %v2300
    %v2302 = vpop.f32.mrf.mxu0
    %v2303 = vadd.f32 %v2230, %v2302
    %2304 = vmatprep.mubr.bf16.mxu0 %v564
    %2305 = vmatmul.mubr.bf16.gmra.mxu0 %v563
    %v2306 = vpop.f32.mrf.mxu0
    %v2307 = vadd.f32 %v2234, %v2306
    %v2308 = vpop.f32.mrf.mxu0
    %v2309 = vadd.f32 %v2236, %v2308
    %v2310 = vpop.f32.mrf.mxu0
    %v2311 = vadd.f32 %v2238, %v2310
    %v2312 = vpop.f32.mrf.mxu0
    %v2313 = vadd.f32 %v2240, %v2312
    %2314 = vmatprep.mubr.bf16.mxu0 %v572
    %2315 = vmatmul.mubr.bf16.gmra.mxu0 %v571
    %v2316 = vpop.f32.mrf.mxu0
    %v2317 = vadd.f32 %v2244, %v2316
    %v2318 = vpop.f32.mrf.mxu0
    %v2319 = vadd.f32 %v2246, %v2318
    %v2320 = vpop.f32.mrf.mxu0
    %v2321 = vadd.f32 %v2248, %v2320
    %v2322 = vpop.f32.mrf.mxu0
    %v2323 = vadd.f32 %v2250, %v2322
    %2324 = vmatprep.mubr.bf16.mxu0 %v580
    %2325 = vmatmul.mubr.bf16.gmra.mxu0 %v579
    %v2326 = vpop.f32.mrf.mxu0
    %v2327 = vadd.f32 %v2254, %v2326
    %v2328 = vpop.f32.mrf.mxu0
    %v2329 = vadd.f32 %v2256, %v2328
    %v2330 = vpop.f32.mrf.mxu0
    %v2331 = vadd.f32 %v2258, %v2330
    %v2332 = vpop.f32.mrf.mxu0
    %v2333 = vadd.f32 %v2260, %v2332
    %2334 = vdwg.mxu0
    %2335 = vmatprep.subr.bf16.mxu0 %v1544
    %2336 = vmatpush1.bf16.msra.mxu0 %v1543
    %2337 = vmatprep.subr.bf16.mxu0 %v1540
    %2338 = vmatpush1.bf16.msra.mxu0 %v1539
    %2339 = vmatprep.subr.bf16.mxu0 %v1536
    %2340 = vmatpush1.bf16.msra.mxu0 %v1535
    %2341 = vmatprep.subr.bf16.mxu0 %v1532
    %2342 = vmatpush1.bf16.msra.mxu0 %v1531
    %2343 = vmatprep.subr.bf16.mxu0 %v1528
    %2344 = vmatpush1.bf16.msra.mxu0 %v1527
    %2345 = vmatprep.subr.bf16.mxu0 %v1524
    %2346 = vmatpush1.bf16.msra.mxu0 %v1523
    %2347 = vmatprep.subr.bf16.mxu0 %v1520
    %2348 = vmatpush1.bf16.msra.mxu0 %v1519
    %2349 = vmatprep.subr.bf16.mxu0 %v1516
    %2350 = vmatpush1.bf16.msra.mxu0 %v1515
    %2351 = vmatprep.subr.bf16.mxu0 %v1576
    %2352 = vmatpush2.bf16.msra.mxu0 %v1575
    %2353 = vmatprep.subr.bf16.mxu0 %v1572
    %2354 = vmatpush2.bf16.msra.mxu0 %v1571
    %2355 = vmatprep.subr.bf16.mxu0 %v1568
    %2356 = vmatpush2.bf16.msra.mxu0 %v1567
    %2357 = vmatprep.subr.bf16.mxu0 %v1564
    %2358 = vmatpush2.bf16.msra.mxu0 %v1563
    %2359 = vmatprep.subr.bf16.mxu0 %v1560
    %2360 = vmatpush2.bf16.msra.mxu0 %v1559
    %2361 = vmatprep.subr.bf16.mxu0 %v1556
    %2362 = vmatpush2.bf16.msra.mxu0 %v1555
    %2363 = vmatprep.subr.bf16.mxu0 %v1552
    %2364 = vmatpush2.bf16.msra.mxu0 %v1551
    %2365 = vmatprep.subr.bf16.mxu0 %v1548
    %2366 = vmatpush2.bf16.msra.mxu0 %v1547
    %2367 = vmatprep.mubr.bf16.mxu0 %v558
    %2368 = vmatmul.mubr.bf16.gmra.mxu0 %v557
    %v2369 = vpop.f32.mrf.mxu0
    %v2370 = vadd.f32 %v2297, %v2369
    %v2371 = vpop.f32.mrf.mxu0
    %v2372 = vadd.f32 %v2299, %v2371
    %v2373 = vpop.f32.mrf.mxu0
    %v2374 = vadd.f32 %v2301, %v2373
    %v2375 = vpop.f32.mrf.mxu0
    %v2376 = vadd.f32 %v2303, %v2375
    %2377 = vmatprep.mubr.bf16.mxu0 %v566
    %2378 = vmatmul.mubr.bf16.gmra.mxu0 %v565
    %v2379 = vpop.f32.mrf.mxu0
    %v2380 = vadd.f32 %v2307, %v2379
    %v2381 = vpop.f32.mrf.mxu0
    %v2382 = vadd.f32 %v2309, %v2381
    %v2383 = vpop.f32.mrf.mxu0
    %v2384 = vadd.f32 %v2311, %v2383
    %v2385 = vpop.f32.mrf.mxu0
    %v2386 = vadd.f32 %v2313, %v2385
    %2387 = vmatprep.mubr.bf16.mxu0 %v574
    %2388 = vmatmul.mubr.bf16.gmra.mxu0 %v573
    %v2389 = vpop.f32.mrf.mxu0
    %v2390 = vadd.f32 %v2317, %v2389
    %v2391 = vpop.f32.mrf.mxu0
    %v2392 = vadd.f32 %v2319, %v2391
    %v2393 = vpop.f32.mrf.mxu0
    %v2394 = vadd.f32 %v2321, %v2393
    %v2395 = vpop.f32.mrf.mxu0
    %v2396 = vadd.f32 %v2323, %v2395
    %2397 = vmatprep.mubr.bf16.mxu0 %v582
    %2398 = vmatmul.mubr.bf16.gmra.mxu0 %v581
    %v2399 = vpop.f32.mrf.mxu0
    %v2400 = vadd.f32 %v2327, %v2399
    %v2401 = vpop.f32.mrf.mxu0
    %v2402 = vadd.f32 %v2329, %v2401
    %v2403 = vpop.f32.mrf.mxu0
    %v2404 = vadd.f32 %v2331, %v2403
    %v2405 = vpop.f32.mrf.mxu0
    %v2406 = vadd.f32 %v2333, %v2405
    %2407 = vdwg.mxu0
    %2408 = vmatprep.subr.bf16.mxu0 %v1608
    %2409 = vmatpush1.bf16.msra.mxu0 %v1607
    %2410 = vmatprep.subr.bf16.mxu0 %v1604
    %2411 = vmatpush1.bf16.msra.mxu0 %v1603
    %2412 = vmatprep.subr.bf16.mxu0 %v1600
    %2413 = vmatpush1.bf16.msra.mxu0 %v1599
    %2414 = vmatprep.subr.bf16.mxu0 %v1596
    %2415 = vmatpush1.bf16.msra.mxu0 %v1595
    %2416 = vmatprep.subr.bf16.mxu0 %v1592
    %2417 = vmatpush1.bf16.msra.mxu0 %v1591
    %2418 = vmatprep.subr.bf16.mxu0 %v1588
    %2419 = vmatpush1.bf16.msra.mxu0 %v1587
    %2420 = vmatprep.subr.bf16.mxu0 %v1584
    %2421 = vmatpush1.bf16.msra.mxu0 %v1583
    %2422 = vmatprep.subr.bf16.mxu0 %v1580
    %2423 = vmatpush1.bf16.msra.mxu0 %v1579
    %2424 = vmatprep.subr.bf16.mxu0 %v1640
    %2425 = vmatpush2.bf16.msra.mxu0 %v1639
    %2426 = vmatprep.subr.bf16.mxu0 %v1636
    %2427 = vmatpush2.bf16.msra.mxu0 %v1635
    %2428 = vmatprep.subr.bf16.mxu0 %v1632
    %2429 = vmatpush2.bf16.msra.mxu0 %v1631
    %2430 = vmatprep.subr.bf16.mxu0 %v1628
    %2431 = vmatpush2.bf16.msra.mxu0 %v1627
    %2432 = vmatprep.subr.bf16.mxu0 %v1624
    %2433 = vmatpush2.bf16.msra.mxu0 %v1623
    %2434 = vmatprep.subr.bf16.mxu0 %v1620
    %2435 = vmatpush2.bf16.msra.mxu0 %v1619
    %2436 = vmatprep.subr.bf16.mxu0 %v1616
    %2437 = vmatpush2.bf16.msra.mxu0 %v1615
    %2438 = vmatprep.subr.bf16.mxu0 %v1612
    %2439 = vmatpush2.bf16.msra.mxu0 %v1611
    %2440 = vmatprep.mubr.bf16.mxu0 %v560
    %2441 = vmatmul.mubr.bf16.gmra.mxu0 %v559
    %v2442 = vpop.f32.mrf.mxu0
    %v2443 = vadd.f32 %v2370, %v2442
    %v2444 = vpop.f32.mrf.mxu0
    %v2445 = vadd.f32 %v2372, %v2444
    %v2446 = vpop.f32.mrf.mxu0
    %v2447 = vadd.f32 %v2374, %v2446
    %v2448 = vpop.f32.mrf.mxu0
    %v2449 = vadd.f32 %v2376, %v2448
    %2450 = vmatprep.mubr.bf16.mxu0 %v568
    %2451 = vmatmul.mubr.bf16.gmra.mxu0 %v567
    %v2452 = vpop.f32.mrf.mxu0
    %v2453 = vadd.f32 %v2380, %v2452
    %v2454 = vpop.f32.mrf.mxu0
    %v2455 = vadd.f32 %v2382, %v2454
    %v2456 = vpop.f32.mrf.mxu0
    %v2457 = vadd.f32 %v2384, %v2456
    %v2458 = vpop.f32.mrf.mxu0
    %v2459 = vadd.f32 %v2386, %v2458
    %2460 = vmatprep.mubr.bf16.mxu0 %v576
    %2461 = vmatmul.mubr.bf16.gmra.mxu0 %v575
    %v2462 = vpop.f32.mrf.mxu0
    %v2463 = vadd.f32 %v2390, %v2462
    %v2464 = vpop.f32.mrf.mxu0
    %v2465 = vadd.f32 %v2392, %v2464
    %v2466 = vpop.f32.mrf.mxu0
    %v2467 = vadd.f32 %v2394, %v2466
    %v2468 = vpop.f32.mrf.mxu0
    %v2469 = vadd.f32 %v2396, %v2468
    %2470 = vmatprep.mubr.bf16.mxu0 %v584
    %2471 = vmatmul.mubr.bf16.gmra.mxu0 %v583
    %v2472 = vpop.f32.mrf.mxu0
    %v2473 = vadd.f32 %v2400, %v2472
    %v2474 = vpop.f32.mrf.mxu0
    %v2475 = vadd.f32 %v2402, %v2474
    %v2476 = vpop.f32.mrf.mxu0
    %v2477 = vadd.f32 %v2404, %v2476
    %v2478 = vpop.f32.mrf.mxu0
    %v2479 = vadd.f32 %v2406, %v2478
    %2480 = vdwg.mxu0
    %v2481 = vmax.f32 %v2151, 0.0
    %v2482 = vmax.f32 %v2153, 0.0
    %v2483 = vmax.f32 %v2443, 0.0
    %v2484 = vmax.f32 %v2445, 0.0
    %v2485 = vmax.f32 %v2155, 0.0
    %v2486 = vmax.f32 %v2157, 0.0
    %v2487 = vmax.f32 %v2447, 0.0
    %v2488 = vmax.f32 %v2449, 0.0
    %v2489 = vmax.f32 %v2161, 0.0
    %v2490 = vmax.f32 %v2163, 0.0
    %v2491 = vmax.f32 %v2453, 0.0
    %v2492 = vmax.f32 %v2455, 0.0
    %v2493 = vmax.f32 %v2165, 0.0
    %v2494 = vmax.f32 %v2167, 0.0
    %v2495 = vmax.f32 %v2457, 0.0
    %v2496 = vmax.f32 %v2459, 0.0
    %v2497 = vmax.f32 %v2171, 0.0
    %v2498 = vmax.f32 %v2173, 0.0
    %v2499 = vmax.f32 %v2463, 0.0
    %v2500 = vmax.f32 %v2465, 0.0
    %v2501 = vmax.f32 %v2175, 0.0
    %v2502 = vmax.f32 %v2177, 0.0
    %v2503 = vmax.f32 %v2467, 0.0
    %v2504 = vmax.f32 %v2469, 0.0
    %v2505 = vmax.f32 %v2181, 0.0
    %v2506 = vmax.f32 %v2183, 0.0
    %v2507 = vmax.f32 %v2473, 0.0
    %v2508 = vmax.f32 %v2475, 0.0
    %v2509 = vmax.f32 %v2185, 0.0
    %v2510 = vmax.f32 %v2187, 0.0
    %v2511 = vmax.f32 %v2477, 0.0
    %v2512 = vmax.f32 %v2479, 0.0
    %v2513 = vpack.c.bf16 %v2485, %v2481
    %v2514 = vpack.c.bf16 %v2486, %v2482
    %v2515 = vpack.c.bf16 %v2487, %v2483
    %v2516 = vpack.c.bf16 %v2488, %v2484
    %v2517 = vpack.c.bf16 %v2493, %v2489
    %v2518 = vpack.c.bf16 %v2494, %v2490
    %v2519 = vpack.c.bf16 %v2495, %v2491
    %v2520 = vpack.c.bf16 %v2496, %v2492
    %v2521 = vpack.c.bf16 %v2501, %v2497
    %v2522 = vpack.c.bf16 %v2502, %v2498
    %v2523 = vpack.c.bf16 %v2503, %v2499
    %v2524 = vpack.c.bf16 %v2504, %v2500
    %v2525 = vpack.c.bf16 %v2509, %v2505
    %v2526 = vpack.c.bf16 %v2510, %v2506
    %v2527 = vpack.c.bf16 %v2511, %v2507
    %v2528 = vpack.c.bf16 %v2512, %v2508
    %v2529 = vld [vmem:[#allocation12] sm:$0xff]
    %v2530 = vld [vmem:[#allocation12 + $0x8] sm:$0xff]
    %v2531 = vld [vmem:[#allocation12 + $0x10] sm:$0xff]
    %v2532 = vld [vmem:[#allocation12 + $0x18] sm:$0xff]
    %v2533 = vld [vmem:[#allocation12 + $0x20] sm:$0xff]
    %v2534 = vld [vmem:[#allocation12 + $0x28] sm:$0xff]
    %v2535 = vld [vmem:[#allocation12 + $0x30] sm:$0xff]
    %v2536 = vld [vmem:[#allocation12 + $0x38] sm:$0xff]
    %v2537 = vld [vmem:[#allocation12 + $0x40] sm:$0xff]
    %v2538 = vld [vmem:[#allocation12 + $0x48] sm:$0xff]
    %v2539 = vld [vmem:[#allocation12 + $0x50] sm:$0xff]
    %v2540 = vld [vmem:[#allocation12 + $0x58] sm:$0xff]
    %v2541 = vld [vmem:[#allocation12 + $0x60] sm:$0xff]
    %v2542 = vld [vmem:[#allocation12 + $0x68] sm:$0xff]
    %v2543 = vld [vmem:[#allocation12 + $0x70] sm:$0xff]
    %v2544 = vld [vmem:[#allocation12 + $0x78] sm:$0xff]
    %v2545 = vld [vmem:[#allocation12 + $0x80] sm:$0xff]
    %v2546 = vld [vmem:[#allocation12 + $0x88] sm:$0xff]
    %v2547 = vld [vmem:[#allocation12 + $0x90] sm:$0xff]
    %v2548 = vld [vmem:[#allocation12 + $0x98] sm:$0xff]
    %v2549 = vld [vmem:[#allocation12 + $0xa0] sm:$0xff]
    %v2550 = vld [vmem:[#allocation12 + $0xa8] sm:$0xff]
    %v2551 = vld [vmem:[#allocation12 + $0xb0] sm:$0xff]
    %v2552 = vld [vmem:[#allocation12 + $0xb8] sm:$0xff]
    %v2553 = vld [vmem:[#allocation12 + $0xc0] sm:$0xff]
    %v2554 = vld [vmem:[#allocation12 + $0xc8] sm:$0xff]
    %v2555 = vld [vmem:[#allocation12 + $0xd0] sm:$0xff]
    %v2556 = vld [vmem:[#allocation12 + $0xd8] sm:$0xff]
    %v2557 = vld [vmem:[#allocation12 + $0xe0] sm:$0xff]
    %v2558 = vld [vmem:[#allocation12 + $0xe8] sm:$0xff]
    %v2559 = vld [vmem:[#allocation12 + $0xf0] sm:$0xff]
    %v2560 = vld [vmem:[#allocation12 + $0xf8] sm:$0xff]
    %v2561 = vld [vmem:[#allocation12 + $0x100] sm:$0xff]
    %v2562 = vld [vmem:[#allocation12 + $0x108] sm:$0xff]
    %v2563 = vld [vmem:[#allocation12 + $0x110] sm:$0xff]
    %v2564 = vld [vmem:[#allocation12 + $0x118] sm:$0xff]
    %v2565 = vld [vmem:[#allocation12 + $0x120] sm:$0xff]
    %v2566 = vld [vmem:[#allocation12 + $0x128] sm:$0xff]
    %v2567 = vld [vmem:[#allocation12 + $0x130] sm:$0xff]
    %v2568 = vld [vmem:[#allocation12 + $0x138] sm:$0xff]
    %v2569 = vld [vmem:[#allocation12 + $0x140] sm:$0xff]
    %v2570 = vld [vmem:[#allocation12 + $0x148] sm:$0xff]
    %v2571 = vld [vmem:[#allocation12 + $0x150] sm:$0xff]
    %v2572 = vld [vmem:[#allocation12 + $0x158] sm:$0xff]
    %v2573 = vld [vmem:[#allocation12 + $0x160] sm:$0xff]
    %v2574 = vld [vmem:[#allocation12 + $0x168] sm:$0xff]
    %v2575 = vld [vmem:[#allocation12 + $0x170] sm:$0xff]
    %v2576 = vld [vmem:[#allocation12 + $0x178] sm:$0xff]
    %v2577 = vld [vmem:[#allocation12 + $0x180] sm:$0xff]
    %v2578 = vld [vmem:[#allocation12 + $0x188] sm:$0xff]
    %v2579 = vld [vmem:[#allocation12 + $0x190] sm:$0xff]
    %v2580 = vld [vmem:[#allocation12 + $0x198] sm:$0xff]
    %v2581 = vld [vmem:[#allocation12 + $0x1a0] sm:$0xff]
    %v2582 = vld [vmem:[#allocation12 + $0x1a8] sm:$0xff]
    %v2583 = vld [vmem:[#allocation12 + $0x1b0] sm:$0xff]
    %v2584 = vld [vmem:[#allocation12 + $0x1b8] sm:$0xff]
    %v2585 = vld [vmem:[#allocation12 + $0x1c0] sm:$0xff]
    %v2586 = vld [vmem:[#allocation12 + $0x1c8] sm:$0xff]
    %v2587 = vld [vmem:[#allocation12 + $0x1d0] sm:$0xff]
    %v2588 = vld [vmem:[#allocation12 + $0x1d8] sm:$0xff]
    %v2589 = vld [vmem:[#allocation12 + $0x1e0] sm:$0xff]
    %v2590 = vld [vmem:[#allocation12 + $0x1e8] sm:$0xff]
    %v2591 = vld [vmem:[#allocation12 + $0x1f0] sm:$0xff]
    %v2592 = vld [vmem:[#allocation12 + $0x1f8] sm:$0xff]
    %v2593 = vld [vmem:[#allocation12 + $0x200] sm:$0xff]
    %v2594 = vld [vmem:[#allocation12 + $0x208] sm:$0xff]
    %v2595 = vld [vmem:[#allocation12 + $0x210] sm:$0xff]
    %v2596 = vld [vmem:[#allocation12 + $0x218] sm:$0xff]
    %v2597 = vld [vmem:[#allocation12 + $0x220] sm:$0xff]
    %v2598 = vld [vmem:[#allocation12 + $0x228] sm:$0xff]
    %v2599 = vld [vmem:[#allocation12 + $0x230] sm:$0xff]
    %v2600 = vld [vmem:[#allocation12 + $0x238] sm:$0xff]
    %v2601 = vld [vmem:[#allocation12 + $0x240] sm:$0xff]
    %v2602 = vld [vmem:[#allocation12 + $0x248] sm:$0xff]
    %v2603 = vld [vmem:[#allocation12 + $0x250] sm:$0xff]
    %v2604 = vld [vmem:[#allocation12 + $0x258] sm:$0xff]
    %v2605 = vld [vmem:[#allocation12 + $0x260] sm:$0xff]
    %v2606 = vld [vmem:[#allocation12 + $0x268] sm:$0xff]
    %v2607 = vld [vmem:[#allocation12 + $0x270] sm:$0xff]
    %v2608 = vld [vmem:[#allocation12 + $0x278] sm:$0xff]
    %v2609 = vld [vmem:[#allocation12 + $0x280] sm:$0xff]
    %v2610 = vld [vmem:[#allocation12 + $0x288] sm:$0xff]
    %v2611 = vld [vmem:[#allocation12 + $0x290] sm:$0xff]
    %v2612 = vld [vmem:[#allocation12 + $0x298] sm:$0xff]
    %v2613 = vld [vmem:[#allocation12 + $0x2a0] sm:$0xff]
    %v2614 = vld [vmem:[#allocation12 + $0x2a8] sm:$0xff]
    %v2615 = vld [vmem:[#allocation12 + $0x2b0] sm:$0xff]
    %v2616 = vld [vmem:[#allocation12 + $0x2b8] sm:$0xff]
    %v2617 = vld [vmem:[#allocation12 + $0x2c0] sm:$0xff]
    %v2618 = vld [vmem:[#allocation12 + $0x2c8] sm:$0xff]
    %v2619 = vld [vmem:[#allocation12 + $0x2d0] sm:$0xff]
    %v2620 = vld [vmem:[#allocation12 + $0x2d8] sm:$0xff]
    %v2621 = vld [vmem:[#allocation12 + $0x2e0] sm:$0xff]
    %v2622 = vld [vmem:[#allocation12 + $0x2e8] sm:$0xff]
    %v2623 = vld [vmem:[#allocation12 + $0x2f0] sm:$0xff]
    %v2624 = vld [vmem:[#allocation12 + $0x2f8] sm:$0xff]
    %v2625 = vld [vmem:[#allocation12 + $0x300] sm:$0xff]
    %v2626 = vld [vmem:[#allocation12 + $0x308] sm:$0xff]
    %v2627 = vld [vmem:[#allocation12 + $0x310] sm:$0xff]
    %v2628 = vld [vmem:[#allocation12 + $0x318] sm:$0xff]
    %v2629 = vld [vmem:[#allocation12 + $0x320] sm:$0xff]
    %v2630 = vld [vmem:[#allocation12 + $0x328] sm:$0xff]
    %v2631 = vld [vmem:[#allocation12 + $0x330] sm:$0xff]
    %v2632 = vld [vmem:[#allocation12 + $0x338] sm:$0xff]
    %v2633 = vld [vmem:[#allocation12 + $0x340] sm:$0xff]
    %v2634 = vld [vmem:[#allocation12 + $0x348] sm:$0xff]
    %v2635 = vld [vmem:[#allocation12 + $0x350] sm:$0xff]
    %v2636 = vld [vmem:[#allocation12 + $0x358] sm:$0xff]
    %v2637 = vld [vmem:[#allocation12 + $0x360] sm:$0xff]
    %v2638 = vld [vmem:[#allocation12 + $0x368] sm:$0xff]
    %v2639 = vld [vmem:[#allocation12 + $0x370] sm:$0xff]
    %v2640 = vld [vmem:[#allocation12 + $0x378] sm:$0xff]
    %v2641 = vld [vmem:[#allocation12 + $0x380] sm:$0xff]
    %v2642 = vld [vmem:[#allocation12 + $0x388] sm:$0xff]
    %v2643 = vld [vmem:[#allocation12 + $0x390] sm:$0xff]
    %v2644 = vld [vmem:[#allocation12 + $0x398] sm:$0xff]
    %v2645 = vld [vmem:[#allocation12 + $0x3a0] sm:$0xff]
    %v2646 = vld [vmem:[#allocation12 + $0x3a8] sm:$0xff]
    %v2647 = vld [vmem:[#allocation12 + $0x3b0] sm:$0xff]
    %v2648 = vld [vmem:[#allocation12 + $0x3b8] sm:$0xff]
    %v2649 = vld [vmem:[#allocation12 + $0x3c0] sm:$0xff]
    %v2650 = vld [vmem:[#allocation12 + $0x3c8] sm:$0xff]
    %v2651 = vld [vmem:[#allocation12 + $0x3d0] sm:$0xff]
    %v2652 = vld [vmem:[#allocation12 + $0x3d8] sm:$0xff]
    %v2653 = vld [vmem:[#allocation12 + $0x3e0] sm:$0xff]
    %v2654 = vld [vmem:[#allocation12 + $0x3e8] sm:$0xff]
    %v2655 = vld [vmem:[#allocation12 + $0x3f0] sm:$0xff]
    %v2656 = vld [vmem:[#allocation12 + $0x3f8] sm:$0xff]
    %v2657 = vld [vmem:[#allocation13] sm:$0xf]
    %v2659 = vlaneseq
    %v2660 = vshrl.u32 %v2659, 7
    %v2661 = vsub.s32 0, %v2660
    %v2662 = vrot.slane %v2657, %v2661
    %v2663 = vlaneseq
    %v2664 = vshrl.u32 %v2663, 7
    %v2665 = vsub.s32 1, %v2664
    %v2666 = vrot.slane %v2657, %v2665
    %v2667 = vlaneseq
    %v2668 = vshrl.u32 %v2667, 7
    %v2669 = vsub.s32 2, %v2668
    %v2670 = vrot.slane %v2657, %v2669
    %v2671 = vlaneseq
    %v2672 = vshrl.u32 %v2671, 7
    %v2673 = vsub.s32 3, %v2672
    %v2674 = vrot.slane %v2657, %v2673
    %v2807 = vunpack.c.l.b16 %v2529
    %v2808 = vunpack.c.h.b16 %v2529
    %v2809 = vunpack.c.l.b16 %v2530
    %v2810 = vunpack.c.h.b16 %v2530
    %v2811 = vunpack.c.l.b16 %v2531
    %v2812 = vunpack.c.h.b16 %v2531
    %v2813 = vunpack.c.l.b16 %v2532
    %v2814 = vunpack.c.h.b16 %v2532
    %v2815 = vunpack.c.l.b16 %v2533
    %v2816 = vunpack.c.h.b16 %v2533
    %v2817 = vunpack.c.l.b16 %v2534
    %v2818 = vunpack.c.h.b16 %v2534
    %v2819 = vunpack.c.l.b16 %v2535
    %v2820 = vunpack.c.h.b16 %v2535
    %v2821 = vunpack.c.l.b16 %v2536
    %v2822 = vunpack.c.h.b16 %v2536
    %v2823 = vunpack.c.l.b16 %v2537
    %v2824 = vunpack.c.h.b16 %v2537
    %v2825 = vunpack.c.l.b16 %v2538
    %v2826 = vunpack.c.h.b16 %v2538
    %v2827 = vunpack.c.l.b16 %v2539
    %v2828 = vunpack.c.h.b16 %v2539
    %v2829 = vunpack.c.l.b16 %v2540
    %v2830 = vunpack.c.h.b16 %v2540
    %v2831 = vunpack.c.l.b16 %v2541
    %v2832 = vunpack.c.h.b16 %v2541
    %v2833 = vunpack.c.l.b16 %v2542
    %v2834 = vunpack.c.h.b16 %v2542
    %v2835 = vunpack.c.l.b16 %v2543
    %v2836 = vunpack.c.h.b16 %v2543
    %v2837 = vunpack.c.l.b16 %v2544
    %v2838 = vunpack.c.h.b16 %v2544
    %v2839 = vunpack.c.l.b16 %v2545
    %v2840 = vunpack.c.h.b16 %v2545
    %v2841 = vunpack.c.l.b16 %v2546
    %v2842 = vunpack.c.h.b16 %v2546
    %v2843 = vunpack.c.l.b16 %v2547
    %v2844 = vunpack.c.h.b16 %v2547
    %v2845 = vunpack.c.l.b16 %v2548
    %v2846 = vunpack.c.h.b16 %v2548
    %v2847 = vunpack.c.l.b16 %v2549
    %v2848 = vunpack.c.h.b16 %v2549
    %v2849 = vunpack.c.l.b16 %v2550
    %v2850 = vunpack.c.h.b16 %v2550
    %v2851 = vunpack.c.l.b16 %v2551
    %v2852 = vunpack.c.h.b16 %v2551
    %v2853 = vunpack.c.l.b16 %v2552
    %v2854 = vunpack.c.h.b16 %v2552
    %v2855 = vunpack.c.l.b16 %v2553
    %v2856 = vunpack.c.h.b16 %v2553
    %v2857 = vunpack.c.l.b16 %v2554
    %v2858 = vunpack.c.h.b16 %v2554
    %v2859 = vunpack.c.l.b16 %v2555
    %v2860 = vunpack.c.h.b16 %v2555
    %v2861 = vunpack.c.l.b16 %v2556
    %v2862 = vunpack.c.h.b16 %v2556
    %v2863 = vunpack.c.l.b16 %v2557
    %v2864 = vunpack.c.h.b16 %v2557
    %v2865 = vunpack.c.l.b16 %v2558
    %v2866 = vunpack.c.h.b16 %v2558
    %v2867 = vunpack.c.l.b16 %v2559
    %v2868 = vunpack.c.h.b16 %v2559
    %v2869 = vunpack.c.l.b16 %v2560
    %v2870 = vunpack.c.h.b16 %v2560
    %v2871 = vunpack.c.l.b16 %v2561
    %v2872 = vunpack.c.h.b16 %v2561
    %v2873 = vunpack.c.l.b16 %v2562
    %v2874 = vunpack.c.h.b16 %v2562
    %v2875 = vunpack.c.l.b16 %v2563
    %v2876 = vunpack.c.h.b16 %v2563
    %v2877 = vunpack.c.l.b16 %v2564
    %v2878 = vunpack.c.h.b16 %v2564
    %v2879 = vunpack.c.l.b16 %v2565
    %v2880 = vunpack.c.h.b16 %v2565
    %v2881 = vunpack.c.l.b16 %v2566
    %v2882 = vunpack.c.h.b16 %v2566
    %v2883 = vunpack.c.l.b16 %v2567
    %v2884 = vunpack.c.h.b16 %v2567
    %v2885 = vunpack.c.l.b16 %v2568
    %v2886 = vunpack.c.h.b16 %v2568
    %v2887 = vunpack.c.l.b16 %v2569
    %v2888 = vunpack.c.h.b16 %v2569
    %v2889 = vunpack.c.l.b16 %v2570
    %v2890 = vunpack.c.h.b16 %v2570
    %v2891 = vunpack.c.l.b16 %v2571
    %v2892 = vunpack.c.h.b16 %v2571
    %v2893 = vunpack.c.l.b16 %v2572
    %v2894 = vunpack.c.h.b16 %v2572
    %v2895 = vunpack.c.l.b16 %v2573
    %v2896 = vunpack.c.h.b16 %v2573
    %v2897 = vunpack.c.l.b16 %v2574
    %v2898 = vunpack.c.h.b16 %v2574
    %v2899 = vunpack.c.l.b16 %v2575
    %v2900 = vunpack.c.h.b16 %v2575
    %v2901 = vunpack.c.l.b16 %v2576
    %v2902 = vunpack.c.h.b16 %v2576
    %v2903 = vunpack.c.l.b16 %v2577
    %v2904 = vunpack.c.h.b16 %v2577
    %v2905 = vunpack.c.l.b16 %v2578
    %v2906 = vunpack.c.h.b16 %v2578
    %v2907 = vunpack.c.l.b16 %v2579
    %v2908 = vunpack.c.h.b16 %v2579
    %v2909 = vunpack.c.l.b16 %v2580
    %v2910 = vunpack.c.h.b16 %v2580
    %v2911 = vunpack.c.l.b16 %v2581
    %v2912 = vunpack.c.h.b16 %v2581
    %v2913 = vunpack.c.l.b16 %v2582
    %v2914 = vunpack.c.h.b16 %v2582
    %v2915 = vunpack.c.l.b16 %v2583
    %v2916 = vunpack.c.h.b16 %v2583
    %v2917 = vunpack.c.l.b16 %v2584
    %v2918 = vunpack.c.h.b16 %v2584
    %v2919 = vunpack.c.l.b16 %v2585
    %v2920 = vunpack.c.h.b16 %v2585
    %v2921 = vunpack.c.l.b16 %v2586
    %v2922 = vunpack.c.h.b16 %v2586
    %v2923 = vunpack.c.l.b16 %v2587
    %v2924 = vunpack.c.h.b16 %v2587
    %v2925 = vunpack.c.l.b16 %v2588
    %v2926 = vunpack.c.h.b16 %v2588
    %v2927 = vunpack.c.l.b16 %v2589
    %v2928 = vunpack.c.h.b16 %v2589
    %v2929 = vunpack.c.l.b16 %v2590
    %v2930 = vunpack.c.h.b16 %v2590
    %v2931 = vunpack.c.l.b16 %v2591
    %v2932 = vunpack.c.h.b16 %v2591
    %v2933 = vunpack.c.l.b16 %v2592
    %v2934 = vunpack.c.h.b16 %v2592
    %v2935 = vunpack.c.l.b16 %v2593
    %v2936 = vunpack.c.h.b16 %v2593
    %v2937 = vunpack.c.l.b16 %v2594
    %v2938 = vunpack.c.h.b16 %v2594
    %v2939 = vunpack.c.l.b16 %v2595
    %v2940 = vunpack.c.h.b16 %v2595
    %v2941 = vunpack.c.l.b16 %v2596
    %v2942 = vunpack.c.h.b16 %v2596
    %v2943 = vunpack.c.l.b16 %v2597
    %v2944 = vunpack.c.h.b16 %v2597
    %v2945 = vunpack.c.l.b16 %v2598
    %v2946 = vunpack.c.h.b16 %v2598
    %v2947 = vunpack.c.l.b16 %v2599
    %v2948 = vunpack.c.h.b16 %v2599
    %v2949 = vunpack.c.l.b16 %v2600
    %v2950 = vunpack.c.h.b16 %v2600
    %v2951 = vunpack.c.l.b16 %v2601
    %v2952 = vunpack.c.h.b16 %v2601
    %v2953 = vunpack.c.l.b16 %v2602
    %v2954 = vunpack.c.h.b16 %v2602
    %v2955 = vunpack.c.l.b16 %v2603
    %v2956 = vunpack.c.h.b16 %v2603
    %v2957 = vunpack.c.l.b16 %v2604
    %v2958 = vunpack.c.h.b16 %v2604
    %v2959 = vunpack.c.l.b16 %v2605
    %v2960 = vunpack.c.h.b16 %v2605
    %v2961 = vunpack.c.l.b16 %v2606
    %v2962 = vunpack.c.h.b16 %v2606
    %v2963 = vunpack.c.l.b16 %v2607
    %v2964 = vunpack.c.h.b16 %v2607
    %v2965 = vunpack.c.l.b16 %v2608
    %v2966 = vunpack.c.h.b16 %v2608
    %v2967 = vunpack.c.l.b16 %v2609
    %v2968 = vunpack.c.h.b16 %v2609
    %v2969 = vunpack.c.l.b16 %v2610
    %v2970 = vunpack.c.h.b16 %v2610
    %v2971 = vunpack.c.l.b16 %v2611
    %v2972 = vunpack.c.h.b16 %v2611
    %v2973 = vunpack.c.l.b16 %v2612
    %v2974 = vunpack.c.h.b16 %v2612
    %v2975 = vunpack.c.l.b16 %v2613
    %v2976 = vunpack.c.h.b16 %v2613
    %v2977 = vunpack.c.l.b16 %v2614
    %v2978 = vunpack.c.h.b16 %v2614
    %v2979 = vunpack.c.l.b16 %v2615
    %v2980 = vunpack.c.h.b16 %v2615
    %v2981 = vunpack.c.l.b16 %v2616
    %v2982 = vunpack.c.h.b16 %v2616
    %v2983 = vunpack.c.l.b16 %v2617
    %v2984 = vunpack.c.h.b16 %v2617
    %v2985 = vunpack.c.l.b16 %v2618
    %v2986 = vunpack.c.h.b16 %v2618
    %v2987 = vunpack.c.l.b16 %v2619
    %v2988 = vunpack.c.h.b16 %v2619
    %v2989 = vunpack.c.l.b16 %v2620
    %v2990 = vunpack.c.h.b16 %v2620
    %v2991 = vunpack.c.l.b16 %v2621
    %v2992 = vunpack.c.h.b16 %v2621
    %v2993 = vunpack.c.l.b16 %v2622
    %v2994 = vunpack.c.h.b16 %v2622
    %v2995 = vunpack.c.l.b16 %v2623
    %v2996 = vunpack.c.h.b16 %v2623
    %v2997 = vunpack.c.l.b16 %v2624
    %v2998 = vunpack.c.h.b16 %v2624
    %v2999 = vunpack.c.l.b16 %v2625
    %v3000 = vunpack.c.h.b16 %v2625
    %v3001 = vunpack.c.l.b16 %v2626
    %v3002 = vunpack.c.h.b16 %v2626
    %v3003 = vunpack.c.l.b16 %v2627
    %v3004 = vunpack.c.h.b16 %v2627
    %v3005 = vunpack.c.l.b16 %v2628
    %v3006 = vunpack.c.h.b16 %v2628
    %v3007 = vunpack.c.l.b16 %v2629
    %v3008 = vunpack.c.h.b16 %v2629
    %v3009 = vunpack.c.l.b16 %v2630
    %v3010 = vunpack.c.h.b16 %v2630
    %v3011 = vunpack.c.l.b16 %v2631
    %v3012 = vunpack.c.h.b16 %v2631
    %v3013 = vunpack.c.l.b16 %v2632
    %v3014 = vunpack.c.h.b16 %v2632
    %v3015 = vunpack.c.l.b16 %v2633
    %v3016 = vunpack.c.h.b16 %v2633
    %v3017 = vunpack.c.l.b16 %v2634
    %v3018 = vunpack.c.h.b16 %v2634
    %v3019 = vunpack.c.l.b16 %v2635
    %v3020 = vunpack.c.h.b16 %v2635
    %v3021 = vunpack.c.l.b16 %v2636
    %v3022 = vunpack.c.h.b16 %v2636
    %v3023 = vunpack.c.l.b16 %v2637
    %v3024 = vunpack.c.h.b16 %v2637
    %v3025 = vunpack.c.l.b16 %v2638
    %v3026 = vunpack.c.h.b16 %v2638
    %v3027 = vunpack.c.l.b16 %v2639
    %v3028 = vunpack.c.h.b16 %v2639
    %v3029 = vunpack.c.l.b16 %v2640
    %v3030 = vunpack.c.h.b16 %v2640
    %v3031 = vunpack.c.l.b16 %v2641
    %v3032 = vunpack.c.h.b16 %v2641
    %v3033 = vunpack.c.l.b16 %v2642
    %v3034 = vunpack.c.h.b16 %v2642
    %v3035 = vunpack.c.l.b16 %v2643
    %v3036 = vunpack.c.h.b16 %v2643
    %v3037 = vunpack.c.l.b16 %v2644
    %v3038 = vunpack.c.h.b16 %v2644
    %v3039 = vunpack.c.l.b16 %v2645
    %v3040 = vunpack.c.h.b16 %v2645
    %v3041 = vunpack.c.l.b16 %v2646
    %v3042 = vunpack.c.h.b16 %v2646
    %v3043 = vunpack.c.l.b16 %v2647
    %v3044 = vunpack.c.h.b16 %v2647
    %v3045 = vunpack.c.l.b16 %v2648
    %v3046 = vunpack.c.h.b16 %v2648
    %v3047 = vunpack.c.l.b16 %v2649
    %v3048 = vunpack.c.h.b16 %v2649
    %v3049 = vunpack.c.l.b16 %v2650
    %v3050 = vunpack.c.h.b16 %v2650
    %v3051 = vunpack.c.l.b16 %v2651
    %v3052 = vunpack.c.h.b16 %v2651
    %v3053 = vunpack.c.l.b16 %v2652
    %v3054 = vunpack.c.h.b16 %v2652
    %v3055 = vunpack.c.l.b16 %v2653
    %v3056 = vunpack.c.h.b16 %v2653
    %v3057 = vunpack.c.l.b16 %v2654
    %v3058 = vunpack.c.h.b16 %v2654
    %v3059 = vunpack.c.l.b16 %v2655
    %v3060 = vunpack.c.h.b16 %v2655
    %v3061 = vunpack.c.l.b16 %v2656
    %v3062 = vunpack.c.h.b16 %v2656
    %v3063 = vpack.c.b16 %v2811, %v2807
    %v3064 = vpack.c.b16 %v2812, %v2808
    %v3065 = vpack.c.b16 %v2813, %v2809
    %v3066 = vpack.c.b16 %v2814, %v2810
    %v3067 = vpack.c.b16 %v2819, %v2815
    %v3068 = vpack.c.b16 %v2820, %v2816
    %v3069 = vpack.c.b16 %v2821, %v2817
    %v3070 = vpack.c.b16 %v2822, %v2818
    %v3071 = vpack.c.b16 %v2827, %v2823
    %v3072 = vpack.c.b16 %v2828, %v2824
    %v3073 = vpack.c.b16 %v2829, %v2825
    %v3074 = vpack.c.b16 %v2830, %v2826
    %v3075 = vpack.c.b16 %v2835, %v2831
    %v3076 = vpack.c.b16 %v2836, %v2832
    %v3077 = vpack.c.b16 %v2837, %v2833
    %v3078 = vpack.c.b16 %v2838, %v2834
    %v3079 = vpack.c.b16 %v2843, %v2839
    %v3080 = vpack.c.b16 %v2844, %v2840
    %v3081 = vpack.c.b16 %v2845, %v2841
    %v3082 = vpack.c.b16 %v2846, %v2842
    %v3083 = vpack.c.b16 %v2851, %v2847
    %v3084 = vpack.c.b16 %v2852, %v2848
    %v3085 = vpack.c.b16 %v2853, %v2849
    %v3086 = vpack.c.b16 %v2854, %v2850
    %v3087 = vpack.c.b16 %v2859, %v2855
    %v3088 = vpack.c.b16 %v2860, %v2856
    %v3089 = vpack.c.b16 %v2861, %v2857
    %v3090 = vpack.c.b16 %v2862, %v2858
    %v3091 = vpack.c.b16 %v2867, %v2863
    %v3092 = vpack.c.b16 %v2868, %v2864
    %v3093 = vpack.c.b16 %v2869, %v2865
    %v3094 = vpack.c.b16 %v2870, %v2866
    %v3095 = vpack.c.b16 %v2875, %v2871
    %v3096 = vpack.c.b16 %v2876, %v2872
    %v3097 = vpack.c.b16 %v2877, %v2873
    %v3098 = vpack.c.b16 %v2878, %v2874
    %v3099 = vpack.c.b16 %v2883, %v2879
    %v3100 = vpack.c.b16 %v2884, %v2880
    %v3101 = vpack.c.b16 %v2885, %v2881
    %v3102 = vpack.c.b16 %v2886, %v2882
    %v3103 = vpack.c.b16 %v2891, %v2887
    %v3104 = vpack.c.b16 %v2892, %v2888
    %v3105 = vpack.c.b16 %v2893, %v2889
    %v3106 = vpack.c.b16 %v2894, %v2890
    %v3107 = vpack.c.b16 %v2899, %v2895
    %v3108 = vpack.c.b16 %v2900, %v2896
    %v3109 = vpack.c.b16 %v2901, %v2897
    %v3110 = vpack.c.b16 %v2902, %v2898
    %v3111 = vpack.c.b16 %v2907, %v2903
    %v3112 = vpack.c.b16 %v2908, %v2904
    %v3113 = vpack.c.b16 %v2909, %v2905
    %v3114 = vpack.c.b16 %v2910, %v2906
    %v3115 = vpack.c.b16 %v2915, %v2911
    %v3116 = vpack.c.b16 %v2916, %v2912
    %v3117 = vpack.c.b16 %v2917, %v2913
    %v3118 = vpack.c.b16 %v2918, %v2914
    %v3119 = vpack.c.b16 %v2923, %v2919
    %v3120 = vpack.c.b16 %v2924, %v2920
    %v3121 = vpack.c.b16 %v2925, %v2921
    %v3122 = vpack.c.b16 %v2926, %v2922
    %v3123 = vpack.c.b16 %v2931, %v2927
    %v3124 = vpack.c.b16 %v2932, %v2928
    %v3125 = vpack.c.b16 %v2933, %v2929
    %v3126 = vpack.c.b16 %v2934, %v2930
    %v3127 = vpack.c.b16 %v2939, %v2935
    %v3128 = vpack.c.b16 %v2940, %v2936
    %v3129 = vpack.c.b16 %v2941, %v2937
    %v3130 = vpack.c.b16 %v2942, %v2938
    %v3131 = vpack.c.b16 %v2947, %v2943
    %v3132 = vpack.c.b16 %v2948, %v2944
    %v3133 = vpack.c.b16 %v2949, %v2945
    %v3134 = vpack.c.b16 %v2950, %v2946
    %v3135 = vpack.c.b16 %v2955, %v2951
    %v3136 = vpack.c.b16 %v2956, %v2952
    %v3137 = vpack.c.b16 %v2957, %v2953
    %v3138 = vpack.c.b16 %v2958, %v2954
    %v3139 = vpack.c.b16 %v2963, %v2959
    %v3140 = vpack.c.b16 %v2964, %v2960
    %v3141 = vpack.c.b16 %v2965, %v2961
    %v3142 = vpack.c.b16 %v2966, %v2962
    %v3143 = vpack.c.b16 %v2971, %v2967
    %v3144 = vpack.c.b16 %v2972, %v2968
    %v3145 = vpack.c.b16 %v2973, %v2969
    %v3146 = vpack.c.b16 %v2974, %v2970
    %v3147 = vpack.c.b16 %v2979, %v2975
    %v3148 = vpack.c.b16 %v2980, %v2976
    %v3149 = vpack.c.b16 %v2981, %v2977
    %v3150 = vpack.c.b16 %v2982, %v2978
    %v3151 = vpack.c.b16 %v2987, %v2983
    %v3152 = vpack.c.b16 %v2988, %v2984
    %v3153 = vpack.c.b16 %v2989, %v2985
    %v3154 = vpack.c.b16 %v2990, %v2986
    %v3155 = vpack.c.b16 %v2995, %v2991
    %v3156 = vpack.c.b16 %v2996, %v2992
    %v3157 = vpack.c.b16 %v2997, %v2993
    %v3158 = vpack.c.b16 %v2998, %v2994
    %v3159 = vpack.c.b16 %v3003, %v2999
    %v3160 = vpack.c.b16 %v3004, %v3000
    %v3161 = vpack.c.b16 %v3005, %v3001
    %v3162 = vpack.c.b16 %v3006, %v3002
    %v3163 = vpack.c.b16 %v3011, %v3007
    %v3164 = vpack.c.b16 %v3012, %v3008
    %v3165 = vpack.c.b16 %v3013, %v3009
    %v3166 = vpack.c.b16 %v3014, %v3010
    %v3167 = vpack.c.b16 %v3019, %v3015
    %v3168 = vpack.c.b16 %v3020, %v3016
    %v3169 = vpack.c.b16 %v3021, %v3017
    %v3170 = vpack.c.b16 %v3022, %v3018
    %v3171 = vpack.c.b16 %v3027, %v3023
    %v3172 = vpack.c.b16 %v3028, %v3024
    %v3173 = vpack.c.b16 %v3029, %v3025
    %v3174 = vpack.c.b16 %v3030, %v3026
    %v3175 = vpack.c.b16 %v3035, %v3031
    %v3176 = vpack.c.b16 %v3036, %v3032
    %v3177 = vpack.c.b16 %v3037, %v3033
    %v3178 = vpack.c.b16 %v3038, %v3034
    %v3179 = vpack.c.b16 %v3043, %v3039
    %v3180 = vpack.c.b16 %v3044, %v3040
    %v3181 = vpack.c.b16 %v3045, %v3041
    %v3182 = vpack.c.b16 %v3046, %v3042
    %v3183 = vpack.c.b16 %v3051, %v3047
    %v3184 = vpack.c.b16 %v3052, %v3048
    %v3185 = vpack.c.b16 %v3053, %v3049
    %v3186 = vpack.c.b16 %v3054, %v3050
    %v3187 = vpack.c.b16 %v3059, %v3055
    %v3188 = vpack.c.b16 %v3060, %v3056
    %v3189 = vpack.c.b16 %v3061, %v3057
    %v3190 = vpack.c.b16 %v3062, %v3058
    %3319 = vmatprep.subr.bf16.mxu0 %v3092
    %3320 = vmatpush1.bf16.msra.mxu0 %v3091
    %3321 = vmatprep.subr.bf16.mxu0 %v3088
    %3322 = vmatpush1.bf16.msra.mxu0 %v3087
    %3323 = vmatprep.subr.bf16.mxu0 %v3084
    %3324 = vmatpush1.bf16.msra.mxu0 %v3083
    %3325 = vmatprep.subr.bf16.mxu0 %v3080
    %3326 = vmatpush1.bf16.msra.mxu0 %v3079
    %3327 = vmatprep.subr.bf16.mxu0 %v3076
    %3328 = vmatpush1.bf16.msra.mxu0 %v3075
    %3329 = vmatprep.subr.bf16.mxu0 %v3072
    %3330 = vmatpush1.bf16.msra.mxu0 %v3071
    %3331 = vmatprep.subr.bf16.mxu0 %v3068
    %3332 = vmatpush1.bf16.msra.mxu0 %v3067
    %3333 = vmatprep.subr.bf16.mxu0 %v3064
    %3334 = vmatpush1.bf16.msra.mxu0 %v3063
    %3335 = vmatprep.subr.bf16.mxu0 %v3124
    %3336 = vmatpush2.bf16.msra.mxu0 %v3123
    %3337 = vmatprep.subr.bf16.mxu0 %v3120
    %3338 = vmatpush2.bf16.msra.mxu0 %v3119
    %3339 = vmatprep.subr.bf16.mxu0 %v3116
    %3340 = vmatpush2.bf16.msra.mxu0 %v3115
    %3341 = vmatprep.subr.bf16.mxu0 %v3112
    %3342 = vmatpush2.bf16.msra.mxu0 %v3111
    %3343 = vmatprep.subr.bf16.mxu0 %v3108
    %3344 = vmatpush2.bf16.msra.mxu0 %v3107
    %3345 = vmatprep.subr.bf16.mxu0 %v3104
    %3346 = vmatpush2.bf16.msra.mxu0 %v3103
    %3347 = vmatprep.subr.bf16.mxu0 %v3100
    %3348 = vmatpush2.bf16.msra.mxu0 %v3099
    %3349 = vmatprep.subr.bf16.mxu0 %v3096
    %3350 = vmatpush2.bf16.msra.mxu0 %v3095
    %3351 = vmatprep.mubr.bf16.mxu0 %v2514
    %3352 = vmatmul.mubr.bf16.gmra.mxu0 %v2513
    %v3353 = vpop.f32.mrf.mxu0
    %v3354 = vadd.f32 %v2662, %v3353
    %v3355 = vpop.f32.mrf.mxu0
    %v3356 = vadd.f32 %v2666, %v3355
    %v3357 = vpop.f32.mrf.mxu0
    %v3358 = vadd.f32 %v2662, %v3357
    %v3359 = vpop.f32.mrf.mxu0
    %v3360 = vadd.f32 %v2666, %v3359
    %3361 = vmatprep.mubr.bf16.mxu0 %v2518
    %3362 = vmatmul.mubr.bf16.gmra.mxu0 %v2517
    %v3363 = vpop.f32.mrf.mxu0
    %v3364 = vadd.f32 %v2662, %v3363
    %v3365 = vpop.f32.mrf.mxu0
    %v3366 = vadd.f32 %v2666, %v3365
    %v3367 = vpop.f32.mrf.mxu0
    %v3368 = vadd.f32 %v2662, %v3367
    %v3369 = vpop.f32.mrf.mxu0
    %v3370 = vadd.f32 %v2666, %v3369
    %3371 = vmatprep.mubr.bf16.mxu0 %v2522
    %3372 = vmatmul.mubr.bf16.gmra.mxu0 %v2521
    %v3373 = vpop.f32.mrf.mxu0
    %v3374 = vadd.f32 %v2662, %v3373
    %v3375 = vpop.f32.mrf.mxu0
    %v3376 = vadd.f32 %v2666, %v3375
    %v3377 = vpop.f32.mrf.mxu0
    %v3378 = vadd.f32 %v2662, %v3377
    %v3379 = vpop.f32.mrf.mxu0
    %v3380 = vadd.f32 %v2666, %v3379
    %3381 = vmatprep.mubr.bf16.mxu0 %v2526
    %3382 = vmatmul.mubr.bf16.gmra.mxu0 %v2525
    %v3383 = vpop.f32.mrf.mxu0
    %v3384 = vadd.f32 %v2662, %v3383
    %v3385 = vpop.f32.mrf.mxu0
    %v3386 = vadd.f32 %v2666, %v3385
    %v3387 = vpop.f32.mrf.mxu0
    %v3388 = vadd.f32 %v2662, %v3387
    %v3389 = vpop.f32.mrf.mxu0
    %v3390 = vadd.f32 %v2666, %v3389
    %3391 = vdwg.mxu0
    %3392 = vmatprep.subr.bf16.mxu0 %v3156
    %3393 = vmatpush1.bf16.msra.mxu0 %v3155
    %3394 = vmatprep.subr.bf16.mxu0 %v3152
    %3395 = vmatpush1.bf16.msra.mxu0 %v3151
    %3396 = vmatprep.subr.bf16.mxu0 %v3148
    %3397 = vmatpush1.bf16.msra.mxu0 %v3147
    %3398 = vmatprep.subr.bf16.mxu0 %v3144
    %3399 = vmatpush1.bf16.msra.mxu0 %v3143
    %3400 = vmatprep.subr.bf16.mxu0 %v3140
    %3401 = vmatpush1.bf16.msra.mxu0 %v3139
    %3402 = vmatprep.subr.bf16.mxu0 %v3136
    %3403 = vmatpush1.bf16.msra.mxu0 %v3135
    %3404 = vmatprep.subr.bf16.mxu0 %v3132
    %3405 = vmatpush1.bf16.msra.mxu0 %v3131
    %3406 = vmatprep.subr.bf16.mxu0 %v3128
    %3407 = vmatpush1.bf16.msra.mxu0 %v3127
    %3408 = vmatprep.subr.bf16.mxu0 %v3188
    %3409 = vmatpush2.bf16.msra.mxu0 %v3187
    %3410 = vmatprep.subr.bf16.mxu0 %v3184
    %3411 = vmatpush2.bf16.msra.mxu0 %v3183
    %3412 = vmatprep.subr.bf16.mxu0 %v3180
    %3413 = vmatpush2.bf16.msra.mxu0 %v3179
    %3414 = vmatprep.subr.bf16.mxu0 %v3176
    %3415 = vmatpush2.bf16.msra.mxu0 %v3175
    %3416 = vmatprep.subr.bf16.mxu0 %v3172
    %3417 = vmatpush2.bf16.msra.mxu0 %v3171
    %3418 = vmatprep.subr.bf16.mxu0 %v3168
    %3419 = vmatpush2.bf16.msra.mxu0 %v3167
    %3420 = vmatprep.subr.bf16.mxu0 %v3164
    %3421 = vmatpush2.bf16.msra.mxu0 %v3163
    %3422 = vmatprep.subr.bf16.mxu0 %v3160
    %3423 = vmatpush2.bf16.msra.mxu0 %v3159
    %3424 = vmatprep.mubr.bf16.mxu0 %v2516
    %3425 = vmatmul.mubr.bf16.gmra.mxu0 %v2515
    %v3426 = vpop.f32.mrf.mxu0
    %v3427 = vadd.f32 %v3354, %v3426
    %v3428 = vpop.f32.mrf.mxu0
    %v3429 = vadd.f32 %v3356, %v3428
    %v3430 = vpop.f32.mrf.mxu0
    %v3431 = vadd.f32 %v3358, %v3430
    %v3432 = vpop.f32.mrf.mxu0
    %v3433 = vadd.f32 %v3360, %v3432
    %3434 = vmatprep.mubr.bf16.mxu0 %v2520
    %3435 = vmatmul.mubr.bf16.gmra.mxu0 %v2519
    %v3436 = vpop.f32.mrf.mxu0
    %v3437 = vadd.f32 %v3364, %v3436
    %v3438 = vpop.f32.mrf.mxu0
    %v3439 = vadd.f32 %v3366, %v3438
    %v3440 = vpop.f32.mrf.mxu0
    %v3441 = vadd.f32 %v3368, %v3440
    %v3442 = vpop.f32.mrf.mxu0
    %v3443 = vadd.f32 %v3370, %v3442
    %3444 = vmatprep.mubr.bf16.mxu0 %v2524
    %3445 = vmatmul.mubr.bf16.gmra.mxu0 %v2523
    %v3446 = vpop.f32.mrf.mxu0
    %v3447 = vadd.f32 %v3374, %v3446
    %v3448 = vpop.f32.mrf.mxu0
    %v3449 = vadd.f32 %v3376, %v3448
    %v3450 = vpop.f32.mrf.mxu0
    %v3451 = vadd.f32 %v3378, %v3450
    %v3452 = vpop.f32.mrf.mxu0
    %v3453 = vadd.f32 %v3380, %v3452
    %3454 = vmatprep.mubr.bf16.mxu0 %v2528
    %3455 = vmatmul.mubr.bf16.gmra.mxu0 %v2527
    %v3456 = vpop.f32.mrf.mxu0
    %v3457 = vadd.f32 %v3384, %v3456
    %v3458 = vpop.f32.mrf.mxu0
    %v3459 = vadd.f32 %v3386, %v3458
    %v3460 = vpop.f32.mrf.mxu0
    %v3461 = vadd.f32 %v3388, %v3460
    %v3462 = vpop.f32.mrf.mxu0
    %v3463 = vadd.f32 %v3390, %v3462
    %3464 = vdwg.mxu0
    %3465 = vmatprep.subr.bf16.mxu0 %v3094
    %3466 = vmatpush1.bf16.msra.mxu0 %v3093
    %3467 = vmatprep.subr.bf16.mxu0 %v3090
    %3468 = vmatpush1.bf16.msra.mxu0 %v3089
    %3469 = vmatprep.subr.bf16.mxu0 %v3086
    %3470 = vmatpush1.bf16.msra.mxu0 %v3085
    %3471 = vmatprep.subr.bf16.mxu0 %v3082
    %3472 = vmatpush1.bf16.msra.mxu0 %v3081
    %3473 = vmatprep.subr.bf16.mxu0 %v3078
    %3474 = vmatpush1.bf16.msra.mxu0 %v3077
    %3475 = vmatprep.subr.bf16.mxu0 %v3074
    %3476 = vmatpush1.bf16.msra.mxu0 %v3073
    %3477 = vmatprep.subr.bf16.mxu0 %v3070
    %3478 = vmatpush1.bf16.msra.mxu0 %v3069
    %3479 = vmatprep.subr.bf16.mxu0 %v3066
    %3480 = vmatpush1.bf16.msra.mxu0 %v3065
    %3481 = vmatprep.subr.bf16.mxu0 %v3126
    %3482 = vmatpush2.bf16.msra.mxu0 %v3125
    %3483 = vmatprep.subr.bf16.mxu0 %v3122
    %3484 = vmatpush2.bf16.msra.mxu0 %v3121
    %3485 = vmatprep.subr.bf16.mxu0 %v3118
    %3486 = vmatpush2.bf16.msra.mxu0 %v3117
    %3487 = vmatprep.subr.bf16.mxu0 %v3114
    %3488 = vmatpush2.bf16.msra.mxu0 %v3113
    %3489 = vmatprep.subr.bf16.mxu0 %v3110
    %3490 = vmatpush2.bf16.msra.mxu0 %v3109
    %3491 = vmatprep.subr.bf16.mxu0 %v3106
    %3492 = vmatpush2.bf16.msra.mxu0 %v3105
    %3493 = vmatprep.subr.bf16.mxu0 %v3102
    %3494 = vmatpush2.bf16.msra.mxu0 %v3101
    %3495 = vmatprep.subr.bf16.mxu0 %v3098
    %3496 = vmatpush2.bf16.msra.mxu0 %v3097
    %3497 = vmatprep.mubr.bf16.mxu0 %v2514
    %3498 = vmatmul.mubr.bf16.gmra.mxu0 %v2513
    %v3499 = vpop.f32.mrf.mxu0
    %v3500 = vadd.f32 %v2670, %v3499
    %v3501 = vpop.f32.mrf.mxu0
    %v3502 = vadd.f32 %v2674, %v3501
    %v3503 = vpop.f32.mrf.mxu0
    %v3504 = vadd.f32 %v2670, %v3503
    %v3505 = vpop.f32.mrf.mxu0
    %v3506 = vadd.f32 %v2674, %v3505
    %3507 = vmatprep.mubr.bf16.mxu0 %v2518
    %3508 = vmatmul.mubr.bf16.gmra.mxu0 %v2517
    %v3509 = vpop.f32.mrf.mxu0
    %v3510 = vadd.f32 %v2670, %v3509
    %v3511 = vpop.f32.mrf.mxu0
    %v3512 = vadd.f32 %v2674, %v3511
    %v3513 = vpop.f32.mrf.mxu0
    %v3514 = vadd.f32 %v2670, %v3513
    %v3515 = vpop.f32.mrf.mxu0
    %v3516 = vadd.f32 %v2674, %v3515
    %3517 = vmatprep.mubr.bf16.mxu0 %v2522
    %3518 = vmatmul.mubr.bf16.gmra.mxu0 %v2521
    %v3519 = vpop.f32.mrf.mxu0
    %v3520 = vadd.f32 %v2670, %v3519
    %v3521 = vpop.f32.mrf.mxu0
    %v3522 = vadd.f32 %v2674, %v3521
    %v3523 = vpop.f32.mrf.mxu0
    %v3524 = vadd.f32 %v2670, %v3523
    %v3525 = vpop.f32.mrf.mxu0
    %v3526 = vadd.f32 %v2674, %v3525
    %3527 = vmatprep.mubr.bf16.mxu0 %v2526
    %3528 = vmatmul.mubr.bf16.gmra.mxu0 %v2525
    %v3529 = vpop.f32.mrf.mxu0
    %v3530 = vadd.f32 %v2670, %v3529
    %v3531 = vpop.f32.mrf.mxu0
    %v3532 = vadd.f32 %v2674, %v3531
    %v3533 = vpop.f32.mrf.mxu0
    %v3534 = vadd.f32 %v2670, %v3533
    %v3535 = vpop.f32.mrf.mxu0
    %v3536 = vadd.f32 %v2674, %v3535
    %3537 = vdwg.mxu0
    %3538 = vmatprep.subr.bf16.mxu0 %v3158
    %3539 = vmatpush1.bf16.msra.mxu0 %v3157
    %3540 = vmatprep.subr.bf16.mxu0 %v3154
    %3541 = vmatpush1.bf16.msra.mxu0 %v3153
    %3542 = vmatprep.subr.bf16.mxu0 %v3150
    %3543 = vmatpush1.bf16.msra.mxu0 %v3149
    %3544 = vmatprep.subr.bf16.mxu0 %v3146
    %3545 = vmatpush1.bf16.msra.mxu0 %v3145
    %3546 = vmatprep.subr.bf16.mxu0 %v3142
    %3547 = vmatpush1.bf16.msra.mxu0 %v3141
    %3548 = vmatprep.subr.bf16.mxu0 %v3138
    %3549 = vmatpush1.bf16.msra.mxu0 %v3137
    %3550 = vmatprep.subr.bf16.mxu0 %v3134
    %3551 = vmatpush1.bf16.msra.mxu0 %v3133
    %3552 = vmatprep.subr.bf16.mxu0 %v3130
    %3553 = vmatpush1.bf16.msra.mxu0 %v3129
    %3554 = vmatprep.subr.bf16.mxu0 %v3190
    %3555 = vmatpush2.bf16.msra.mxu0 %v3189
    %3556 = vmatprep.subr.bf16.mxu0 %v3186
    %3557 = vmatpush2.bf16.msra.mxu0 %v3185
    %3558 = vmatprep.subr.bf16.mxu0 %v3182
    %3559 = vmatpush2.bf16.msra.mxu0 %v3181
    %3560 = vmatprep.subr.bf16.mxu0 %v3178
    %3561 = vmatpush2.bf16.msra.mxu0 %v3177
    %3562 = vmatprep.subr.bf16.mxu0 %v3174
    %3563 = vmatpush2.bf16.msra.mxu0 %v3173
    %3564 = vmatprep.subr.bf16.mxu0 %v3170
    %3565 = vmatpush2.bf16.msra.mxu0 %v3169
    %3566 = vmatprep.subr.bf16.mxu0 %v3166
    %3567 = vmatpush2.bf16.msra.mxu0 %v3165
    %3568 = vmatprep.subr.bf16.mxu0 %v3162
    %3569 = vmatpush2.bf16.msra.mxu0 %v3161
    %3570 = vmatprep.mubr.bf16.mxu0 %v2516
    %3571 = vmatmul.mubr.bf16.gmra.mxu0 %v2515
    %v3572 = vpop.f32.mrf.mxu0
    %v3573 = vadd.f32 %v3500, %v3572
    %v3574 = vpop.f32.mrf.mxu0
    %v3575 = vadd.f32 %v3502, %v3574
    %v3576 = vpop.f32.mrf.mxu0
    %v3577 = vadd.f32 %v3504, %v3576
    %v3578 = vpop.f32.mrf.mxu0
    %v3579 = vadd.f32 %v3506, %v3578
    %3580 = vmatprep.mubr.bf16.mxu0 %v2520
    %3581 = vmatmul.mubr.bf16.gmra.mxu0 %v2519
    %v3582 = vpop.f32.mrf.mxu0
    %v3583 = vadd.f32 %v3510, %v3582
    %v3584 = vpop.f32.mrf.mxu0
    %v3585 = vadd.f32 %v3512, %v3584
    %v3586 = vpop.f32.mrf.mxu0
    %v3587 = vadd.f32 %v3514, %v3586
    %v3588 = vpop.f32.mrf.mxu0
    %v3589 = vadd.f32 %v3516, %v3588
    %3590 = vmatprep.mubr.bf16.mxu0 %v2524
    %3591 = vmatmul.mubr.bf16.gmra.mxu0 %v2523
    %v3592 = vpop.f32.mrf.mxu0
    %v3593 = vadd.f32 %v3520, %v3592
    %v3594 = vpop.f32.mrf.mxu0
    %v3595 = vadd.f32 %v3522, %v3594
    %v3596 = vpop.f32.mrf.mxu0
    %v3597 = vadd.f32 %v3524, %v3596
    %v3598 = vpop.f32.mrf.mxu0
    %v3599 = vadd.f32 %v3526, %v3598
    %3600 = vmatprep.mubr.bf16.mxu0 %v2528
    %3601 = vmatmul.mubr.bf16.gmra.mxu0 %v2527
    %v3602 = vpop.f32.mrf.mxu0
    %v3603 = vadd.f32 %v3530, %v3602
    %v3604 = vpop.f32.mrf.mxu0
    %v3605 = vadd.f32 %v3532, %v3604
    %v3606 = vpop.f32.mrf.mxu0
    %v3607 = vadd.f32 %v3534, %v3606
    %v3608 = vpop.f32.mrf.mxu0
    %v3609 = vadd.f32 %v3536, %v3608
    %3610 = vdwg.mxu0
    %v3611 = vmax.f32 %v3427, 0.0
    %v3612 = vmax.f32 %v3429, 0.0
    %v3613 = vmax.f32 %v3573, 0.0
    %v3614 = vmax.f32 %v3575, 0.0
    %v3615 = vmax.f32 %v3431, 0.0
    %v3616 = vmax.f32 %v3433, 0.0
    %v3617 = vmax.f32 %v3577, 0.0
    %v3618 = vmax.f32 %v3579, 0.0
    %v3619 = vmax.f32 %v3437, 0.0
    %v3620 = vmax.f32 %v3439, 0.0
    %v3621 = vmax.f32 %v3583, 0.0
    %v3622 = vmax.f32 %v3585, 0.0
    %v3623 = vmax.f32 %v3441, 0.0
    %v3624 = vmax.f32 %v3443, 0.0
    %v3625 = vmax.f32 %v3587, 0.0
    %v3626 = vmax.f32 %v3589, 0.0
    %v3627 = vmax.f32 %v3447, 0.0
    %v3628 = vmax.f32 %v3449, 0.0
    %v3629 = vmax.f32 %v3593, 0.0
    %v3630 = vmax.f32 %v3595, 0.0
    %v3631 = vmax.f32 %v3451, 0.0
    %v3632 = vmax.f32 %v3453, 0.0
    %v3633 = vmax.f32 %v3597, 0.0
    %v3634 = vmax.f32 %v3599, 0.0
    %v3635 = vmax.f32 %v3457, 0.0
    %v3636 = vmax.f32 %v3459, 0.0
    %v3637 = vmax.f32 %v3603, 0.0
    %v3638 = vmax.f32 %v3605, 0.0
    %v3639 = vmax.f32 %v3461, 0.0
    %v3640 = vmax.f32 %v3463, 0.0
    %v3641 = vmax.f32 %v3607, 0.0
    %v3642 = vmax.f32 %v3609, 0.0
    %v3643 = vpack.c.bf16 %v3615, %v3611
    %v3644 = vpack.c.bf16 %v3616, %v3612
    %v3645 = vpack.c.bf16 %v3617, %v3613
    %v3646 = vpack.c.bf16 %v3618, %v3614
    %v3647 = vpack.c.bf16 %v3623, %v3619
    %v3648 = vpack.c.bf16 %v3624, %v3620
    %v3649 = vpack.c.bf16 %v3625, %v3621
    %v3650 = vpack.c.bf16 %v3626, %v3622
    %v3651 = vpack.c.bf16 %v3631, %v3627
    %v3652 = vpack.c.bf16 %v3632, %v3628
    %v3653 = vpack.c.bf16 %v3633, %v3629
    %v3654 = vpack.c.bf16 %v3634, %v3630
    %v3655 = vpack.c.bf16 %v3639, %v3635
    %v3656 = vpack.c.bf16 %v3640, %v3636
    %v3657 = vpack.c.bf16 %v3641, %v3637
    %v3658 = vpack.c.bf16 %v3642, %v3638
    %v3659 = vld [vmem:[#allocation15] sm:$0xff]
    %v3660 = vld [vmem:[#allocation15 + $0x8] sm:$0xff]
    %v3661 = vld [vmem:[#allocation15 + $0x10] sm:$0xff]
    %v3662 = vld [vmem:[#allocation15 + $0x18] sm:$0xff]
    %v3663 = vld [vmem:[#allocation15 + $0x20] sm:$0xff]
    %v3664 = vld [vmem:[#allocation15 + $0x28] sm:$0xff]
    %v3665 = vld [vmem:[#allocation15 + $0x30] sm:$0xff]
    %v3666 = vld [vmem:[#allocation15 + $0x38] sm:$0xff]
    %v3667 = vld [vmem:[#allocation15 + $0x40] sm:$0xff]
    %v3668 = vld [vmem:[#allocation15 + $0x48] sm:$0xff]
    %v3669 = vld [vmem:[#allocation15 + $0x50] sm:$0xff]
    %v3670 = vld [vmem:[#allocation15 + $0x58] sm:$0xff]
    %v3671 = vld [vmem:[#allocation15 + $0x60] sm:$0xff]
    %v3672 = vld [vmem:[#allocation15 + $0x68] sm:$0xff]
    %v3673 = vld [vmem:[#allocation15 + $0x70] sm:$0xff]
    %v3674 = vld [vmem:[#allocation15 + $0x78] sm:$0xff]
    %v3675 = vld [vmem:[#allocation15 + $0x80] sm:$0xff]
    %v3676 = vld [vmem:[#allocation15 + $0x88] sm:$0xff]
    %v3677 = vld [vmem:[#allocation15 + $0x90] sm:$0xff]
    %v3678 = vld [vmem:[#allocation15 + $0x98] sm:$0xff]
    %v3679 = vld [vmem:[#allocation15 + $0xa0] sm:$0xff]
    %v3680 = vld [vmem:[#allocation15 + $0xa8] sm:$0xff]
    %v3681 = vld [vmem:[#allocation15 + $0xb0] sm:$0xff]
    %v3682 = vld [vmem:[#allocation15 + $0xb8] sm:$0xff]
    %v3683 = vld [vmem:[#allocation15 + $0xc0] sm:$0xff]
    %v3684 = vld [vmem:[#allocation15 + $0xc8] sm:$0xff]
    %v3685 = vld [vmem:[#allocation15 + $0xd0] sm:$0xff]
    %v3686 = vld [vmem:[#allocation15 + $0xd8] sm:$0xff]
    %v3687 = vld [vmem:[#allocation15 + $0xe0] sm:$0xff]
    %v3688 = vld [vmem:[#allocation15 + $0xe8] sm:$0xff]
    %v3689 = vld [vmem:[#allocation15 + $0xf0] sm:$0xff]
    %v3690 = vld [vmem:[#allocation15 + $0xf8] sm:$0xff]
    %v3691 = vld [vmem:[#allocation15 + $0x100] sm:$0xff]
    %v3692 = vld [vmem:[#allocation15 + $0x108] sm:$0xff]
    %v3693 = vld [vmem:[#allocation15 + $0x110] sm:$0xff]
    %v3694 = vld [vmem:[#allocation15 + $0x118] sm:$0xff]
    %v3695 = vld [vmem:[#allocation15 + $0x120] sm:$0xff]
    %v3696 = vld [vmem:[#allocation15 + $0x128] sm:$0xff]
    %v3697 = vld [vmem:[#allocation15 + $0x130] sm:$0xff]
    %v3698 = vld [vmem:[#allocation15 + $0x138] sm:$0xff]
    %v3699 = vld [vmem:[#allocation15 + $0x140] sm:$0xff]
    %v3700 = vld [vmem:[#allocation15 + $0x148] sm:$0xff]
    %v3701 = vld [vmem:[#allocation15 + $0x150] sm:$0xff]
    %v3702 = vld [vmem:[#allocation15 + $0x158] sm:$0xff]
    %v3703 = vld [vmem:[#allocation15 + $0x160] sm:$0xff]
    %v3704 = vld [vmem:[#allocation15 + $0x168] sm:$0xff]
    %v3705 = vld [vmem:[#allocation15 + $0x170] sm:$0xff]
    %v3706 = vld [vmem:[#allocation15 + $0x178] sm:$0xff]
    %v3707 = vld [vmem:[#allocation15 + $0x180] sm:$0xff]
    %v3708 = vld [vmem:[#allocation15 + $0x188] sm:$0xff]
    %v3709 = vld [vmem:[#allocation15 + $0x190] sm:$0xff]
    %v3710 = vld [vmem:[#allocation15 + $0x198] sm:$0xff]
    %v3711 = vld [vmem:[#allocation15 + $0x1a0] sm:$0xff]
    %v3712 = vld [vmem:[#allocation15 + $0x1a8] sm:$0xff]
    %v3713 = vld [vmem:[#allocation15 + $0x1b0] sm:$0xff]
    %v3714 = vld [vmem:[#allocation15 + $0x1b8] sm:$0xff]
    %v3715 = vld [vmem:[#allocation15 + $0x1c0] sm:$0xff]
    %v3716 = vld [vmem:[#allocation15 + $0x1c8] sm:$0xff]
    %v3717 = vld [vmem:[#allocation15 + $0x1d0] sm:$0xff]
    %v3718 = vld [vmem:[#allocation15 + $0x1d8] sm:$0xff]
    %v3719 = vld [vmem:[#allocation15 + $0x1e0] sm:$0xff]
    %v3720 = vld [vmem:[#allocation15 + $0x1e8] sm:$0xff]
    %v3721 = vld [vmem:[#allocation15 + $0x1f0] sm:$0xff]
    %v3722 = vld [vmem:[#allocation15 + $0x1f8] sm:$0xff]
    %v3723 = vld [vmem:[#allocation15 + $0x200] sm:$0xff]
    %v3724 = vld [vmem:[#allocation15 + $0x208] sm:$0xff]
    %v3725 = vld [vmem:[#allocation15 + $0x210] sm:$0xff]
    %v3726 = vld [vmem:[#allocation15 + $0x218] sm:$0xff]
    %v3727 = vld [vmem:[#allocation15 + $0x220] sm:$0xff]
    %v3728 = vld [vmem:[#allocation15 + $0x228] sm:$0xff]
    %v3729 = vld [vmem:[#allocation15 + $0x230] sm:$0xff]
    %v3730 = vld [vmem:[#allocation15 + $0x238] sm:$0xff]
    %v3731 = vld [vmem:[#allocation15 + $0x240] sm:$0xff]
    %v3732 = vld [vmem:[#allocation15 + $0x248] sm:$0xff]
    %v3733 = vld [vmem:[#allocation15 + $0x250] sm:$0xff]
    %v3734 = vld [vmem:[#allocation15 + $0x258] sm:$0xff]
    %v3735 = vld [vmem:[#allocation15 + $0x260] sm:$0xff]
    %v3736 = vld [vmem:[#allocation15 + $0x268] sm:$0xff]
    %v3737 = vld [vmem:[#allocation15 + $0x270] sm:$0xff]
    %v3738 = vld [vmem:[#allocation15 + $0x278] sm:$0xff]
    %v3739 = vld [vmem:[#allocation15 + $0x280] sm:$0xff]
    %v3740 = vld [vmem:[#allocation15 + $0x288] sm:$0xff]
    %v3741 = vld [vmem:[#allocation15 + $0x290] sm:$0xff]
    %v3742 = vld [vmem:[#allocation15 + $0x298] sm:$0xff]
    %v3743 = vld [vmem:[#allocation15 + $0x2a0] sm:$0xff]
    %v3744 = vld [vmem:[#allocation15 + $0x2a8] sm:$0xff]
    %v3745 = vld [vmem:[#allocation15 + $0x2b0] sm:$0xff]
    %v3746 = vld [vmem:[#allocation15 + $0x2b8] sm:$0xff]
    %v3747 = vld [vmem:[#allocation15 + $0x2c0] sm:$0xff]
    %v3748 = vld [vmem:[#allocation15 + $0x2c8] sm:$0xff]
    %v3749 = vld [vmem:[#allocation15 + $0x2d0] sm:$0xff]
    %v3750 = vld [vmem:[#allocation15 + $0x2d8] sm:$0xff]
    %v3751 = vld [vmem:[#allocation15 + $0x2e0] sm:$0xff]
    %v3752 = vld [vmem:[#allocation15 + $0x2e8] sm:$0xff]
    %v3753 = vld [vmem:[#allocation15 + $0x2f0] sm:$0xff]
    %v3754 = vld [vmem:[#allocation15 + $0x2f8] sm:$0xff]
    %v3755 = vld [vmem:[#allocation15 + $0x300] sm:$0xff]
    %v3756 = vld [vmem:[#allocation15 + $0x308] sm:$0xff]
    %v3757 = vld [vmem:[#allocation15 + $0x310] sm:$0xff]
    %v3758 = vld [vmem:[#allocation15 + $0x318] sm:$0xff]
    %v3759 = vld [vmem:[#allocation15 + $0x320] sm:$0xff]
    %v3760 = vld [vmem:[#allocation15 + $0x328] sm:$0xff]
    %v3761 = vld [vmem:[#allocation15 + $0x330] sm:$0xff]
    %v3762 = vld [vmem:[#allocation15 + $0x338] sm:$0xff]
    %v3763 = vld [vmem:[#allocation15 + $0x340] sm:$0xff]
    %v3764 = vld [vmem:[#allocation15 + $0x348] sm:$0xff]
    %v3765 = vld [vmem:[#allocation15 + $0x350] sm:$0xff]
    %v3766 = vld [vmem:[#allocation15 + $0x358] sm:$0xff]
    %v3767 = vld [vmem:[#allocation15 + $0x360] sm:$0xff]
    %v3768 = vld [vmem:[#allocation15 + $0x368] sm:$0xff]
    %v3769 = vld [vmem:[#allocation15 + $0x370] sm:$0xff]
    %v3770 = vld [vmem:[#allocation15 + $0x378] sm:$0xff]
    %v3771 = vld [vmem:[#allocation15 + $0x380] sm:$0xff]
    %v3772 = vld [vmem:[#allocation15 + $0x388] sm:$0xff]
    %v3773 = vld [vmem:[#allocation15 + $0x390] sm:$0xff]
    %v3774 = vld [vmem:[#allocation15 + $0x398] sm:$0xff]
    %v3775 = vld [vmem:[#allocation15 + $0x3a0] sm:$0xff]
    %v3776 = vld [vmem:[#allocation15 + $0x3a8] sm:$0xff]
    %v3777 = vld [vmem:[#allocation15 + $0x3b0] sm:$0xff]
    %v3778 = vld [vmem:[#allocation15 + $0x3b8] sm:$0xff]
    %v3779 = vld [vmem:[#allocation15 + $0x3c0] sm:$0xff]
    %v3780 = vld [vmem:[#allocation15 + $0x3c8] sm:$0xff]
    %v3781 = vld [vmem:[#allocation15 + $0x3d0] sm:$0xff]
    %v3782 = vld [vmem:[#allocation15 + $0x3d8] sm:$0xff]
    %v3783 = vld [vmem:[#allocation15 + $0x3e0] sm:$0xff]
    %v3784 = vld [vmem:[#allocation15 + $0x3e8] sm:$0xff]
    %v3785 = vld [vmem:[#allocation15 + $0x3f0] sm:$0xff]
    %v3786 = vld [vmem:[#allocation15 + $0x3f8] sm:$0xff]
    %v3787 = vld [vmem:[#allocation15 + $0x400] sm:$0xff]
    %v3788 = vld [vmem:[#allocation15 + $0x408] sm:$0xff]
    %v3789 = vld [vmem:[#allocation15 + $0x410] sm:$0xff]
    %v3790 = vld [vmem:[#allocation15 + $0x418] sm:$0xff]
    %v3791 = vld [vmem:[#allocation15 + $0x420] sm:$0xff]
    %v3792 = vld [vmem:[#allocation15 + $0x428] sm:$0xff]
    %v3793 = vld [vmem:[#allocation15 + $0x430] sm:$0xff]
    %v3794 = vld [vmem:[#allocation15 + $0x438] sm:$0xff]
    %v3795 = vld [vmem:[#allocation15 + $0x440] sm:$0xff]
    %v3796 = vld [vmem:[#allocation15 + $0x448] sm:$0xff]
    %v3797 = vld [vmem:[#allocation15 + $0x450] sm:$0xff]
    %v3798 = vld [vmem:[#allocation15 + $0x458] sm:$0xff]
    %v3799 = vld [vmem:[#allocation15 + $0x460] sm:$0xff]
    %v3800 = vld [vmem:[#allocation15 + $0x468] sm:$0xff]
    %v3801 = vld [vmem:[#allocation15 + $0x470] sm:$0xff]
    %v3802 = vld [vmem:[#allocation15 + $0x478] sm:$0xff]
    %v3803 = vld [vmem:[#allocation15 + $0x480] sm:$0xff]
    %v3804 = vld [vmem:[#allocation15 + $0x488] sm:$0xff]
    %v3805 = vld [vmem:[#allocation15 + $0x490] sm:$0xff]
    %v3806 = vld [vmem:[#allocation15 + $0x498] sm:$0xff]
    %v3807 = vld [vmem:[#allocation15 + $0x4a0] sm:$0xff]
    %v3808 = vld [vmem:[#allocation15 + $0x4a8] sm:$0xff]
    %v3809 = vld [vmem:[#allocation15 + $0x4b0] sm:$0xff]
    %v3810 = vld [vmem:[#allocation15 + $0x4b8] sm:$0xff]
    %v3811 = vld [vmem:[#allocation15 + $0x4c0] sm:$0xff]
    %v3812 = vld [vmem:[#allocation15 + $0x4c8] sm:$0xff]
    %v3813 = vld [vmem:[#allocation15 + $0x4d0] sm:$0xff]
    %v3814 = vld [vmem:[#allocation15 + $0x4d8] sm:$0xff]
    %v3815 = vld [vmem:[#allocation15 + $0x4e0] sm:$0xff]
    %v3816 = vld [vmem:[#allocation15 + $0x4e8] sm:$0xff]
    %v3817 = vld [vmem:[#allocation15 + $0x4f0] sm:$0xff]
    %v3818 = vld [vmem:[#allocation15 + $0x4f8] sm:$0xff]
    %v3819 = vld [vmem:[#allocation15 + $0x500] sm:$0xff]
    %v3820 = vld [vmem:[#allocation15 + $0x508] sm:$0xff]
    %v3821 = vld [vmem:[#allocation15 + $0x510] sm:$0xff]
    %v3822 = vld [vmem:[#allocation15 + $0x518] sm:$0xff]
    %v3823 = vld [vmem:[#allocation15 + $0x520] sm:$0xff]
    %v3824 = vld [vmem:[#allocation15 + $0x528] sm:$0xff]
    %v3825 = vld [vmem:[#allocation15 + $0x530] sm:$0xff]
    %v3826 = vld [vmem:[#allocation15 + $0x538] sm:$0xff]
    %v3827 = vld [vmem:[#allocation15 + $0x540] sm:$0xff]
    %v3828 = vld [vmem:[#allocation15 + $0x548] sm:$0xff]
    %v3829 = vld [vmem:[#allocation15 + $0x550] sm:$0xff]
    %v3830 = vld [vmem:[#allocation15 + $0x558] sm:$0xff]
    %v3831 = vld [vmem:[#allocation15 + $0x560] sm:$0xff]
    %v3832 = vld [vmem:[#allocation15 + $0x568] sm:$0xff]
    %v3833 = vld [vmem:[#allocation15 + $0x570] sm:$0xff]
    %v3834 = vld [vmem:[#allocation15 + $0x578] sm:$0xff]
    %v3835 = vld [vmem:[#allocation15 + $0x580] sm:$0xff]
    %v3836 = vld [vmem:[#allocation15 + $0x588] sm:$0xff]
    %v3837 = vld [vmem:[#allocation15 + $0x590] sm:$0xff]
    %v3838 = vld [vmem:[#allocation15 + $0x598] sm:$0xff]
    %v3839 = vld [vmem:[#allocation15 + $0x5a0] sm:$0xff]
    %v3840 = vld [vmem:[#allocation15 + $0x5a8] sm:$0xff]
    %v3841 = vld [vmem:[#allocation15 + $0x5b0] sm:$0xff]
    %v3842 = vld [vmem:[#allocation15 + $0x5b8] sm:$0xff]
    %v3843 = vld [vmem:[#allocation15 + $0x5c0] sm:$0xff]
    %v3844 = vld [vmem:[#allocation15 + $0x5c8] sm:$0xff]
    %v3845 = vld [vmem:[#allocation15 + $0x5d0] sm:$0xff]
    %v3846 = vld [vmem:[#allocation15 + $0x5d8] sm:$0xff]
    %v3847 = vld [vmem:[#allocation15 + $0x5e0] sm:$0xff]
    %v3848 = vld [vmem:[#allocation15 + $0x5e8] sm:$0xff]
    %v3849 = vld [vmem:[#allocation15 + $0x5f0] sm:$0xff]
    %v3850 = vld [vmem:[#allocation15 + $0x5f8] sm:$0xff]
    %v3851 = vld [vmem:[%s6] sm:$0x3f]
    %v3853 = vlaneseq
    %v3854 = vshrl.u32 %v3853, 7
    %v3855 = vsub.s32 0, %v3854
    %v3856 = vrot.slane %v3851, %v3855
    %v3857 = vlaneseq
    %v3858 = vshrl.u32 %v3857, 7
    %v3859 = vsub.s32 1, %v3858
    %v3860 = vrot.slane %v3851, %v3859
    %v3861 = vlaneseq
    %v3862 = vshrl.u32 %v3861, 7
    %v3863 = vsub.s32 2, %v3862
    %v3864 = vrot.slane %v3851, %v3863
    %v3865 = vlaneseq
    %v3866 = vshrl.u32 %v3865, 7
    %v3867 = vsub.s32 3, %v3866
    %v3868 = vrot.slane %v3851, %v3867
    %v3869 = vlaneseq
    %v3870 = vshrl.u32 %v3869, 7
    %v3871 = vsub.s32 4, %v3870
    %v3872 = vrot.slane %v3851, %v3871
    %v3873 = vlaneseq
    %v3874 = vshrl.u32 %v3873, 7
    %v3875 = vsub.s32 5, %v3874
    %v3876 = vrot.slane %v3851, %v3875
    %v4075 = vunpack.c.l.b16 %v3659
    %v4076 = vunpack.c.h.b16 %v3659
    %v4077 = vunpack.c.l.b16 %v3660
    %v4078 = vunpack.c.h.b16 %v3660
    %v4079 = vunpack.c.l.b16 %v3661
    %v4080 = vunpack.c.h.b16 %v3661
    %v4081 = vunpack.c.l.b16 %v3662
    %v4082 = vunpack.c.h.b16 %v3662
    %v4083 = vunpack.c.l.b16 %v3663
    %v4084 = vunpack.c.h.b16 %v3663
    %v4085 = vunpack.c.l.b16 %v3664
    %v4086 = vunpack.c.h.b16 %v3664
    %v4087 = vunpack.c.l.b16 %v3665
    %v4088 = vunpack.c.h.b16 %v3665
    %v4089 = vunpack.c.l.b16 %v3666
    %v4090 = vunpack.c.h.b16 %v3666
    %v4091 = vunpack.c.l.b16 %v3667
    %v4092 = vunpack.c.h.b16 %v3667
    %v4093 = vunpack.c.l.b16 %v3668
    %v4094 = vunpack.c.h.b16 %v3668
    %v4095 = vunpack.c.l.b16 %v3669
    %v4096 = vunpack.c.h.b16 %v3669
    %v4097 = vunpack.c.l.b16 %v3670
    %v4098 = vunpack.c.h.b16 %v3670
    %v4099 = vunpack.c.l.b16 %v3671
    %v4100 = vunpack.c.h.b16 %v3671
    %v4101 = vunpack.c.l.b16 %v3672
    %v4102 = vunpack.c.h.b16 %v3672
    %v4103 = vunpack.c.l.b16 %v3673
    %v4104 = vunpack.c.h.b16 %v3673
    %v4105 = vunpack.c.l.b16 %v3674
    %v4106 = vunpack.c.h.b16 %v3674
    %v4107 = vunpack.c.l.b16 %v3675
    %v4108 = vunpack.c.h.b16 %v3675
    %v4109 = vunpack.c.l.b16 %v3676
    %v4110 = vunpack.c.h.b16 %v3676
    %v4111 = vunpack.c.l.b16 %v3677
    %v4112 = vunpack.c.h.b16 %v3677
    %v4113 = vunpack.c.l.b16 %v3678
    %v4114 = vunpack.c.h.b16 %v3678
    %v4115 = vunpack.c.l.b16 %v3679
    %v4116 = vunpack.c.h.b16 %v3679
    %v4117 = vunpack.c.l.b16 %v3680
    %v4118 = vunpack.c.h.b16 %v3680
    %v4119 = vunpack.c.l.b16 %v3681
    %v4120 = vunpack.c.h.b16 %v3681
    %v4121 = vunpack.c.l.b16 %v3682
    %v4122 = vunpack.c.h.b16 %v3682
    %v4123 = vunpack.c.l.b16 %v3683
    %v4124 = vunpack.c.h.b16 %v3683
    %v4125 = vunpack.c.l.b16 %v3684
    %v4126 = vunpack.c.h.b16 %v3684
    %v4127 = vunpack.c.l.b16 %v3685
    %v4128 = vunpack.c.h.b16 %v3685
    %v4129 = vunpack.c.l.b16 %v3686
    %v4130 = vunpack.c.h.b16 %v3686
    %v4131 = vunpack.c.l.b16 %v3687
    %v4132 = vunpack.c.h.b16 %v3687
    %v4133 = vunpack.c.l.b16 %v3688
    %v4134 = vunpack.c.h.b16 %v3688
    %v4135 = vunpack.c.l.b16 %v3689
    %v4136 = vunpack.c.h.b16 %v3689
    %v4137 = vunpack.c.l.b16 %v3690
    %v4138 = vunpack.c.h.b16 %v3690
    %v4139 = vunpack.c.l.b16 %v3691
    %v4140 = vunpack.c.h.b16 %v3691
    %v4141 = vunpack.c.l.b16 %v3692
    %v4142 = vunpack.c.h.b16 %v3692
    %v4143 = vunpack.c.l.b16 %v3693
    %v4144 = vunpack.c.h.b16 %v3693
    %v4145 = vunpack.c.l.b16 %v3694
    %v4146 = vunpack.c.h.b16 %v3694
    %v4147 = vunpack.c.l.b16 %v3695
    %v4148 = vunpack.c.h.b16 %v3695
    %v4149 = vunpack.c.l.b16 %v3696
    %v4150 = vunpack.c.h.b16 %v3696
    %v4151 = vunpack.c.l.b16 %v3697
    %v4152 = vunpack.c.h.b16 %v3697
    %v4153 = vunpack.c.l.b16 %v3698
    %v4154 = vunpack.c.h.b16 %v3698
    %v4155 = vunpack.c.l.b16 %v3699
    %v4156 = vunpack.c.h.b16 %v3699
    %v4157 = vunpack.c.l.b16 %v3700
    %v4158 = vunpack.c.h.b16 %v3700
    %v4159 = vunpack.c.l.b16 %v3701
    %v4160 = vunpack.c.h.b16 %v3701
    %v4161 = vunpack.c.l.b16 %v3702
    %v4162 = vunpack.c.h.b16 %v3702
    %v4163 = vunpack.c.l.b16 %v3703
    %v4164 = vunpack.c.h.b16 %v3703
    %v4165 = vunpack.c.l.b16 %v3704
    %v4166 = vunpack.c.h.b16 %v3704
    %v4167 = vunpack.c.l.b16 %v3705
    %v4168 = vunpack.c.h.b16 %v3705
    %v4169 = vunpack.c.l.b16 %v3706
    %v4170 = vunpack.c.h.b16 %v3706
    %v4171 = vunpack.c.l.b16 %v3707
    %v4172 = vunpack.c.h.b16 %v3707
    %v4173 = vunpack.c.l.b16 %v3708
    %v4174 = vunpack.c.h.b16 %v3708
    %v4175 = vunpack.c.l.b16 %v3709
    %v4176 = vunpack.c.h.b16 %v3709
    %v4177 = vunpack.c.l.b16 %v3710
    %v4178 = vunpack.c.h.b16 %v3710
    %v4179 = vunpack.c.l.b16 %v3711
    %v4180 = vunpack.c.h.b16 %v3711
    %v4181 = vunpack.c.l.b16 %v3712
    %v4182 = vunpack.c.h.b16 %v3712
    %v4183 = vunpack.c.l.b16 %v3713
    %v4184 = vunpack.c.h.b16 %v3713
    %v4185 = vunpack.c.l.b16 %v3714
    %v4186 = vunpack.c.h.b16 %v3714
    %v4187 = vunpack.c.l.b16 %v3715
    %v4188 = vunpack.c.h.b16 %v3715
    %v4189 = vunpack.c.l.b16 %v3716
    %v4190 = vunpack.c.h.b16 %v3716
    %v4191 = vunpack.c.l.b16 %v3717
    %v4192 = vunpack.c.h.b16 %v3717
    %v4193 = vunpack.c.l.b16 %v3718
    %v4194 = vunpack.c.h.b16 %v3718
    %v4195 = vunpack.c.l.b16 %v3719
    %v4196 = vunpack.c.h.b16 %v3719
    %v4197 = vunpack.c.l.b16 %v3720
    %v4198 = vunpack.c.h.b16 %v3720
    %v4199 = vunpack.c.l.b16 %v3721
    %v4200 = vunpack.c.h.b16 %v3721
    %v4201 = vunpack.c.l.b16 %v3722
    %v4202 = vunpack.c.h.b16 %v3722
    %v4203 = vunpack.c.l.b16 %v3723
    %v4204 = vunpack.c.h.b16 %v3723
    %v4205 = vunpack.c.l.b16 %v3724
    %v4206 = vunpack.c.h.b16 %v3724
    %v4207 = vunpack.c.l.b16 %v3725
    %v4208 = vunpack.c.h.b16 %v3725
    %v4209 = vunpack.c.l.b16 %v3726
    %v4210 = vunpack.c.h.b16 %v3726
    %v4211 = vunpack.c.l.b16 %v3727
    %v4212 = vunpack.c.h.b16 %v3727
    %v4213 = vunpack.c.l.b16 %v3728
    %v4214 = vunpack.c.h.b16 %v3728
    %v4215 = vunpack.c.l.b16 %v3729
    %v4216 = vunpack.c.h.b16 %v3729
    %v4217 = vunpack.c.l.b16 %v3730
    %v4218 = vunpack.c.h.b16 %v3730
    %v4219 = vunpack.c.l.b16 %v3731
    %v4220 = vunpack.c.h.b16 %v3731
    %v4221 = vunpack.c.l.b16 %v3732
    %v4222 = vunpack.c.h.b16 %v3732
    %v4223 = vunpack.c.l.b16 %v3733
    %v4224 = vunpack.c.h.b16 %v3733
    %v4225 = vunpack.c.l.b16 %v3734
    %v4226 = vunpack.c.h.b16 %v3734
    %v4227 = vunpack.c.l.b16 %v3735
    %v4228 = vunpack.c.h.b16 %v3735
    %v4229 = vunpack.c.l.b16 %v3736
    %v4230 = vunpack.c.h.b16 %v3736
    %v4231 = vunpack.c.l.b16 %v3737
    %v4232 = vunpack.c.h.b16 %v3737
    %v4233 = vunpack.c.l.b16 %v3738
    %v4234 = vunpack.c.h.b16 %v3738
    %v4235 = vunpack.c.l.b16 %v3739
    %v4236 = vunpack.c.h.b16 %v3739
    %v4237 = vunpack.c.l.b16 %v3740
    %v4238 = vunpack.c.h.b16 %v3740
    %v4239 = vunpack.c.l.b16 %v3741
    %v4240 = vunpack.c.h.b16 %v3741
    %v4241 = vunpack.c.l.b16 %v3742
    %v4242 = vunpack.c.h.b16 %v3742
    %v4243 = vunpack.c.l.b16 %v3743
    %v4244 = vunpack.c.h.b16 %v3743
    %v4245 = vunpack.c.l.b16 %v3744
    %v4246 = vunpack.c.h.b16 %v3744
    %v4247 = vunpack.c.l.b16 %v3745
    %v4248 = vunpack.c.h.b16 %v3745
    %v4249 = vunpack.c.l.b16 %v3746
    %v4250 = vunpack.c.h.b16 %v3746
    %v4251 = vunpack.c.l.b16 %v3747
    %v4252 = vunpack.c.h.b16 %v3747
    %v4253 = vunpack.c.l.b16 %v3748
    %v4254 = vunpack.c.h.b16 %v3748
    %v4255 = vunpack.c.l.b16 %v3749
    %v4256 = vunpack.c.h.b16 %v3749
    %v4257 = vunpack.c.l.b16 %v3750
    %v4258 = vunpack.c.h.b16 %v3750
    %v4259 = vunpack.c.l.b16 %v3751
    %v4260 = vunpack.c.h.b16 %v3751
    %v4261 = vunpack.c.l.b16 %v3752
    %v4262 = vunpack.c.h.b16 %v3752
    %v4263 = vunpack.c.l.b16 %v3753
    %v4264 = vunpack.c.h.b16 %v3753
    %v4265 = vunpack.c.l.b16 %v3754
    %v4266 = vunpack.c.h.b16 %v3754
    %v4267 = vunpack.c.l.b16 %v3755
    %v4268 = vunpack.c.h.b16 %v3755
    %v4269 = vunpack.c.l.b16 %v3756
    %v4270 = vunpack.c.h.b16 %v3756
    %v4271 = vunpack.c.l.b16 %v3757
    %v4272 = vunpack.c.h.b16 %v3757
    %v4273 = vunpack.c.l.b16 %v3758
    %v4274 = vunpack.c.h.b16 %v3758
    %v4275 = vunpack.c.l.b16 %v3759
    %v4276 = vunpack.c.h.b16 %v3759
    %v4277 = vunpack.c.l.b16 %v3760
    %v4278 = vunpack.c.h.b16 %v3760
    %v4279 = vunpack.c.l.b16 %v3761
    %v4280 = vunpack.c.h.b16 %v3761
    %v4281 = vunpack.c.l.b16 %v3762
    %v4282 = vunpack.c.h.b16 %v3762
    %v4283 = vunpack.c.l.b16 %v3763
    %v4284 = vunpack.c.h.b16 %v3763
    %v4285 = vunpack.c.l.b16 %v3764
    %v4286 = vunpack.c.h.b16 %v3764
    %v4287 = vunpack.c.l.b16 %v3765
    %v4288 = vunpack.c.h.b16 %v3765
    %v4289 = vunpack.c.l.b16 %v3766
    %v4290 = vunpack.c.h.b16 %v3766
    %v4291 = vunpack.c.l.b16 %v3767
    %v4292 = vunpack.c.h.b16 %v3767
    %v4293 = vunpack.c.l.b16 %v3768
    %v4294 = vunpack.c.h.b16 %v3768
    %v4295 = vunpack.c.l.b16 %v3769
    %v4296 = vunpack.c.h.b16 %v3769
    %v4297 = vunpack.c.l.b16 %v3770
    %v4298 = vunpack.c.h.b16 %v3770
    %v4299 = vunpack.c.l.b16 %v3771
    %v4300 = vunpack.c.h.b16 %v3771
    %v4301 = vunpack.c.l.b16 %v3772
    %v4302 = vunpack.c.h.b16 %v3772
    %v4303 = vunpack.c.l.b16 %v3773
    %v4304 = vunpack.c.h.b16 %v3773
    %v4305 = vunpack.c.l.b16 %v3774
    %v4306 = vunpack.c.h.b16 %v3774
    %v4307 = vunpack.c.l.b16 %v3775
    %v4308 = vunpack.c.h.b16 %v3775
    %v4309 = vunpack.c.l.b16 %v3776
    %v4310 = vunpack.c.h.b16 %v3776
    %v4311 = vunpack.c.l.b16 %v3777
    %v4312 = vunpack.c.h.b16 %v3777
    %v4313 = vunpack.c.l.b16 %v3778
    %v4314 = vunpack.c.h.b16 %v3778
    %v4315 = vunpack.c.l.b16 %v3779
    %v4316 = vunpack.c.h.b16 %v3779
    %v4317 = vunpack.c.l.b16 %v3780
    %v4318 = vunpack.c.h.b16 %v3780
    %v4319 = vunpack.c.l.b16 %v3781
    %v4320 = vunpack.c.h.b16 %v3781
    %v4321 = vunpack.c.l.b16 %v3782
    %v4322 = vunpack.c.h.b16 %v3782
    %v4323 = vunpack.c.l.b16 %v3783
    %v4324 = vunpack.c.h.b16 %v3783
    %v4325 = vunpack.c.l.b16 %v3784
    %v4326 = vunpack.c.h.b16 %v3784
    %v4327 = vunpack.c.l.b16 %v3785
    %v4328 = vunpack.c.h.b16 %v3785
    %v4329 = vunpack.c.l.b16 %v3786
    %v4330 = vunpack.c.h.b16 %v3786
    %v4331 = vunpack.c.l.b16 %v3787
    %v4332 = vunpack.c.h.b16 %v3787
    %v4333 = vunpack.c.l.b16 %v3788
    %v4334 = vunpack.c.h.b16 %v3788
    %v4335 = vunpack.c.l.b16 %v3789
    %v4336 = vunpack.c.h.b16 %v3789
    %v4337 = vunpack.c.l.b16 %v3790
    %v4338 = vunpack.c.h.b16 %v3790
    %v4339 = vunpack.c.l.b16 %v3791
    %v4340 = vunpack.c.h.b16 %v3791
    %v4341 = vunpack.c.l.b16 %v3792
    %v4342 = vunpack.c.h.b16 %v3792
    %v4343 = vunpack.c.l.b16 %v3793
    %v4344 = vunpack.c.h.b16 %v3793
    %v4345 = vunpack.c.l.b16 %v3794
    %v4346 = vunpack.c.h.b16 %v3794
    %v4347 = vunpack.c.l.b16 %v3795
    %v4348 = vunpack.c.h.b16 %v3795
    %v4349 = vunpack.c.l.b16 %v3796
    %v4350 = vunpack.c.h.b16 %v3796
    %v4351 = vunpack.c.l.b16 %v3797
    %v4352 = vunpack.c.h.b16 %v3797
    %v4353 = vunpack.c.l.b16 %v3798
    %v4354 = vunpack.c.h.b16 %v3798
    %v4355 = vunpack.c.l.b16 %v3799
    %v4356 = vunpack.c.h.b16 %v3799
    %v4357 = vunpack.c.l.b16 %v3800
    %v4358 = vunpack.c.h.b16 %v3800
    %v4359 = vunpack.c.l.b16 %v3801
    %v4360 = vunpack.c.h.b16 %v3801
    %v4361 = vunpack.c.l.b16 %v3802
    %v4362 = vunpack.c.h.b16 %v3802
    %v4363 = vunpack.c.l.b16 %v3803
    %v4364 = vunpack.c.h.b16 %v3803
    %v4365 = vunpack.c.l.b16 %v3804
    %v4366 = vunpack.c.h.b16 %v3804
    %v4367 = vunpack.c.l.b16 %v3805
    %v4368 = vunpack.c.h.b16 %v3805
    %v4369 = vunpack.c.l.b16 %v3806
    %v4370 = vunpack.c.h.b16 %v3806
    %v4371 = vunpack.c.l.b16 %v3807
    %v4372 = vunpack.c.h.b16 %v3807
    %v4373 = vunpack.c.l.b16 %v3808
    %v4374 = vunpack.c.h.b16 %v3808
    %v4375 = vunpack.c.l.b16 %v3809
    %v4376 = vunpack.c.h.b16 %v3809
    %v4377 = vunpack.c.l.b16 %v3810
    %v4378 = vunpack.c.h.b16 %v3810
    %v4379 = vunpack.c.l.b16 %v3811
    %v4380 = vunpack.c.h.b16 %v3811
    %v4381 = vunpack.c.l.b16 %v3812
    %v4382 = vunpack.c.h.b16 %v3812
    %v4383 = vunpack.c.l.b16 %v3813
    %v4384 = vunpack.c.h.b16 %v3813
    %v4385 = vunpack.c.l.b16 %v3814
    %v4386 = vunpack.c.h.b16 %v3814
    %v4387 = vunpack.c.l.b16 %v3815
    %v4388 = vunpack.c.h.b16 %v3815
    %v4389 = vunpack.c.l.b16 %v3816
    %v4390 = vunpack.c.h.b16 %v3816
    %v4391 = vunpack.c.l.b16 %v3817
    %v4392 = vunpack.c.h.b16 %v3817
    %v4393 = vunpack.c.l.b16 %v3818
    %v4394 = vunpack.c.h.b16 %v3818
    %v4395 = vunpack.c.l.b16 %v3819
    %v4396 = vunpack.c.h.b16 %v3819
    %v4397 = vunpack.c.l.b16 %v3820
    %v4398 = vunpack.c.h.b16 %v3820
    %v4399 = vunpack.c.l.b16 %v3821
    %v4400 = vunpack.c.h.b16 %v3821
    %v4401 = vunpack.c.l.b16 %v3822
    %v4402 = vunpack.c.h.b16 %v3822
    %v4403 = vunpack.c.l.b16 %v3823
    %v4404 = vunpack.c.h.b16 %v3823
    %v4405 = vunpack.c.l.b16 %v3824
    %v4406 = vunpack.c.h.b16 %v3824
    %v4407 = vunpack.c.l.b16 %v3825
    %v4408 = vunpack.c.h.b16 %v3825
    %v4409 = vunpack.c.l.b16 %v3826
    %v4410 = vunpack.c.h.b16 %v3826
    %v4411 = vunpack.c.l.b16 %v3827
    %v4412 = vunpack.c.h.b16 %v3827
    %v4413 = vunpack.c.l.b16 %v3828
    %v4414 = vunpack.c.h.b16 %v3828
    %v4415 = vunpack.c.l.b16 %v3829
    %v4416 = vunpack.c.h.b16 %v3829
    %v4417 = vunpack.c.l.b16 %v3830
    %v4418 = vunpack.c.h.b16 %v3830
    %v4419 = vunpack.c.l.b16 %v3831
    %v4420 = vunpack.c.h.b16 %v3831
    %v4421 = vunpack.c.l.b16 %v3832
    %v4422 = vunpack.c.h.b16 %v3832
    %v4423 = vunpack.c.l.b16 %v3833
    %v4424 = vunpack.c.h.b16 %v3833
    %v4425 = vunpack.c.l.b16 %v3834
    %v4426 = vunpack.c.h.b16 %v3834
    %v4427 = vunpack.c.l.b16 %v3835
    %v4428 = vunpack.c.h.b16 %v3835
    %v4429 = vunpack.c.l.b16 %v3836
    %v4430 = vunpack.c.h.b16 %v3836
    %v4431 = vunpack.c.l.b16 %v3837
    %v4432 = vunpack.c.h.b16 %v3837
    %v4433 = vunpack.c.l.b16 %v3838
    %v4434 = vunpack.c.h.b16 %v3838
    %v4435 = vunpack.c.l.b16 %v3839
    %v4436 = vunpack.c.h.b16 %v3839
    %v4437 = vunpack.c.l.b16 %v3840
    %v4438 = vunpack.c.h.b16 %v3840
    %v4439 = vunpack.c.l.b16 %v3841
    %v4440 = vunpack.c.h.b16 %v3841
    %v4441 = vunpack.c.l.b16 %v3842
    %v4442 = vunpack.c.h.b16 %v3842
    %v4443 = vunpack.c.l.b16 %v3843
    %v4444 = vunpack.c.h.b16 %v3843
    %v4445 = vunpack.c.l.b16 %v3844
    %v4446 = vunpack.c.h.b16 %v3844
    %v4447 = vunpack.c.l.b16 %v3845
    %v4448 = vunpack.c.h.b16 %v3845
    %v4449 = vunpack.c.l.b16 %v3846
    %v4450 = vunpack.c.h.b16 %v3846
    %v4451 = vunpack.c.l.b16 %v3847
    %v4452 = vunpack.c.h.b16 %v3847
    %v4453 = vunpack.c.l.b16 %v3848
    %v4454 = vunpack.c.h.b16 %v3848
    %v4455 = vunpack.c.l.b16 %v3849
    %v4456 = vunpack.c.h.b16 %v3849
    %v4457 = vunpack.c.l.b16 %v3850
    %v4458 = vunpack.c.h.b16 %v3850
    %v4459 = vpack.c.b16 %v4081, %v4075
    %v4460 = vpack.c.b16 %v4082, %v4076
    %v4461 = vpack.c.b16 %v4083, %v4077
    %v4462 = vpack.c.b16 %v4084, %v4078
    %v4463 = vpack.c.b16 %v4085, %v4079
    %v4464 = vpack.c.b16 %v4086, %v4080
    %v4465 = vpack.c.b16 %v4093, %v4087
    %v4466 = vpack.c.b16 %v4094, %v4088
    %v4467 = vpack.c.b16 %v4095, %v4089
    %v4468 = vpack.c.b16 %v4096, %v4090
    %v4469 = vpack.c.b16 %v4097, %v4091
    %v4470 = vpack.c.b16 %v4098, %v4092
    %v4471 = vpack.c.b16 %v4105, %v4099
    %v4472 = vpack.c.b16 %v4106, %v4100
    %v4473 = vpack.c.b16 %v4107, %v4101
    %v4474 = vpack.c.b16 %v4108, %v4102
    %v4475 = vpack.c.b16 %v4109, %v4103
    %v4476 = vpack.c.b16 %v4110, %v4104
    %v4477 = vpack.c.b16 %v4117, %v4111
    %v4478 = vpack.c.b16 %v4118, %v4112
    %v4479 = vpack.c.b16 %v4119, %v4113
    %v4480 = vpack.c.b16 %v4120, %v4114
    %v4481 = vpack.c.b16 %v4121, %v4115
    %v4482 = vpack.c.b16 %v4122, %v4116
    %v4483 = vpack.c.b16 %v4129, %v4123
    %v4484 = vpack.c.b16 %v4130, %v4124
    %v4485 = vpack.c.b16 %v4131, %v4125
    %v4486 = vpack.c.b16 %v4132, %v4126
    %v4487 = vpack.c.b16 %v4133, %v4127
    %v4488 = vpack.c.b16 %v4134, %v4128
    %v4489 = vpack.c.b16 %v4141, %v4135
    %v4490 = vpack.c.b16 %v4142, %v4136
    %v4491 = vpack.c.b16 %v4143, %v4137
    %v4492 = vpack.c.b16 %v4144, %v4138
    %v4493 = vpack.c.b16 %v4145, %v4139
    %v4494 = vpack.c.b16 %v4146, %v4140
    %v4495 = vpack.c.b16 %v4153, %v4147
    %v4496 = vpack.c.b16 %v4154, %v4148
    %v4497 = vpack.c.b16 %v4155, %v4149
    %v4498 = vpack.c.b16 %v4156, %v4150
    %v4499 = vpack.c.b16 %v4157, %v4151
    %v4500 = vpack.c.b16 %v4158, %v4152
    %v4501 = vpack.c.b16 %v4165, %v4159
    %v4502 = vpack.c.b16 %v4166, %v4160
    %v4503 = vpack.c.b16 %v4167, %v4161
    %v4504 = vpack.c.b16 %v4168, %v4162
    %v4505 = vpack.c.b16 %v4169, %v4163
    %v4506 = vpack.c.b16 %v4170, %v4164
    %v4507 = vpack.c.b16 %v4177, %v4171
    %v4508 = vpack.c.b16 %v4178, %v4172
    %v4509 = vpack.c.b16 %v4179, %v4173
    %v4510 = vpack.c.b16 %v4180, %v4174
    %v4511 = vpack.c.b16 %v4181, %v4175
    %v4512 = vpack.c.b16 %v4182, %v4176
    %v4513 = vpack.c.b16 %v4189, %v4183
    %v4514 = vpack.c.b16 %v4190, %v4184
    %v4515 = vpack.c.b16 %v4191, %v4185
    %v4516 = vpack.c.b16 %v4192, %v4186
    %v4517 = vpack.c.b16 %v4193, %v4187
    %v4518 = vpack.c.b16 %v4194, %v4188
    %v4519 = vpack.c.b16 %v4201, %v4195
    %v4520 = vpack.c.b16 %v4202, %v4196
    %v4521 = vpack.c.b16 %v4203, %v4197
    %v4522 = vpack.c.b16 %v4204, %v4198
    %v4523 = vpack.c.b16 %v4205, %v4199
    %v4524 = vpack.c.b16 %v4206, %v4200
    %v4525 = vpack.c.b16 %v4213, %v4207
    %v4526 = vpack.c.b16 %v4214, %v4208
    %v4527 = vpack.c.b16 %v4215, %v4209
    %v4528 = vpack.c.b16 %v4216, %v4210
    %v4529 = vpack.c.b16 %v4217, %v4211
    %v4530 = vpack.c.b16 %v4218, %v4212
    %v4531 = vpack.c.b16 %v4225, %v4219
    %v4532 = vpack.c.b16 %v4226, %v4220
    %v4533 = vpack.c.b16 %v4227, %v4221
    %v4534 = vpack.c.b16 %v4228, %v4222
    %v4535 = vpack.c.b16 %v4229, %v4223
    %v4536 = vpack.c.b16 %v4230, %v4224
    %v4537 = vpack.c.b16 %v4237, %v4231
    %v4538 = vpack.c.b16 %v4238, %v4232
    %v4539 = vpack.c.b16 %v4239, %v4233
    %v4540 = vpack.c.b16 %v4240, %v4234
    %v4541 = vpack.c.b16 %v4241, %v4235
    %v4542 = vpack.c.b16 %v4242, %v4236
    %v4543 = vpack.c.b16 %v4249, %v4243
    %v4544 = vpack.c.b16 %v4250, %v4244
    %v4545 = vpack.c.b16 %v4251, %v4245
    %v4546 = vpack.c.b16 %v4252, %v4246
    %v4547 = vpack.c.b16 %v4253, %v4247
    %v4548 = vpack.c.b16 %v4254, %v4248
    %v4549 = vpack.c.b16 %v4261, %v4255
    %v4550 = vpack.c.b16 %v4262, %v4256
    %v4551 = vpack.c.b16 %v4263, %v4257
    %v4552 = vpack.c.b16 %v4264, %v4258
    %v4553 = vpack.c.b16 %v4265, %v4259
    %v4554 = vpack.c.b16 %v4266, %v4260
    %v4555 = vpack.c.b16 %v4273, %v4267
    %v4556 = vpack.c.b16 %v4274, %v4268
    %v4557 = vpack.c.b16 %v4275, %v4269
    %v4558 = vpack.c.b16 %v4276, %v4270
    %v4559 = vpack.c.b16 %v4277, %v4271
    %v4560 = vpack.c.b16 %v4278, %v4272
    %v4561 = vpack.c.b16 %v4285, %v4279
    %v4562 = vpack.c.b16 %v4286, %v4280
    %v4563 = vpack.c.b16 %v4287, %v4281
    %v4564 = vpack.c.b16 %v4288, %v4282
    %v4565 = vpack.c.b16 %v4289, %v4283
    %v4566 = vpack.c.b16 %v4290, %v4284
    %v4567 = vpack.c.b16 %v4297, %v4291
    %v4568 = vpack.c.b16 %v4298, %v4292
    %v4569 = vpack.c.b16 %v4299, %v4293
    %v4570 = vpack.c.b16 %v4300, %v4294
    %v4571 = vpack.c.b16 %v4301, %v4295
    %v4572 = vpack.c.b16 %v4302, %v4296
    %v4573 = vpack.c.b16 %v4309, %v4303
    %v4574 = vpack.c.b16 %v4310, %v4304
    %v4575 = vpack.c.b16 %v4311, %v4305
    %v4576 = vpack.c.b16 %v4312, %v4306
    %v4577 = vpack.c.b16 %v4313, %v4307
    %v4578 = vpack.c.b16 %v4314, %v4308
    %v4579 = vpack.c.b16 %v4321, %v4315
    %v4580 = vpack.c.b16 %v4322, %v4316
    %v4581 = vpack.c.b16 %v4323, %v4317
    %v4582 = vpack.c.b16 %v4324, %v4318
    %v4583 = vpack.c.b16 %v4325, %v4319
    %v4584 = vpack.c.b16 %v4326, %v4320
    %v4585 = vpack.c.b16 %v4333, %v4327
    %v4586 = vpack.c.b16 %v4334, %v4328
    %v4587 = vpack.c.b16 %v4335, %v4329
    %v4588 = vpack.c.b16 %v4336, %v4330
    %v4589 = vpack.c.b16 %v4337, %v4331
    %v4590 = vpack.c.b16 %v4338, %v4332
    %v4591 = vpack.c.b16 %v4345, %v4339
    %v4592 = vpack.c.b16 %v4346, %v4340
    %v4593 = vpack.c.b16 %v4347, %v4341
    %v4594 = vpack.c.b16 %v4348, %v4342
    %v4595 = vpack.c.b16 %v4349, %v4343
    %v4596 = vpack.c.b16 %v4350, %v4344
    %v4597 = vpack.c.b16 %v4357, %v4351
    %v4598 = vpack.c.b16 %v4358, %v4352
    %v4599 = vpack.c.b16 %v4359, %v4353
    %v4600 = vpack.c.b16 %v4360, %v4354
    %v4601 = vpack.c.b16 %v4361, %v4355
    %v4602 = vpack.c.b16 %v4362, %v4356
    %v4603 = vpack.c.b16 %v4369, %v4363
    %v4604 = vpack.c.b16 %v4370, %v4364
    %v4605 = vpack.c.b16 %v4371, %v4365
    %v4606 = vpack.c.b16 %v4372, %v4366
    %v4607 = vpack.c.b16 %v4373, %v4367
    %v4608 = vpack.c.b16 %v4374, %v4368
    %v4609 = vpack.c.b16 %v4381, %v4375
    %v4610 = vpack.c.b16 %v4382, %v4376
    %v4611 = vpack.c.b16 %v4383, %v4377
    %v4612 = vpack.c.b16 %v4384, %v4378
    %v4613 = vpack.c.b16 %v4385, %v4379
    %v4614 = vpack.c.b16 %v4386, %v4380
    %v4615 = vpack.c.b16 %v4393, %v4387
    %v4616 = vpack.c.b16 %v4394, %v4388
    %v4617 = vpack.c.b16 %v4395, %v4389
    %v4618 = vpack.c.b16 %v4396, %v4390
    %v4619 = vpack.c.b16 %v4397, %v4391
    %v4620 = vpack.c.b16 %v4398, %v4392
    %v4621 = vpack.c.b16 %v4405, %v4399
    %v4622 = vpack.c.b16 %v4406, %v4400
    %v4623 = vpack.c.b16 %v4407, %v4401
    %v4624 = vpack.c.b16 %v4408, %v4402
    %v4625 = vpack.c.b16 %v4409, %v4403
    %v4626 = vpack.c.b16 %v4410, %v4404
    %v4627 = vpack.c.b16 %v4417, %v4411
    %v4628 = vpack.c.b16 %v4418, %v4412
    %v4629 = vpack.c.b16 %v4419, %v4413
    %v4630 = vpack.c.b16 %v4420, %v4414
    %v4631 = vpack.c.b16 %v4421, %v4415
    %v4632 = vpack.c.b16 %v4422, %v4416
    %v4633 = vpack.c.b16 %v4429, %v4423
    %v4634 = vpack.c.b16 %v4430, %v4424
    %v4635 = vpack.c.b16 %v4431, %v4425
    %v4636 = vpack.c.b16 %v4432, %v4426
    %v4637 = vpack.c.b16 %v4433, %v4427
    %v4638 = vpack.c.b16 %v4434, %v4428
    %v4639 = vpack.c.b16 %v4441, %v4435
    %v4640 = vpack.c.b16 %v4442, %v4436
    %v4641 = vpack.c.b16 %v4443, %v4437
    %v4642 = vpack.c.b16 %v4444, %v4438
    %v4643 = vpack.c.b16 %v4445, %v4439
    %v4644 = vpack.c.b16 %v4446, %v4440
    %v4645 = vpack.c.b16 %v4453, %v4447
    %v4646 = vpack.c.b16 %v4454, %v4448
    %v4647 = vpack.c.b16 %v4455, %v4449
    %v4648 = vpack.c.b16 %v4456, %v4450
    %v4649 = vpack.c.b16 %v4457, %v4451
    %v4650 = vpack.c.b16 %v4458, %v4452
    %4843 = vmatprep.subr.bf16.mxu0 %v4502
    %4844 = vmatpush1.bf16.msra.mxu0 %v4501
    %4845 = vmatprep.subr.bf16.mxu0 %v4496
    %4846 = vmatpush1.bf16.msra.mxu0 %v4495
    %4847 = vmatprep.subr.bf16.mxu0 %v4490
    %4848 = vmatpush1.bf16.msra.mxu0 %v4489
    %4849 = vmatprep.subr.bf16.mxu0 %v4484
    %4850 = vmatpush1.bf16.msra.mxu0 %v4483
    %4851 = vmatprep.subr.bf16.mxu0 %v4478
    %4852 = vmatpush1.bf16.msra.mxu0 %v4477
    %4853 = vmatprep.subr.bf16.mxu0 %v4472
    %4854 = vmatpush1.bf16.msra.mxu0 %v4471
    %4855 = vmatprep.subr.bf16.mxu0 %v4466
    %4856 = vmatpush1.bf16.msra.mxu0 %v4465
    %4857 = vmatprep.subr.bf16.mxu0 %v4460
    %4858 = vmatpush1.bf16.msra.mxu0 %v4459
    %4859 = vmatprep.subr.bf16.mxu0 %v4550
    %4860 = vmatpush2.bf16.msra.mxu0 %v4549
    %4861 = vmatprep.subr.bf16.mxu0 %v4544
    %4862 = vmatpush2.bf16.msra.mxu0 %v4543
    %4863 = vmatprep.subr.bf16.mxu0 %v4538
    %4864 = vmatpush2.bf16.msra.mxu0 %v4537
    %4865 = vmatprep.subr.bf16.mxu0 %v4532
    %4866 = vmatpush2.bf16.msra.mxu0 %v4531
    %4867 = vmatprep.subr.bf16.mxu0 %v4526
    %4868 = vmatpush2.bf16.msra.mxu0 %v4525
    %4869 = vmatprep.subr.bf16.mxu0 %v4520
    %4870 = vmatpush2.bf16.msra.mxu0 %v4519
    %4871 = vmatprep.subr.bf16.mxu0 %v4514
    %4872 = vmatpush2.bf16.msra.mxu0 %v4513
    %4873 = vmatprep.subr.bf16.mxu0 %v4508
    %4874 = vmatpush2.bf16.msra.mxu0 %v4507
    %4875 = vmatprep.mubr.bf16.mxu0 %v3644
    %4876 = vmatmul.mubr.bf16.gmra.mxu0 %v3643
    %v4877 = vpop.f32.mrf.mxu0
    %v4878 = vadd.f32 %v3856, %v4877
    %v4879 = vpop.f32.mrf.mxu0
    %v4880 = vadd.f32 %v3860, %v4879
    %v4881 = vpop.f32.mrf.mxu0
    %v4882 = vadd.f32 %v3856, %v4881
    %v4883 = vpop.f32.mrf.mxu0
    %v4884 = vadd.f32 %v3860, %v4883
    %4885 = vmatprep.mubr.bf16.mxu0 %v3648
    %4886 = vmatmul.mubr.bf16.gmra.mxu0 %v3647
    %v4887 = vpop.f32.mrf.mxu0
    %v4888 = vadd.f32 %v3856, %v4887
    %v4889 = vpop.f32.mrf.mxu0
    %v4890 = vadd.f32 %v3860, %v4889
    %v4891 = vpop.f32.mrf.mxu0
    %v4892 = vadd.f32 %v3856, %v4891
    %v4893 = vpop.f32.mrf.mxu0
    %v4894 = vadd.f32 %v3860, %v4893
    %4895 = vmatprep.mubr.bf16.mxu0 %v3652
    %4896 = vmatmul.mubr.bf16.gmra.mxu0 %v3651
    %v4897 = vpop.f32.mrf.mxu0
    %v4898 = vadd.f32 %v3856, %v4897
    %v4899 = vpop.f32.mrf.mxu0
    %v4900 = vadd.f32 %v3860, %v4899
    %v4901 = vpop.f32.mrf.mxu0
    %v4902 = vadd.f32 %v3856, %v4901
    %v4903 = vpop.f32.mrf.mxu0
    %v4904 = vadd.f32 %v3860, %v4903
    %4905 = vmatprep.mubr.bf16.mxu0 %v3656
    %4906 = vmatmul.mubr.bf16.gmra.mxu0 %v3655
    %v4907 = vpop.f32.mrf.mxu0
    %v4908 = vadd.f32 %v3856, %v4907
    %v4909 = vpop.f32.mrf.mxu0
    %v4910 = vadd.f32 %v3860, %v4909
    %v4911 = vpop.f32.mrf.mxu0
    %v4912 = vadd.f32 %v3856, %v4911
    %v4913 = vpop.f32.mrf.mxu0
    %v4914 = vadd.f32 %v3860, %v4913
    %4915 = vdwg.mxu0
    %4916 = vmatprep.subr.bf16.mxu0 %v4598
    %4917 = vmatpush1.bf16.msra.mxu0 %v4597
    %4918 = vmatprep.subr.bf16.mxu0 %v4592
    %4919 = vmatpush1.bf16.msra.mxu0 %v4591
    %4920 = vmatprep.subr.bf16.mxu0 %v4586
    %4921 = vmatpush1.bf16.msra.mxu0 %v4585
    %4922 = vmatprep.subr.bf16.mxu0 %v4580
    %4923 = vmatpush1.bf16.msra.mxu0 %v4579
    %4924 = vmatprep.subr.bf16.mxu0 %v4574
    %4925 = vmatpush1.bf16.msra.mxu0 %v4573
    %4926 = vmatprep.subr.bf16.mxu0 %v4568
    %4927 = vmatpush1.bf16.msra.mxu0 %v4567
    %4928 = vmatprep.subr.bf16.mxu0 %v4562
    %4929 = vmatpush1.bf16.msra.mxu0 %v4561
    %4930 = vmatprep.subr.bf16.mxu0 %v4556
    %4931 = vmatpush1.bf16.msra.mxu0 %v4555
    %4932 = vmatprep.subr.bf16.mxu0 %v4646
    %4933 = vmatpush2.bf16.msra.mxu0 %v4645
    %4934 = vmatprep.subr.bf16.mxu0 %v4640
    %4935 = vmatpush2.bf16.msra.mxu0 %v4639
    %4936 = vmatprep.subr.bf16.mxu0 %v4634
    %4937 = vmatpush2.bf16.msra.mxu0 %v4633
    %4938 = vmatprep.subr.bf16.mxu0 %v4628
    %4939 = vmatpush2.bf16.msra.mxu0 %v4627
    %4940 = vmatprep.subr.bf16.mxu0 %v4622
    %4941 = vmatpush2.bf16.msra.mxu0 %v4621
    %4942 = vmatprep.subr.bf16.mxu0 %v4616
    %4943 = vmatpush2.bf16.msra.mxu0 %v4615
    %4944 = vmatprep.subr.bf16.mxu0 %v4610
    %4945 = vmatpush2.bf16.msra.mxu0 %v4609
    %4946 = vmatprep.subr.bf16.mxu0 %v4604
    %4947 = vmatpush2.bf16.msra.mxu0 %v4603
    %4948 = vmatprep.mubr.bf16.mxu0 %v3646
    %4949 = vmatmul.mubr.bf16.gmra.mxu0 %v3645
    %v4950 = vpop.f32.mrf.mxu0
    %v4951 = vadd.f32 %v4878, %v4950
    %v4952 = vpop.f32.mrf.mxu0
    %v4953 = vadd.f32 %v4880, %v4952
    %v4954 = vpop.f32.mrf.mxu0
    %v4955 = vadd.f32 %v4882, %v4954
    %v4956 = vpop.f32.mrf.mxu0
    %v4957 = vadd.f32 %v4884, %v4956
    %4958 = vmatprep.mubr.bf16.mxu0 %v3650
    %4959 = vmatmul.mubr.bf16.gmra.mxu0 %v3649
    %v4960 = vpop.f32.mrf.mxu0
    %v4961 = vadd.f32 %v4888, %v4960
    %v4962 = vpop.f32.mrf.mxu0
    %v4963 = vadd.f32 %v4890, %v4962
    %v4964 = vpop.f32.mrf.mxu0
    %v4965 = vadd.f32 %v4892, %v4964
    %v4966 = vpop.f32.mrf.mxu0
    %v4967 = vadd.f32 %v4894, %v4966
    %4968 = vmatprep.mubr.bf16.mxu0 %v3654
    %4969 = vmatmul.mubr.bf16.gmra.mxu0 %v3653
    %v4970 = vpop.f32.mrf.mxu0
    %v4971 = vadd.f32 %v4898, %v4970
    %v4972 = vpop.f32.mrf.mxu0
    %v4973 = vadd.f32 %v4900, %v4972
    %v4974 = vpop.f32.mrf.mxu0
    %v4975 = vadd.f32 %v4902, %v4974
    %v4976 = vpop.f32.mrf.mxu0
    %v4977 = vadd.f32 %v4904, %v4976
    %4978 = vmatprep.mubr.bf16.mxu0 %v3658
    %4979 = vmatmul.mubr.bf16.gmra.mxu0 %v3657
    %v4980 = vpop.f32.mrf.mxu0
    %v4981 = vadd.f32 %v4908, %v4980
    %v4982 = vpop.f32.mrf.mxu0
    %v4983 = vadd.f32 %v4910, %v4982
    %v4984 = vpop.f32.mrf.mxu0
    %v4985 = vadd.f32 %v4912, %v4984
    %v4986 = vpop.f32.mrf.mxu0
    %v4987 = vadd.f32 %v4914, %v4986
    %4988 = vdwg.mxu0
    %4989 = vmatprep.subr.bf16.mxu0 %v4504
    %4990 = vmatpush1.bf16.msra.mxu0 %v4503
    %4991 = vmatprep.subr.bf16.mxu0 %v4498
    %4992 = vmatpush1.bf16.msra.mxu0 %v4497
    %4993 = vmatprep.subr.bf16.mxu0 %v4492
    %4994 = vmatpush1.bf16.msra.mxu0 %v4491
    %4995 = vmatprep.subr.bf16.mxu0 %v4486
    %4996 = vmatpush1.bf16.msra.mxu0 %v4485
    %4997 = vmatprep.subr.bf16.mxu0 %v4480
    %4998 = vmatpush1.bf16.msra.mxu0 %v4479
    %4999 = vmatprep.subr.bf16.mxu0 %v4474
    %5000 = vmatpush1.bf16.msra.mxu0 %v4473
    %5001 = vmatprep.subr.bf16.mxu0 %v4468
    %5002 = vmatpush1.bf16.msra.mxu0 %v4467
    %5003 = vmatprep.subr.bf16.mxu0 %v4462
    %5004 = vmatpush1.bf16.msra.mxu0 %v4461
    %5005 = vmatprep.subr.bf16.mxu0 %v4552
    %5006 = vmatpush2.bf16.msra.mxu0 %v4551
    %5007 = vmatprep.subr.bf16.mxu0 %v4546
    %5008 = vmatpush2.bf16.msra.mxu0 %v4545
    %5009 = vmatprep.subr.bf16.mxu0 %v4540
    %5010 = vmatpush2.bf16.msra.mxu0 %v4539
    %5011 = vmatprep.subr.bf16.mxu0 %v4534
    %5012 = vmatpush2.bf16.msra.mxu0 %v4533
    %5013 = vmatprep.subr.bf16.mxu0 %v4528
    %5014 = vmatpush2.bf16.msra.mxu0 %v4527
    %5015 = vmatprep.subr.bf16.mxu0 %v4522
    %5016 = vmatpush2.bf16.msra.mxu0 %v4521
    %5017 = vmatprep.subr.bf16.mxu0 %v4516
    %5018 = vmatpush2.bf16.msra.mxu0 %v4515
    %5019 = vmatprep.subr.bf16.mxu0 %v4510
    %5020 = vmatpush2.bf16.msra.mxu0 %v4509
    %5021 = vmatprep.mubr.bf16.mxu0 %v3644
    %5022 = vmatmul.mubr.bf16.gmra.mxu0 %v3643
    %v5023 = vpop.f32.mrf.mxu0
    %v5024 = vadd.f32 %v3864, %v5023
    %v5025 = vpop.f32.mrf.mxu0
    %v5026 = vadd.f32 %v3868, %v5025
    %v5027 = vpop.f32.mrf.mxu0
    %v5028 = vadd.f32 %v3864, %v5027
    %v5029 = vpop.f32.mrf.mxu0
    %v5030 = vadd.f32 %v3868, %v5029
    %5031 = vmatprep.mubr.bf16.mxu0 %v3648
    %5032 = vmatmul.mubr.bf16.gmra.mxu0 %v3647
    %v5033 = vpop.f32.mrf.mxu0
    %v5034 = vadd.f32 %v3864, %v5033
    %v5035 = vpop.f32.mrf.mxu0
    %v5036 = vadd.f32 %v3868, %v5035
    %v5037 = vpop.f32.mrf.mxu0
    %v5038 = vadd.f32 %v3864, %v5037
    %v5039 = vpop.f32.mrf.mxu0
    %v5040 = vadd.f32 %v3868, %v5039
    %5041 = vmatprep.mubr.bf16.mxu0 %v3652
    %5042 = vmatmul.mubr.bf16.gmra.mxu0 %v3651
    %v5043 = vpop.f32.mrf.mxu0
    %v5044 = vadd.f32 %v3864, %v5043
    %v5045 = vpop.f32.mrf.mxu0
    %v5046 = vadd.f32 %v3868, %v5045
    %v5047 = vpop.f32.mrf.mxu0
    %v5048 = vadd.f32 %v3864, %v5047
    %v5049 = vpop.f32.mrf.mxu0
    %v5050 = vadd.f32 %v3868, %v5049
    %5051 = vmatprep.mubr.bf16.mxu0 %v3656
    %5052 = vmatmul.mubr.bf16.gmra.mxu0 %v3655
    %v5053 = vpop.f32.mrf.mxu0
    %v5054 = vadd.f32 %v3864, %v5053
    %v5055 = vpop.f32.mrf.mxu0
    %v5056 = vadd.f32 %v3868, %v5055
    %v5057 = vpop.f32.mrf.mxu0
    %v5058 = vadd.f32 %v3864, %v5057
    %v5059 = vpop.f32.mrf.mxu0
    %v5060 = vadd.f32 %v3868, %v5059
    %5061 = vdwg.mxu0
    %5062 = vmatprep.subr.bf16.mxu0 %v4600
    %5063 = vmatpush1.bf16.msra.mxu0 %v4599
    %5064 = vmatprep.subr.bf16.mxu0 %v4594
    %5065 = vmatpush1.bf16.msra.mxu0 %v4593
    %5066 = vmatprep.subr.bf16.mxu0 %v4588
    %5067 = vmatpush1.bf16.msra.mxu0 %v4587
    %5068 = vmatprep.subr.bf16.mxu0 %v4582
    %5069 = vmatpush1.bf16.msra.mxu0 %v4581
    %5070 = vmatprep.subr.bf16.mxu0 %v4576
    %5071 = vmatpush1.bf16.msra.mxu0 %v4575
    %5072 = vmatprep.subr.bf16.mxu0 %v4570
    %5073 = vmatpush1.bf16.msra.mxu0 %v4569
    %5074 = vmatprep.subr.bf16.mxu0 %v4564
    %5075 = vmatpush1.bf16.msra.mxu0 %v4563
    %5076 = vmatprep.subr.bf16.mxu0 %v4558
    %5077 = vmatpush1.bf16.msra.mxu0 %v4557
    %5078 = vmatprep.subr.bf16.mxu0 %v4648
    %5079 = vmatpush2.bf16.msra.mxu0 %v4647
    %5080 = vmatprep.subr.bf16.mxu0 %v4642
    %5081 = vmatpush2.bf16.msra.mxu0 %v4641
    %5082 = vmatprep.subr.bf16.mxu0 %v4636
    %5083 = vmatpush2.bf16.msra.mxu0 %v4635
    %5084 = vmatprep.subr.bf16.mxu0 %v4630
    %5085 = vmatpush2.bf16.msra.mxu0 %v4629
    %5086 = vmatprep.subr.bf16.mxu0 %v4624
    %5087 = vmatpush2.bf16.msra.mxu0 %v4623
    %5088 = vmatprep.subr.bf16.mxu0 %v4618
    %5089 = vmatpush2.bf16.msra.mxu0 %v4617
    %5090 = vmatprep.subr.bf16.mxu0 %v4612
    %5091 = vmatpush2.bf16.msra.mxu0 %v4611
    %5092 = vmatprep.subr.bf16.mxu0 %v4606
    %5093 = vmatpush2.bf16.msra.mxu0 %v4605
    %5094 = vmatprep.mubr.bf16.mxu0 %v3646
    %5095 = vmatmul.mubr.bf16.gmra.mxu0 %v3645
    %v5096 = vpop.f32.mrf.mxu0
    %v5097 = vadd.f32 %v5024, %v5096
    %v5098 = vpop.f32.mrf.mxu0
    %v5099 = vadd.f32 %v5026, %v5098
    %v5100 = vpop.f32.mrf.mxu0
    %v5101 = vadd.f32 %v5028, %v5100
    %v5102 = vpop.f32.mrf.mxu0
    %v5103 = vadd.f32 %v5030, %v5102
    %5104 = vmatprep.mubr.bf16.mxu0 %v3650
    %5105 = vmatmul.mubr.bf16.gmra.mxu0 %v3649
    %v5106 = vpop.f32.mrf.mxu0
    %v5107 = vadd.f32 %v5034, %v5106
    %v5108 = vpop.f32.mrf.mxu0
    %v5109 = vadd.f32 %v5036, %v5108
    %v5110 = vpop.f32.mrf.mxu0
    %v5111 = vadd.f32 %v5038, %v5110
    %v5112 = vpop.f32.mrf.mxu0
    %v5113 = vadd.f32 %v5040, %v5112
    %5114 = vmatprep.mubr.bf16.mxu0 %v3654
    %5115 = vmatmul.mubr.bf16.gmra.mxu0 %v3653
    %v5116 = vpop.f32.mrf.mxu0
    %v5117 = vadd.f32 %v5044, %v5116
    %v5118 = vpop.f32.mrf.mxu0
    %v5119 = vadd.f32 %v5046, %v5118
    %v5120 = vpop.f32.mrf.mxu0
    %v5121 = vadd.f32 %v5048, %v5120
    %v5122 = vpop.f32.mrf.mxu0
    %v5123 = vadd.f32 %v5050, %v5122
    %5124 = vmatprep.mubr.bf16.mxu0 %v3658
    %5125 = vmatmul.mubr.bf16.gmra.mxu0 %v3657
    %v5126 = vpop.f32.mrf.mxu0
    %v5127 = vadd.f32 %v5054, %v5126
    %v5128 = vpop.f32.mrf.mxu0
    %v5129 = vadd.f32 %v5056, %v5128
    %v5130 = vpop.f32.mrf.mxu0
    %v5131 = vadd.f32 %v5058, %v5130
    %v5132 = vpop.f32.mrf.mxu0
    %v5133 = vadd.f32 %v5060, %v5132
    %5134 = vdwg.mxu0
    %5135 = vmatprep.subr.bf16.mxu0 %v4506
    %5136 = vmatpush1.bf16.msra.mxu0 %v4505
    %5137 = vmatprep.subr.bf16.mxu0 %v4500
    %5138 = vmatpush1.bf16.msra.mxu0 %v4499
    %5139 = vmatprep.subr.bf16.mxu0 %v4494
    %5140 = vmatpush1.bf16.msra.mxu0 %v4493
    %5141 = vmatprep.subr.bf16.mxu0 %v4488
    %5142 = vmatpush1.bf16.msra.mxu0 %v4487
    %5143 = vmatprep.subr.bf16.mxu0 %v4482
    %5144 = vmatpush1.bf16.msra.mxu0 %v4481
    %5145 = vmatprep.subr.bf16.mxu0 %v4476
    %5146 = vmatpush1.bf16.msra.mxu0 %v4475
    %5147 = vmatprep.subr.bf16.mxu0 %v4470
    %5148 = vmatpush1.bf16.msra.mxu0 %v4469
    %5149 = vmatprep.subr.bf16.mxu0 %v4464
    %5150 = vmatpush1.bf16.msra.mxu0 %v4463
    %5151 = vmatprep.subr.bf16.mxu0 %v4554
    %5152 = vmatpush2.bf16.msra.mxu0 %v4553
    %5153 = vmatprep.subr.bf16.mxu0 %v4548
    %5154 = vmatpush2.bf16.msra.mxu0 %v4547
    %5155 = vmatprep.subr.bf16.mxu0 %v4542
    %5156 = vmatpush2.bf16.msra.mxu0 %v4541
    %5157 = vmatprep.subr.bf16.mxu0 %v4536
    %5158 = vmatpush2.bf16.msra.mxu0 %v4535
    %5159 = vmatprep.subr.bf16.mxu0 %v4530
    %5160 = vmatpush2.bf16.msra.mxu0 %v4529
    %5161 = vmatprep.subr.bf16.mxu0 %v4524
    %5162 = vmatpush2.bf16.msra.mxu0 %v4523
    %5163 = vmatprep.subr.bf16.mxu0 %v4518
    %5164 = vmatpush2.bf16.msra.mxu0 %v4517
    %5165 = vmatprep.subr.bf16.mxu0 %v4512
    %5166 = vmatpush2.bf16.msra.mxu0 %v4511
    %5167 = vmatprep.mubr.bf16.mxu0 %v3644
    %5168 = vmatmul.mubr.bf16.gmra.mxu0 %v3643
    %v5169 = vpop.f32.mrf.mxu0
    %v5170 = vadd.f32 %v3872, %v5169
    %v5171 = vpop.f32.mrf.mxu0
    %v5172 = vadd.f32 %v3876, %v5171
    %v5173 = vpop.f32.mrf.mxu0
    %v5174 = vadd.f32 %v3872, %v5173
    %v5175 = vpop.f32.mrf.mxu0
    %v5176 = vadd.f32 %v3876, %v5175
    %5177 = vmatprep.mubr.bf16.mxu0 %v3648
    %5178 = vmatmul.mubr.bf16.gmra.mxu0 %v3647
    %v5179 = vpop.f32.mrf.mxu0
    %v5180 = vadd.f32 %v3872, %v5179
    %v5181 = vpop.f32.mrf.mxu0
    %v5182 = vadd.f32 %v3876, %v5181
    %v5183 = vpop.f32.mrf.mxu0
    %v5184 = vadd.f32 %v3872, %v5183
    %v5185 = vpop.f32.mrf.mxu0
    %v5186 = vadd.f32 %v3876, %v5185
    %5187 = vmatprep.mubr.bf16.mxu0 %v3652
    %5188 = vmatmul.mubr.bf16.gmra.mxu0 %v3651
    %v5189 = vpop.f32.mrf.mxu0
    %v5190 = vadd.f32 %v3872, %v5189
    %v5191 = vpop.f32.mrf.mxu0
    %v5192 = vadd.f32 %v3876, %v5191
    %v5193 = vpop.f32.mrf.mxu0
    %v5194 = vadd.f32 %v3872, %v5193
    %v5195 = vpop.f32.mrf.mxu0
    %v5196 = vadd.f32 %v3876, %v5195
    %5197 = vmatprep.mubr.bf16.mxu0 %v3656
    %5198 = vmatmul.mubr.bf16.gmra.mxu0 %v3655
    %v5199 = vpop.f32.mrf.mxu0
    %v5200 = vadd.f32 %v3872, %v5199
    %v5201 = vpop.f32.mrf.mxu0
    %v5202 = vadd.f32 %v3876, %v5201
    %v5203 = vpop.f32.mrf.mxu0
    %v5204 = vadd.f32 %v3872, %v5203
    %v5205 = vpop.f32.mrf.mxu0
    %v5206 = vadd.f32 %v3876, %v5205
    %5207 = vdwg.mxu0
    %5208 = vmatprep.subr.bf16.mxu0 %v4602
    %5209 = vmatpush1.bf16.msra.mxu0 %v4601
    %5210 = vmatprep.subr.bf16.mxu0 %v4596
    %5211 = vmatpush1.bf16.msra.mxu0 %v4595
    %5212 = vmatprep.subr.bf16.mxu0 %v4590
    %5213 = vmatpush1.bf16.msra.mxu0 %v4589
    %5214 = vmatprep.subr.bf16.mxu0 %v4584
    %5215 = vmatpush1.bf16.msra.mxu0 %v4583
    %5216 = vmatprep.subr.bf16.mxu0 %v4578
    %5217 = vmatpush1.bf16.msra.mxu0 %v4577
    %5218 = vmatprep.subr.bf16.mxu0 %v4572
    %5219 = vmatpush1.bf16.msra.mxu0 %v4571
    %5220 = vmatprep.subr.bf16.mxu0 %v4566
    %5221 = vmatpush1.bf16.msra.mxu0 %v4565
    %5222 = vmatprep.subr.bf16.mxu0 %v4560
    %5223 = vmatpush1.bf16.msra.mxu0 %v4559
    %5224 = vmatprep.subr.bf16.mxu0 %v4650
    %5225 = vmatpush2.bf16.msra.mxu0 %v4649
    %5226 = vmatprep.subr.bf16.mxu0 %v4644
    %5227 = vmatpush2.bf16.msra.mxu0 %v4643
    %5228 = vmatprep.subr.bf16.mxu0 %v4638
    %5229 = vmatpush2.bf16.msra.mxu0 %v4637
    %5230 = vmatprep.subr.bf16.mxu0 %v4632
    %5231 = vmatpush2.bf16.msra.mxu0 %v4631
    %5232 = vmatprep.subr.bf16.mxu0 %v4626
    %5233 = vmatpush2.bf16.msra.mxu0 %v4625
    %5234 = vmatprep.subr.bf16.mxu0 %v4620
    %5235 = vmatpush2.bf16.msra.mxu0 %v4619
    %5236 = vmatprep.subr.bf16.mxu0 %v4614
    %5237 = vmatpush2.bf16.msra.mxu0 %v4613
    %5238 = vmatprep.subr.bf16.mxu0 %v4608
    %5239 = vmatpush2.bf16.msra.mxu0 %v4607
    %5240 = vmatprep.mubr.bf16.mxu0 %v3646
    %5241 = vmatmul.mubr.bf16.gmra.mxu0 %v3645
    %v5242 = vpop.f32.mrf.mxu0
    %v5243 = vadd.f32 %v5170, %v5242
    %v5244 = vpop.f32.mrf.mxu0
    %v5245 = vadd.f32 %v5172, %v5244
    %v5246 = vpop.f32.mrf.mxu0
    %v5247 = vadd.f32 %v5174, %v5246
    %v5248 = vpop.f32.mrf.mxu0
    %v5249 = vadd.f32 %v5176, %v5248
    %5250 = vmatprep.mubr.bf16.mxu0 %v3650
    %5251 = vmatmul.mubr.bf16.gmra.mxu0 %v3649
    %v5252 = vpop.f32.mrf.mxu0
    %v5253 = vadd.f32 %v5180, %v5252
    %v5254 = vpop.f32.mrf.mxu0
    %v5255 = vadd.f32 %v5182, %v5254
    %v5256 = vpop.f32.mrf.mxu0
    %v5257 = vadd.f32 %v5184, %v5256
    %v5258 = vpop.f32.mrf.mxu0
    %v5259 = vadd.f32 %v5186, %v5258
    %5260 = vmatprep.mubr.bf16.mxu0 %v3654
    %5261 = vmatmul.mubr.bf16.gmra.mxu0 %v3653
    %v5262 = vpop.f32.mrf.mxu0
    %v5263 = vadd.f32 %v5190, %v5262
    %v5264 = vpop.f32.mrf.mxu0
    %v5265 = vadd.f32 %v5192, %v5264
    %v5266 = vpop.f32.mrf.mxu0
    %v5267 = vadd.f32 %v5194, %v5266
    %v5268 = vpop.f32.mrf.mxu0
    %v5269 = vadd.f32 %v5196, %v5268
    %5270 = vmatprep.mubr.bf16.mxu0 %v3658
    %5271 = vmatmul.mubr.bf16.gmra.mxu0 %v3657
    %v5272 = vpop.f32.mrf.mxu0
    %v5273 = vadd.f32 %v5200, %v5272
    %v5274 = vpop.f32.mrf.mxu0
    %v5275 = vadd.f32 %v5202, %v5274
    %v5276 = vpop.f32.mrf.mxu0
    %v5277 = vadd.f32 %v5204, %v5276
    %v5278 = vpop.f32.mrf.mxu0
    %v5279 = vadd.f32 %v5206, %v5278
    %5280 = vdwg.mxu0
    %v5281 = vtanh.pop %v4951
    %v5282 = vtanh.pop %v4953
    %v5283 = vtanh.pop %v5097
    %v5284 = vtanh.pop %v4955
    %v5285 = vtanh.pop %v4957
    %v5286 = vtanh.pop %v5101
    %v5287 = vtanh.pop %v4961
    %v5288 = vtanh.pop %v4963
    %v5289 = vtanh.pop %v5107
    %v5290 = vtanh.pop %v4965
    %v5291 = vtanh.pop %v4967
    %v5292 = vtanh.pop %v5111
    %v5293 = vtanh.pop %v4971
    %v5294 = vtanh.pop %v4973
    %v5295 = vtanh.pop %v5117
    %v5296 = vtanh.pop %v4975
    %v5297 = vtanh.pop %v4977
    %v5298 = vtanh.pop %v5121
    %v5299 = vtanh.pop %v4981
    %v5300 = vtanh.pop %v4983
    %v5301 = vtanh.pop %v5127
    %v5302 = vtanh.pop %v4985
    %v5303 = vtanh.pop %v4987
    %v5304 = vtanh.pop %v5131
    %v5305 = vxor.u32 %v5099, 2147483648
    %v5306 = vxor.u32 %v5243, 2147483648
    %v5307 = vxor.u32 %v5245, 2147483648
    %v5308 = vxor.u32 %v5103, 2147483648
    %v5309 = vxor.u32 %v5247, 2147483648
    %v5310 = vxor.u32 %v5249, 2147483648
    %v5311 = vxor.u32 %v5109, 2147483648
    %v5312 = vxor.u32 %v5253, 2147483648
    %v5313 = vxor.u32 %v5255, 2147483648
    %v5314 = vxor.u32 %v5113, 2147483648
    %v5315 = vxor.u32 %v5257, 2147483648
    %v5316 = vxor.u32 %v5259, 2147483648
    %v5317 = vxor.u32 %v5119, 2147483648
    %v5318 = vxor.u32 %v5263, 2147483648
    %v5319 = vxor.u32 %v5265, 2147483648
    %v5320 = vxor.u32 %v5123, 2147483648
    %v5321 = vxor.u32 %v5267, 2147483648
    %v5322 = vxor.u32 %v5269, 2147483648
    %v5323 = vxor.u32 %v5129, 2147483648
    %v5324 = vxor.u32 %v5273, 2147483648
    %v5325 = vxor.u32 %v5275, 2147483648
    %v5326 = vxor.u32 %v5133, 2147483648
    %v5327 = vxor.u32 %v5277, 2147483648
    %v5328 = vxor.u32 %v5279, 2147483648
    %v5329 = vmul.f32 %v5305, 1.442695
    %v5330 = vpow.pop %v5329
    %v5331 = vmul.f32 %v5306, 1.442695
    %v5332 = vpow.pop %v5331
    %v5333 = vmul.f32 %v5307, 1.442695
    %v5334 = vpow.pop %v5333
    %v5335 = vmul.f32 %v5308, 1.442695
    %v5336 = vpow.pop %v5335
    %v5337 = vmul.f32 %v5309, 1.442695
    %v5338 = vpow.pop %v5337
    %v5339 = vmul.f32 %v5310, 1.442695
    %v5340 = vpow.pop %v5339
    %v5341 = vmul.f32 %v5311, 1.442695
    %v5342 = vpow.pop %v5341
    %v5343 = vmul.f32 %v5312, 1.442695
    %v5344 = vpow.pop %v5343
    %v5345 = vmul.f32 %v5313, 1.442695
    %v5346 = vpow.pop %v5345
    %v5347 = vmul.f32 %v5314, 1.442695
    %v5348 = vpow.pop %v5347
    %v5349 = vmul.f32 %v5315, 1.442695
    %v5350 = vpow.pop %v5349
    %v5351 = vmul.f32 %v5316, 1.442695
    %v5352 = vpow.pop %v5351
    %v5353 = vmul.f32 %v5317, 1.442695
    %v5354 = vpow.pop %v5353
    %v5355 = vmul.f32 %v5318, 1.442695
    %v5356 = vpow.pop %v5355
    %v5357 = vmul.f32 %v5319, 1.442695
    %v5358 = vpow.pop %v5357
    %v5359 = vmul.f32 %v5320, 1.442695
    %v5360 = vpow.pop %v5359
    %v5361 = vmul.f32 %v5321, 1.442695
    %v5362 = vpow.pop %v5361
    %v5363 = vmul.f32 %v5322, 1.442695
    %v5364 = vpow.pop %v5363
    %v5365 = vmul.f32 %v5323, 1.442695
    %v5366 = vpow.pop %v5365
    %v5367 = vmul.f32 %v5324, 1.442695
    %v5368 = vpow.pop %v5367
    %v5369 = vmul.f32 %v5325, 1.442695
    %v5370 = vpow.pop %v5369
    %v5371 = vmul.f32 %v5326, 1.442695
    %v5372 = vpow.pop %v5371
    %v5373 = vmul.f32 %v5327, 1.442695
    %v5374 = vpow.pop %v5373
    %v5375 = vmul.f32 %v5328, 1.442695
    %v5376 = vpow.pop %v5375
    %v5377 = vadd.f32 %v5330, 1.0
    %v5378 = vadd.f32 %v5332, 1.0
    %v5379 = vadd.f32 %v5334, 1.0
    %v5380 = vadd.f32 %v5336, 1.0
    %v5381 = vadd.f32 %v5338, 1.0
    %v5382 = vadd.f32 %v5340, 1.0
    %v5383 = vadd.f32 %v5342, 1.0
    %v5384 = vadd.f32 %v5344, 1.0
    %v5385 = vadd.f32 %v5346, 1.0
    %v5386 = vadd.f32 %v5348, 1.0
    %v5387 = vadd.f32 %v5350, 1.0
    %v5388 = vadd.f32 %v5352, 1.0
    %v5389 = vadd.f32 %v5354, 1.0
    %v5390 = vadd.f32 %v5356, 1.0
    %v5391 = vadd.f32 %v5358, 1.0
    %v5392 = vadd.f32 %v5360, 1.0
    %v5393 = vadd.f32 %v5362, 1.0
    %v5394 = vadd.f32 %v5364, 1.0
    %v5395 = vadd.f32 %v5366, 1.0
    %v5396 = vadd.f32 %v5368, 1.0
    %v5397 = vadd.f32 %v5370, 1.0
    %v5398 = vadd.f32 %v5372, 1.0
    %v5399 = vadd.f32 %v5374, 1.0
    %v5400 = vadd.f32 %v5376, 1.0
    %v5401 = vrcp.pop %v5377
    %v5402 = vmul.f32 1.0, %v5401
    %v5403 = vrcp.pop %v5378
    %v5404 = vmul.f32 1.0, %v5403
    %v5405 = vrcp.pop %v5379
    %v5406 = vmul.f32 1.0, %v5405
    %v5407 = vrcp.pop %v5380
    %v5408 = vmul.f32 1.0, %v5407
    %v5409 = vrcp.pop %v5381
    %v5410 = vmul.f32 1.0, %v5409
    %v5411 = vrcp.pop %v5382
    %v5412 = vmul.f32 1.0, %v5411
    %v5413 = vrcp.pop %v5383
    %v5414 = vmul.f32 1.0, %v5413
    %v5415 = vrcp.pop %v5384
    %v5416 = vmul.f32 1.0, %v5415
    %v5417 = vrcp.pop %v5385
    %v5418 = vmul.f32 1.0, %v5417
    %v5419 = vrcp.pop %v5386
    %v5420 = vmul.f32 1.0, %v5419
    %v5421 = vrcp.pop %v5387
    %v5422 = vmul.f32 1.0, %v5421
    %v5423 = vrcp.pop %v5388
    %v5424 = vmul.f32 1.0, %v5423
    %v5425 = vrcp.pop %v5389
    %v5426 = vmul.f32 1.0, %v5425
    %v5427 = vrcp.pop %v5390
    %v5428 = vmul.f32 1.0, %v5427
    %v5429 = vrcp.pop %v5391
    %v5430 = vmul.f32 1.0, %v5429
    %v5431 = vrcp.pop %v5392
    %v5432 = vmul.f32 1.0, %v5431
    %v5433 = vrcp.pop %v5393
    %v5434 = vmul.f32 1.0, %v5433
    %v5435 = vrcp.pop %v5394
    %v5436 = vmul.f32 1.0, %v5435
    %v5437 = vrcp.pop %v5395
    %v5438 = vmul.f32 1.0, %v5437
    %v5439 = vrcp.pop %v5396
    %v5440 = vmul.f32 1.0, %v5439
    %v5441 = vrcp.pop %v5397
    %v5442 = vmul.f32 1.0, %v5441
    %v5443 = vrcp.pop %v5398
    %v5444 = vmul.f32 1.0, %v5443
    %v5445 = vrcp.pop %v5399
    %v5446 = vmul.f32 1.0, %v5445
    %v5447 = vrcp.pop %v5400
    %v5448 = vmul.f32 1.0, %v5447
    %v5449 = vmul.f32 %v5281, %v5402
    %v5450 = vmul.f32 %v5282, %v5404
    %v5451 = vmul.f32 %v5283, %v5406
    %v5452 = vmul.f32 %v5284, %v5408
    %v5453 = vmul.f32 %v5285, %v5410
    %v5454 = vmul.f32 %v5286, %v5412
    %v5455 = vmul.f32 %v5287, %v5414
    %v5456 = vmul.f32 %v5288, %v5416
    %v5457 = vmul.f32 %v5289, %v5418
    %v5458 = vmul.f32 %v5290, %v5420
    %v5459 = vmul.f32 %v5291, %v5422
    %v5460 = vmul.f32 %v5292, %v5424
    %v5461 = vmul.f32 %v5293, %v5426
    %v5462 = vmul.f32 %v5294, %v5428
    %v5463 = vmul.f32 %v5295, %v5430
    %v5464 = vmul.f32 %v5296, %v5432
    %v5465 = vmul.f32 %v5297, %v5434
    %v5466 = vmul.f32 %v5298, %v5436
    %v5467 = vmul.f32 %v5299, %v5438
    %v5468 = vmul.f32 %v5300, %v5440
    %v5469 = vmul.f32 %v5301, %v5442
    %v5470 = vmul.f32 %v5302, %v5444
    %v5471 = vmul.f32 %v5303, %v5446
    %v5472 = vmul.f32 %v5304, %v5448
    %v5473 = vld [vmem:[#allocation16] sm:$0x7]
    %s5474 = sld [smem:[#allocation18]]
    %v5475 = vstv %s5474
    %v5477 = vlaneseq
    %v5478 = vshrl.u32 %v5477, 7
    %v5479 = vsub.s32 0, %v5478
    %v5480 = vrot.slane %v5473, %v5479
    %v5481 = vlaneseq
    %v5482 = vshrl.u32 %v5481, 7
    %v5483 = vsub.s32 1, %v5482
    %v5484 = vrot.slane %v5473, %v5483
    %v5485 = vlaneseq
    %v5486 = vshrl.u32 %v5485, 7
    %v5487 = vsub.s32 2, %v5486
    %v5488 = vrot.slane %v5473, %v5487
    %5492 = vmatprep.subr.mxu0 0.0
    %5493 = vmatpush1.xpose.msra.mxu0 0.0
    %5494 = vmatprep.subr.mxu0 0.0
    %5495 = vmatpush1.xpose.msra.mxu0 0.0
    %5496 = vmatprep.subr.mxu0 0.0
    %5497 = vmatpush1.xpose.msra.mxu0 0.0
    %5498 = vmatprep.subr.mxu0 0.0
    %5499 = vmatpush1.xpose.msra.mxu0 0.0
    %5500 = vmatprep.subr.mxu0 0.0
    %5501 = vmatpush1.xpose.msra.mxu0 0.0
    %5502 = vmatprep.subr.mxu0 0.0
    %5503 = vmatpush1.xpose.msra.mxu0 0.0
    %5504 = vmatprep.subr.mxu0 0.0
    %5505 = vmatpush1.xpose.msra.mxu0 0.0
    %5506 = vmatprep.subr.mxu0 0.0
    %5507 = vmatpush1.xpose.msra.mxu0 0.0
    %5508 = vmatprep.subr.mxu0 %v5471
    %5509 = vmatpush1.xpose.msra.mxu0 %v5470
    %5510 = vmatprep.subr.mxu0 %v5468
    %5511 = vmatpush1.xpose.msra.mxu0 %v5467
    %5512 = vmatprep.subr.mxu0 %v5465
    %5513 = vmatpush1.xpose.msra.mxu0 %v5464
    %5514 = vmatprep.subr.mxu0 %v5462
    %5515 = vmatpush1.xpose.msra.mxu0 %v5461
    %5516 = vmatprep.subr.mxu0 %v5459
    %5517 = vmatpush1.xpose.msra.mxu0 %v5458
    %5518 = vmatprep.subr.mxu0 %v5456
    %5519 = vmatpush1.xpose.msra.mxu0 %v5455
    %5520 = vmatprep.subr.mxu0 %v5453
    %5521 = vmatpush1.xpose.msra.mxu0 %v5452
    %5522 = vmatprep.subr.mxu0 %v5450
    %5523 = vmatpush1.xpose.msra.mxu0 %v5449
    %5524 = vmatprep.subr.mxu0 0.0
    %5525 = vmatpush2.xpose.msra.mxu0 0.0
    %5526 = vmatprep.subr.mxu0 0.0
    %5527 = vmatpush2.xpose.msra.mxu0 0.0
    %5528 = vmatprep.subr.mxu0 0.0
    %5529 = vmatpush2.xpose.msra.mxu0 0.0
    %5530 = vmatprep.subr.mxu0 0.0
    %5531 = vmatpush2.xpose.msra.mxu0 0.0
    %5532 = vmatprep.subr.mxu0 0.0
    %5533 = vmatpush2.xpose.msra.mxu0 0.0
    %5534 = vmatprep.subr.mxu0 0.0
    %5535 = vmatpush2.xpose.msra.mxu0 0.0
    %5536 = vmatprep.subr.mxu0 0.0
    %5537 = vmatpush2.xpose.msra.mxu0 0.0
    %5538 = vmatprep.subr.mxu0 0.0
    %5539 = vmatpush2.xpose.msra.mxu0 0.0
    %5540 = vmatprep.subr.mxu0 0.0
    %5541 = vmatpush2.xpose.msra.mxu0 0.0
    %5542 = vmatprep.subr.mxu0 0.0
    %5543 = vmatpush2.xpose.msra.mxu0 0.0
    %5544 = vmatprep.subr.mxu0 0.0
    %5545 = vmatpush2.xpose.msra.mxu0 0.0
    %5546 = vmatprep.subr.mxu0 0.0
    %5547 = vmatpush2.xpose.msra.mxu0 0.0
    %5548 = vmatprep.subr.mxu0 0.0
    %5549 = vmatpush2.xpose.msra.mxu0 0.0
    %5550 = vmatprep.subr.mxu0 0.0
    %5551 = vmatpush2.xpose.msra.mxu0 0.0
    %5552 = vmatprep.subr.mxu0 0.0
    %5553 = vmatpush2.xpose.msra.mxu0 0.0
    %5554 = vmatprep.subr.mxu0 0.0
    %5555 = vmatpush2.xpose.msra.mxu0 0.0
    %5556 = vmatprep.mubr.f32.mxu0 %v5484
    %5557 = vmatmul.mubr.f32.gmra.mxu0 %v5480
    %v5558 = vpop.f32.mrf.mxu0
    %v5559 = vadd.f32 %v5475, %v5558
    %v5560 = vpop.f32.mrf.mxu0
    %5561 = vdwg.mxu0
    %5562 = vmatprep.subr.mxu0 0.0
    %5563 = vmatpush1.xpose.msra.mxu0 0.0
    %5564 = vmatprep.subr.mxu0 0.0
    %5565 = vmatpush1.xpose.msra.mxu0 0.0
    %5566 = vmatprep.subr.mxu0 0.0
    %5567 = vmatpush1.xpose.msra.mxu0 0.0
    %5568 = vmatprep.subr.mxu0 0.0
    %5569 = vmatpush1.xpose.msra.mxu0 0.0
    %5570 = vmatprep.subr.mxu0 0.0
    %5571 = vmatpush1.xpose.msra.mxu0 0.0
    %5572 = vmatprep.subr.mxu0 0.0
    %5573 = vmatpush1.xpose.msra.mxu0 0.0
    %5574 = vmatprep.subr.mxu0 0.0
    %5575 = vmatpush1.xpose.msra.mxu0 0.0
    %5576 = vmatprep.subr.mxu0 0.0
    %5577 = vmatpush1.xpose.msra.mxu0 0.0
    %5578 = vmatprep.subr.mxu0 0.0
    %5579 = vmatpush1.xpose.msra.mxu0 %v5472
    %5580 = vmatprep.subr.mxu0 0.0
    %5581 = vmatpush1.xpose.msra.mxu0 %v5469
    %5582 = vmatprep.subr.mxu0 0.0
    %5583 = vmatpush1.xpose.msra.mxu0 %v5466
    %5584 = vmatprep.subr.mxu0 0.0
    %5585 = vmatpush1.xpose.msra.mxu0 %v5463
    %5586 = vmatprep.subr.mxu0 0.0
    %5587 = vmatpush1.xpose.msra.mxu0 %v5460
    %5588 = vmatprep.subr.mxu0 0.0
    %5589 = vmatpush1.xpose.msra.mxu0 %v5457
    %5590 = vmatprep.subr.mxu0 0.0
    %5591 = vmatpush1.xpose.msra.mxu0 %v5454
    %5592 = vmatprep.subr.mxu0 0.0
    %5593 = vmatpush1.xpose.msra.mxu0 %v5451
    %5594 = vmatprep.subr.mxu0 0.0
    %5595 = vmatpush2.xpose.msra.mxu0 0.0
    %5596 = vmatprep.subr.mxu0 0.0
    %5597 = vmatpush2.xpose.msra.mxu0 0.0
    %5598 = vmatprep.subr.mxu0 0.0
    %5599 = vmatpush2.xpose.msra.mxu0 0.0
    %5600 = vmatprep.subr.mxu0 0.0
    %5601 = vmatpush2.xpose.msra.mxu0 0.0
    %5602 = vmatprep.subr.mxu0 0.0
    %5603 = vmatpush2.xpose.msra.mxu0 0.0
    %5604 = vmatprep.subr.mxu0 0.0
    %5605 = vmatpush2.xpose.msra.mxu0 0.0
    %5606 = vmatprep.subr.mxu0 0.0
    %5607 = vmatpush2.xpose.msra.mxu0 0.0
    %5608 = vmatprep.subr.mxu0 0.0
    %5609 = vmatpush2.xpose.msra.mxu0 0.0
    %5610 = vmatprep.subr.mxu0 0.0
    %5611 = vmatpush2.xpose.msra.mxu0 0.0
    %5612 = vmatprep.subr.mxu0 0.0
    %5613 = vmatpush2.xpose.msra.mxu0 0.0
    %5614 = vmatprep.subr.mxu0 0.0
    %5615 = vmatpush2.xpose.msra.mxu0 0.0
    %5616 = vmatprep.subr.mxu0 0.0
    %5617 = vmatpush2.xpose.msra.mxu0 0.0
    %5618 = vmatprep.subr.mxu0 0.0
    %5619 = vmatpush2.xpose.msra.mxu0 0.0
    %5620 = vmatprep.subr.mxu0 0.0
    %5621 = vmatpush2.xpose.msra.mxu0 0.0
    %5622 = vmatprep.subr.mxu0 0.0
    %5623 = vmatpush2.xpose.msra.mxu0 0.0
    %5624 = vmatprep.subr.mxu0 0.0
    %5625 = vmatpush2.xpose.msra.mxu0 0.0
    %5626 = vmatprep.mubr.f32.mxu0 0.0
    %5627 = vmatmul.mubr.f32.gmra.mxu0 %v5488
    %v5628 = vpop.f32.mrf.mxu0
    %v5629 = vadd.f32 %v5559, %v5628
    %v5630 = vpop.f32.mrf.mxu0
    %5631 = vdwg.mxu0
    %vm5632 = vcmask 516096
    %5633 = vst.msk [vmem:[#allocation20] sm:$0x1] %vm5632, %v5629
    %v5634 = vlaneseq
    %v5635 = vand.u32 %v5634, 127
    %s5636 = smul.u32 0, 64
    %v5637 = vstv %s5636
    %v5638 = vadd.s32 %v5635, %v5637
    %s5639 = sld [smem:[#allocation5]]
    %v5640 = vstv %s5639
    %vm5641 = vcmp.lt.s32.totalorder %v5638, %v5640
    %v5642 = vsel %vm5641, %v5629, -1e+30
    %v5643 = vld [vmem:[#allocation2] sm:$0x1]
    %v5644 = vsel %vm5632, %v5642, -inf
    %5645 = vmax.xlane.f32.xlu0 %v5644
    %v5646 = vpop.xlane.xlu0 %5645
    %v5647 = vmax.f32 %v5643, %v5646
    %v5648 = vsub.f32 %v5643, %v5647
    %v5649 = vmul.f32 %v5648, 1.442695
    %v5650 = vpow.pop %v5649
    %5652 = vset.pattern.permute.xlu0 0
    %5653 = vperm.xlu0 %5652, %v5647
    %v5654 = vpop.permute.xlu0 %5653
    %v5656 = vlaneseq
    %v5657 = vshrl.u32 %v5656, 7
    %v5658 = vsub.s32 0, %v5657
    %v5659 = vrot.slane %v5654, %v5658
    %v5660 = vsub.f32 %v5642, %v5659
    %v5661 = vmul.f32 %v5660, 1.442695
    %v5662 = vpow.pop %v5661
    %v5663 = vsel %vm5641, %v5662, 0.0
    %v5664 = vld [vmem:[#allocation3] sm:$0x1]
    %v5665 = vmul.f32 %v5650, %v5664
    %v5666 = vsel %vm5632, %v5663, 0.0
    %5667 = vadd.xlane.f32.xlu0 %v5666
    %v5668 = vpop.xlane.xlu0 %5667
    %v5669 = vadd.f32 %v5665, %v5668
    %vm5670 = vcmask 0
    %5671 = vst.msk [vmem:[#allocation3] sm:$0x1] %vm5670, %v5669
    %v5672 = vld [vmem:[#allocation4] sm:$0xf]
    %5674 = vset.pattern.permute.xlu0 0
    %5675 = vperm.xlu0 %5674, %v5650
    %v5676 = vpop.permute.xlu0 %5675
    %v5678 = vlaneseq
    %v5679 = vshrl.u32 %v5678, 7
    %v5680 = vsub.s32 0, %v5679
    %v5681 = vrot.slane %v5676, %v5680
    %v5682 = vmul.f32 %v5681, %v5672
    %vm5683 = vcmask 523264
    %v5685 = vsel %vm5683, %v5663, 0
    %5687 = vmatprep.subr.mxu0 0.0
    %5688 = vmatpush1.msra.mxu0 0.0
    %5689 = vmatprep.subr.mxu0 0.0
    %5690 = vmatpush1.msra.mxu0 0.0
    %5691 = vmatprep.subr.mxu0 0.0
    %5692 = vmatpush1.msra.mxu0 0.0
    %5693 = vmatprep.subr.mxu0 0.0
    %5694 = vmatpush1.msra.mxu0 0.0
    %5695 = vmatprep.subr.mxu0 0.0
    %5696 = vmatpush1.msra.mxu0 0.0
    %5697 = vmatprep.subr.mxu0 0.0
    %5698 = vmatpush1.msra.mxu0 0.0
    %5699 = vmatprep.subr.mxu0 0.0
    %5700 = vmatpush1.msra.mxu0 0.0
    %5701 = vmatprep.subr.mxu0 0.0
    %5702 = vmatpush1.msra.mxu0 0.0
    %5703 = vmatprep.subr.mxu0 %v3640
    %5704 = vmatpush1.msra.mxu0 %v3639
    %5705 = vmatprep.subr.mxu0 %v3636
    %5706 = vmatpush1.msra.mxu0 %v3635
    %5707 = vmatprep.subr.mxu0 %v3632
    %5708 = vmatpush1.msra.mxu0 %v3631
    %5709 = vmatprep.subr.mxu0 %v3628
    %5710 = vmatpush1.msra.mxu0 %v3627
    %5711 = vmatprep.subr.mxu0 %v3624
    %5712 = vmatpush1.msra.mxu0 %v3623
    %5713 = vmatprep.subr.mxu0 %v3620
    %5714 = vmatpush1.msra.mxu0 %v3619
    %5715 = vmatprep.subr.mxu0 %v3616
    %5716 = vmatpush1.msra.mxu0 %v3615
    %5717 = vmatprep.subr.mxu0 %v3612
    %5718 = vmatpush1.msra.mxu0 %v3611
    %5719 = vmatprep.subr.mxu0 0.0
    %5720 = vmatpush2.msra.mxu0 0.0
    %5721 = vmatprep.subr.mxu0 0.0
    %5722 = vmatpush2.msra.mxu0 0.0
    %5723 = vmatprep.subr.mxu0 0.0
    %5724 = vmatpush2.msra.mxu0 0.0
    %5725 = vmatprep.subr.mxu0 0.0
    %5726 = vmatpush2.msra.mxu0 0.0
    %5727 = vmatprep.subr.mxu0 0.0
    %5728 = vmatpush2.msra.mxu0 0.0
    %5729 = vmatprep.subr.mxu0 0.0
    %5730 = vmatpush2.msra.mxu0 0.0
    %5731 = vmatprep.subr.mxu0 0.0
    %5732 = vmatpush2.msra.mxu0 0.0
    %5733 = vmatprep.subr.mxu0 0.0
    %5734 = vmatpush2.msra.mxu0 0.0
    %5735 = vmatprep.subr.mxu0 0.0
    %5736 = vmatpush2.msra.mxu0 0.0
    %5737 = vmatprep.subr.mxu0 0.0
    %5738 = vmatpush2.msra.mxu0 0.0
    %5739 = vmatprep.subr.mxu0 0.0
    %5740 = vmatpush2.msra.mxu0 0.0
    %5741 = vmatprep.subr.mxu0 0.0
    %5742 = vmatpush2.msra.mxu0 0.0
    %5743 = vmatprep.subr.mxu0 0.0
    %5744 = vmatpush2.msra.mxu0 0.0
    %5745 = vmatprep.subr.mxu0 0.0
    %5746 = vmatpush2.msra.mxu0 0.0
    %5747 = vmatprep.subr.mxu0 0.0
    %5748 = vmatpush2.msra.mxu0 0.0
    %5749 = vmatprep.subr.mxu0 0.0
    %5750 = vmatpush2.msra.mxu0 0.0
    %5751 = vmatprep.mubr.f32.mxu0 0.0
    %5752 = vmatmul.mubr.f32.gmra.mxu0 %v5685
    %v5753 = vpop.f32.mrf.mxu0
    %v5754 = vadd.f32 0.0, %v5753
    %v5755 = vpop.f32.mrf.mxu0
    %v5756 = vadd.f32 0.0, %v5755
    %5757 = vdwg.mxu0
    %5758 = vmatprep.subr.mxu0 0.0
    %5759 = vmatpush1.msra.mxu0 0.0
    %5760 = vmatprep.subr.mxu0 0.0
    %5761 = vmatpush1.msra.mxu0 0.0
    %5762 = vmatprep.subr.mxu0 0.0
    %5763 = vmatpush1.msra.mxu0 0.0
    %5764 = vmatprep.subr.mxu0 0.0
    %5765 = vmatpush1.msra.mxu0 0.0
    %5766 = vmatprep.subr.mxu0 0.0
    %5767 = vmatpush1.msra.mxu0 0.0
    %5768 = vmatprep.subr.mxu0 0.0
    %5769 = vmatpush1.msra.mxu0 0.0
    %5770 = vmatprep.subr.mxu0 0.0
    %5771 = vmatpush1.msra.mxu0 0.0
    %5772 = vmatprep.subr.mxu0 0.0
    %5773 = vmatpush1.msra.mxu0 0.0
    %5774 = vmatprep.subr.mxu0 %v3642
    %5775 = vmatpush1.msra.mxu0 %v3641
    %5776 = vmatprep.subr.mxu0 %v3638
    %5777 = vmatpush1.msra.mxu0 %v3637
    %5778 = vmatprep.subr.mxu0 %v3634
    %5779 = vmatpush1.msra.mxu0 %v3633
    %5780 = vmatprep.subr.mxu0 %v3630
    %5781 = vmatpush1.msra.mxu0 %v3629
    %5782 = vmatprep.subr.mxu0 %v3626
    %5783 = vmatpush1.msra.mxu0 %v3625
    %5784 = vmatprep.subr.mxu0 %v3622
    %5785 = vmatpush1.msra.mxu0 %v3621
    %5786 = vmatprep.subr.mxu0 %v3618
    %5787 = vmatpush1.msra.mxu0 %v3617
    %5788 = vmatprep.subr.mxu0 %v3614
    %5789 = vmatpush1.msra.mxu0 %v3613
    %5790 = vmatprep.subr.mxu0 0.0
    %5791 = vmatpush2.msra.mxu0 0.0
    %5792 = vmatprep.subr.mxu0 0.0
    %5793 = vmatpush2.msra.mxu0 0.0
    %5794 = vmatprep.subr.mxu0 0.0
    %5795 = vmatpush2.msra.mxu0 0.0
    %5796 = vmatprep.subr.mxu0 0.0
    %5797 = vmatpush2.msra.mxu0 0.0
    %5798 = vmatprep.subr.mxu0 0.0
    %5799 = vmatpush2.msra.mxu0 0.0
    %5800 = vmatprep.subr.mxu0 0.0
    %5801 = vmatpush2.msra.mxu0 0.0
    %5802 = vmatprep.subr.mxu0 0.0
    %5803 = vmatpush2.msra.mxu0 0.0
    %5804 = vmatprep.subr.mxu0 0.0
    %5805 = vmatpush2.msra.mxu0 0.0
    %5806 = vmatprep.subr.mxu0 0.0
    %5807 = vmatpush2.msra.mxu0 0.0
    %5808 = vmatprep.subr.mxu0 0.0
    %5809 = vmatpush2.msra.mxu0 0.0
    %5810 = vmatprep.subr.mxu0 0.0
    %5811 = vmatpush2.msra.mxu0 0.0
    %5812 = vmatprep.subr.mxu0 0.0
    %5813 = vmatpush2.msra.mxu0 0.0
    %5814 = vmatprep.subr.mxu0 0.0
    %5815 = vmatpush2.msra.mxu0 0.0
    %5816 = vmatprep.subr.mxu0 0.0
    %5817 = vmatpush2.msra.mxu0 0.0
    %5818 = vmatprep.subr.mxu0 0.0
    %5819 = vmatpush2.msra.mxu0 0.0
    %5820 = vmatprep.subr.mxu0 0.0
    %5821 = vmatpush2.msra.mxu0 0.0
    %5822 = vmatprep.mubr.f32.mxu0 0.0
    %5823 = vmatmul.mubr.f32.gmra.mxu0 %v5685
    %v5824 = vpop.f32.mrf.mxu0
    %v5825 = vadd.f32 0.0, %v5824
    %v5826 = vpop.f32.mrf.mxu0
    %v5827 = vadd.f32 0.0, %v5826
    %5828 = vdwg.mxu0
    %v5833 = vcombine.low %v5754, %v5756
    %v5834 = vcombine.low %v5825, %v5827
    %v5836 = vunpack.c.l.s4 1966171168
    %v5837 = vunpack.c.0.s8 %v5836
    %v5838 = vlaneseq
    %v5839 = vshrl.u32 %v5838, 7
    %v5840 = vsub.s32 %v5837, %v5839
    %v5841 = vrot.slane %v5833, %v5840
    %v5843 = vunpack.c.l.s4 1966171168
    %v5844 = vunpack.c.0.s8 %v5843
    %v5845 = vlaneseq
    %v5846 = vshrl.u32 %v5845, 7
    %v5847 = vsub.s32 %v5844, %v5846
    %v5848 = vrot.slane %v5834, %v5847
    %v5849 = vcombine.low %v5841, %v5848
    %v5851 = vunpack.c.l.s4 1966171168
    %v5852 = vunpack.c.0.s8 %v5851
    %v5853 = vlaneseq
    %v5854 = vshrl.u32 %v5853, 7
    %v5855 = vsub.s32 %v5852, %v5854
    %v5856 = vrot.slane %v5849, %v5855
    %v5858 = vadd.f32 %v5682, %v5856
    %v5859 = vlaneseq
    %vm5860 = vcmp.ge.s32.totalorder %v5859, 0
    %vm5861 = vcmp.lt.s32.totalorder %v5859, 512
    %vm5862 = vmand %vm5860, %vm5861
    %5863 = vst.msk [vmem:[#allocation4] sm:$0xf] %vm5862, %v5858
    %5864 = vst.msk [vmem:[#allocation2] sm:$0x1] %vm5670, %v5647
    // Predicated region
    $region78: #{tpu_custom_call.1} parent=1 // pred_check
      %p5865 = pneg %p135
    $region79: #{tpu_custom_call.1} parent=1 // pred_check_branch
      %5867 = sbr.rel (%p5865) target = $region81
    $region80: #{tpu_custom_call.1} parent=1 // pred_region
      %v5868 = vld [vmem:[#allocation4] sm:$0xf]
      %v5869 = vld [vmem:[#allocation3] sm:$0x1]
      %5871 = vset.pattern.permute.xlu0 0
      %5872 = vperm.xlu0 %5871, %v5869
      %v5873 = vpop.permute.xlu0 %5872
      %v5875 = vlaneseq
      %v5876 = vshrl.u32 %v5875, 7
      %v5877 = vsub.s32 0, %v5876
      %v5878 = vrot.slane %v5873, %v5877
      %v5879 = vrcp.pop %v5878
      %v5880 = vmul.f32 %v5868, %v5879
      %5881 = vst.msk [vmem:[#allocation22] sm:$0xf] %vm5862, %v5880
      %v5882 = vld [vmem:[%s8] sm:$0xf]
      %v5883 = vmul.f32 %v5880, %v5882
      %v5885 = vlaneseq
      %v5886 = vshrl.u32 %v5885, 7
      %v5887 = vsub.s32 0, %v5886
      %v5888 = vrot.slane %v5883, %v5887
      %v5889 = vlaneseq
      %v5890 = vshrl.u32 %v5889, 7
      %v5891 = vsub.s32 1, %v5890
      %v5892 = vrot.slane %v5883, %v5891
      %v5893 = vlaneseq
      %v5894 = vshrl.u32 %v5893, 7
      %v5895 = vsub.s32 2, %v5894
      %v5896 = vrot.slane %v5883, %v5895
      %v5897 = vlaneseq
      %v5898 = vshrl.u32 %v5897, 7
      %v5899 = vsub.s32 3, %v5898
      %v5900 = vrot.slane %v5883, %v5899
      %vm5905 = vcmask 1040384
      %v5906 = vsel %vm5905, %v5888, 0.0
      %v5907 = vsel %vm5905, %v5892, 0.0
      %v5908 = vadd.f32 %v5906, %v5907
      %v5909 = vsel %vm5905, %v5896, 0.0
      %v5910 = vadd.f32 %v5908, %v5909
      %v5911 = vsel %vm5905, %v5900, 0.0
      %v5912 = vadd.f32 %v5910, %v5911
      %5913 = vadd.xlane.f32.xlu0 %v5912
      %v5914 = vpop.xlane.xlu0 %5913
      %s5915 = sld [smem:[#allocation18 + $0x3]]
      %s5916 = sld [smem:[#allocation18 + $0x1]]
      %s5917 = smul.f32 %s5915, %s5916
      %v5918 = vstv %s5917
      %v5919 = vadd.f32 %v5914, %v5918
      %s5920 = sld [smem:[#allocation18 + $0x2]]
      %v5921 = vstv %s5920
      %v5922 = vadd.f32 %v5919, %v5921
      %5923 = vst.msk [vmem:[#allocation19] sm:$0x1] %vm5670, %v5922
    $region81: #{tpu_custom_call.1} parent=1 // pred_fallthru
      _
    // Predicated region
    $region82: #{tpu_custom_call.1} parent=1 // pred_check
      _
    $region83: #{tpu_custom_call.1} parent=1 // pred_check_branch
      %5925 = sbr.rel (0) target = $region85
    $region84: #{tpu_custom_call.1} parent=1 // pred_region
      %s5927 = ssub.s32 16, 16
      %5928 = vsyncadd [#allocation8], %s5927
      %s5930 = sshll.u32 [#allocation19], 4
      %s5931 = int_to_ptr.vmem [resolvable:$true] %s5930
      %5933 = dma.vmem_to_hbm [thread:$0]  %s5931, 16, %s11, [#allocation8]
    $region85: #{tpu_custom_call.1} parent=1 // pred_fallthru
      _
    // Predicated region
    $region86: #{tpu_custom_call.1} parent=1 // pred_check
      _
    $region87: #{tpu_custom_call.1} parent=1 // pred_check_branch
      %5935 = sbr.rel (0) target = $region89
    $region88: #{tpu_custom_call.1} parent=1 // pred_region
      %s5937 = ssub.s32 16, 16
      %5938 = vsyncadd [#allocation21], %s5937
      %s5940 = sshll.u32 [#allocation20], 4
      %s5941 = int_to_ptr.vmem [resolvable:$true] %s5940
      %5943 = dma.vmem_to_hbm [thread:$0]  %s5941, 16, %s12, [#allocation21]
    $region89: #{tpu_custom_call.1} parent=1 // pred_fallthru
      _
    // Predicated region
    $region90: #{tpu_custom_call.1} parent=1 // pred_check
      _
    $region91: #{tpu_custom_call.1} parent=1 // pred_check_branch
      %5945 = sbr.rel (0) target = $region93
    $region92: #{tpu_custom_call.1} parent=1 // pred_region
      %s5947 = ssub.s32 64, 64
      %5948 = vsyncadd [#allocation21], %s5947
      %s5950 = sshll.u32 [#allocation22], 4
      %s5951 = int_to_ptr.vmem [resolvable:$true] %s5950
      %5953 = dma.vmem_to_hbm [thread:$0]  %s5951, 64, %s13, [#allocation21]
    $region93: #{tpu_custom_call.1} parent=1 // pred_fallthru
      _
    // Predicated region
    $region94: #{tpu_custom_call.1} parent=1 // pred_check
      _
    $region95: #{tpu_custom_call.1} parent=1 // pred_check_branch
      %5955 = sbr.rel (0) target = $region97
    $region96: #{tpu_custom_call.1} parent=1 // pred_region
      %5956 = dma.done [#allocation8], 16
    $region97: #{tpu_custom_call.1} parent=1 // pred_fallthru
      _
    // Predicated region
    $region98: #{tpu_custom_call.1} parent=1 // pred_check
      _
    $region99: #{tpu_custom_call.1} parent=1 // pred_check_branch
      %5958 = sbr.rel (0) target = $region101
    $region100: #{tpu_custom_call.1} parent=1 // pred_region
      %5959 = dma.done [#allocation21], 16
    $region101: #{tpu_custom_call.1} parent=1 // pred_fallthru
      _
    // Predicated region
    $region102: #{tpu_custom_call.1} parent=1 // pred_check
      _
    $region103: #{tpu_custom_call.1} parent=1 // pred_check_branch
      %5961 = sbr.rel (0) target = $region105
    $region104: #{tpu_custom_call.1} parent=1 // pred_region
      %5962 = dma.done [#allocation21], 64
    $region105: #{tpu_custom_call.1} parent=1 // pred_fallthru
      _
    %5963 = vsyncpa [#allocation7], 1
    %5964 = vsyncpa [#allocation11], 1
    %5965 = vsyncpa [#allocation14], 1
    %5966 = vsyncpa [#allocation17], 1
    %5967 = vsyncpa [#allocation8], 1
    %5968 = vsyncpa [#allocation21], 1
    %5969 = vsyncpa [#allocation9], 1

</llo_original>
